<compile_context>
chip_gen: v7x
topology: tpu7x:2x2x1
jax: 0.10.0
libtpu: 0.0.40
codegen_flags: <defaults>
</compile_context>

<pallas_src>
import math
import functools

import jax
import jax.numpy as jnp
from jax.experimental import pallas as pl
from jax.experimental.pallas import tpu as pltpu

NEG_INF = -1e9


def _pick_vmem_limit():
    """~half of physical VMEM, capped: 64 MiB on v5e/v6e, 32 MiB on v7x."""
    cap = None
    try:
        info = pltpu.get_tpu_info()
        cap = getattr(info, "vmem_capacity_bytes", None)
    except Exception:
        cap = None
    if not cap:
        return 32 * 1024 * 1024  # conservative fallback, runs everywhere
    return int(min(96 * 1024 * 1024, max(32 * 1024 * 1024, cap // 2)))


VMEM_LIMIT = _pick_vmem_limit()


def _tile(dim, preferred, align):
    """Largest multiple of `align` that divides `dim` and is <= preferred,
    else the full dim (block == array dim is always legal)."""
    if dim <= preferred:
        return dim
    cand = (preferred // align) * align
    while cand >= align:
        if dim % cand == 0:
            return cand
        cand -= align
    return dim


# --------------------------------------------------------------------------
# Tiled linear:  y = x @ w + b  (optional ReLU); bf16 operands, f32 accum
# --------------------------------------------------------------------------

def _linear_kernel(x_ref, w_ref, b_ref, o_ref, acc_ref, *, relu):
    @pl.when(pl.program_id(2) == 0)
    def _():
        acc_ref[...] = jnp.zeros_like(acc_ref)

    acc_ref[...] += jnp.dot(x_ref[...], w_ref[...],
                            preferred_element_type=jnp.float32)

    @pl.when(pl.program_id(2) == pl.num_programs(2) - 1)
    def _():
        y = acc_ref[...] + b_ref[...]
        if relu:
            y = jnp.maximum(y, 0.0)
        o_ref[...] = y.astype(o_ref.dtype)


def linear(x2d, w, b, relu=False, out_dtype=jnp.bfloat16):
    """x2d: (M, K) bf16, w: (K, N) bf16, b: (N,) f32 -> (M, N) out_dtype."""
    M, K = x2d.shape
    N = w.shape[1]
    tm = _tile(M, 256, 8)
    tn = _tile(N, 512, 128)
    tk = _tile(K, 512, 128)
    kernel = functools.partial(_linear_kernel, relu=relu)
    return pl.pallas_call(
        kernel,
        grid=(M // tm, N // tn, K // tk),
        in_specs=[
            pl.BlockSpec((tm, tk), lambda i, j, k: (i, k)),
            pl.BlockSpec((tk, tn), lambda i, j, k: (k, j)),
            pl.BlockSpec((1, tn), lambda i, j, k: (0, j)),
        ],
        out_specs=pl.BlockSpec((tm, tn), lambda i, j, k: (i, j)),
        out_shape=jax.ShapeDtypeStruct((M, N), out_dtype),
        scratch_shapes=[pltpu.VMEM((tm, tn), jnp.float32)],
        compiler_params=pltpu.CompilerParams(
            dimension_semantics=("parallel", "parallel", "arbitrary"),
            vmem_limit_bytes=VMEM_LIMIT),
        cost_estimate=pl.CostEstimate(
            flops=2 * M * N * K,
            transcendentals=0,
            bytes_accessed=2 * (M * K + K * N + M * N) + 4 * N),
    )(x2d, w, b.reshape(1, N))


# --------------------------------------------------------------------------
# Fused out-projection + residual-add + LayerNorm:
#     out = LayerNorm(res + x @ w + b)      (N kept as one block == D)
# --------------------------------------------------------------------------

def _linear_res_ln_kernel(x_ref, w_ref, b_ref, r_ref, g_ref, bb_ref, o_ref,
                          acc_ref, *, eps):
    @pl.when(pl.program_id(1) == 0)
    def _():
        acc_ref[...] = jnp.zeros_like(acc_ref)

    acc_ref[...] += jnp.dot(x_ref[...], w_ref[...],
                            preferred_element_type=jnp.float32)

    @pl.when(pl.program_id(1) == pl.num_programs(1) - 1)
    def _():
        z = acc_ref[...] + b_ref[...] + r_ref[...].astype(jnp.float32)
        mu = jnp.mean(z, axis=-1, keepdims=True)
        var = jnp.mean((z - mu) ** 2, axis=-1, keepdims=True)
        o_ref[...] = ((z - mu) * jax.lax.rsqrt(var + eps)
                      * g_ref[...] + bb_ref[...]).astype(o_ref.dtype)


def linear_res_ln(x2d, w, b, res2d, ln, eps=1e-5):
    """LayerNorm(res2d + x2d @ w + b); all activations bf16, math in f32."""
    M, K = x2d.shape
    N = w.shape[1]
    tm = _tile(M, 256, 8)
    tk = _tile(K, 512, 128)
    kernel = functools.partial(_linear_res_ln_kernel, eps=eps)
    return pl.pallas_call(
        kernel,
        grid=(M // tm, K // tk),
        in_specs=[
            pl.BlockSpec((tm, tk), lambda i, k: (i, k)),
            pl.BlockSpec((tk, N), lambda i, k: (k, 0)),
            pl.BlockSpec((1, N), lambda i, k: (0, 0)),
            pl.BlockSpec((tm, N), lambda i, k: (i, 0)),
            pl.BlockSpec((1, N), lambda i, k: (0, 0)),
            pl.BlockSpec((1, N), lambda i, k: (0, 0)),
        ],
        out_specs=pl.BlockSpec((tm, N), lambda i, k: (i, 0)),
        out_shape=jax.ShapeDtypeStruct((M, N), jnp.bfloat16),
        scratch_shapes=[pltpu.VMEM((tm, N), jnp.float32)],
        compiler_params=pltpu.CompilerParams(
            dimension_semantics=("parallel", "arbitrary"),
            vmem_limit_bytes=VMEM_LIMIT),
        cost_estimate=pl.CostEstimate(
            flops=2 * M * N * K + 10 * M * N,
            transcendentals=M,
            bytes_accessed=2 * (M * K + K * N + 2 * M * N) + 12 * N),
    )(x2d, w, b.reshape(1, N), res2d, ln["g"].reshape(1, N), ln["b"].reshape(1, N))


# --------------------------------------------------------------------------
# Attention: per-batch block, heads sliced in-kernel, per-head direct store.
#   Self-attn takes the fused (B, L, 3D) QKV array (no XLA-level slicing).
#   Cross-attn takes (B, Lq, D) q and fused (B, Lk, 2D) kv.
#   pad_bias: (B, 1, Lk) additive f32; causal bias built in-kernel with iota
#   and folded into the pad bias ONCE (outside the head loop).
# --------------------------------------------------------------------------

def _attn_heads(q, k, v, bias, o_ref, H, Dh, scale):
    # TODO(synk): for Dh<128 on v6e/v7x, pair heads with a block-diagonal
    # contraction to fill the 256-wide MXU; per-head matmuls underfill it.
    for h in range(H):                                   # static unroll over heads
        qh = q[:, h * Dh:(h + 1) * Dh]                   # (Lq, Dh) bf16
        kh = k[:, h * Dh:(h + 1) * Dh]                   # (Lk, Dh) bf16
        vh = v[:, h * Dh:(h + 1) * Dh]                   # (Lk, Dh) bf16
        s = jax.lax.dot_general(qh, kh, (((1,), (1,)), ((), ())),
                                preferred_element_type=jnp.float32) * scale
        s = s + bias                                     # single combined bias add
        s = s - jnp.max(s, axis=-1, keepdims=True)
        p = jnp.exp(s)
        p = p * pl.reciprocal(jnp.sum(p, axis=-1, keepdims=True), approx=True)
        o = jnp.dot(p.astype(jnp.bfloat16), vh,
                    preferred_element_type=jnp.float32)  # (Lq, Dh) f32
        o_ref[0, :, h * Dh:(h + 1) * Dh] = o.astype(o_ref.dtype)


def _self_attn_kernel(qkv_ref, bias_ref, o_ref, *, H, scale, causal):
    _, L, C = qkv_ref.shape
    D = C // 3
    Dh = D // H
    qkv = qkv_ref[0]                                     # (L, 3D) bf16, in VMEM
    q = qkv[:, :D]
    k = qkv[:, D:2 * D]
    v = qkv[:, 2 * D:]
    bias = bias_ref[0]                                   # (1, L) f32
    if causal:
        qi = jax.lax.broadcasted_iota(jnp.int32, (L, L), 0)
        ki = jax.lax.broadcasted_iota(jnp.int32, (L, L), 1)
        bias = bias + jnp.where(ki <= qi, 0.0, NEG_INF)  # (L, L), hoisted
    _attn_heads(q, k, v, bias, o_ref, H, Dh, scale)


def _cross_attn_kernel(q_ref, kv_ref, bias_ref, o_ref, *, H, scale):
    _, Lq, D = q_ref.shape
    Dh = D // H
    q = q_ref[0]                                         # (Lq, D)
    kv = kv_ref[0]                                       # (Lk, 2D)
    k = kv[:, :D]
    v = kv[:, D:]
    bias = bias_ref[0]                                   # (1, Lk)
    _attn_heads(q, k, v, bias, o_ref, H, Dh, scale)


def self_attention(qkv, pad_bias, H, causal):
    """qkv: (B, L, 3D) bf16 fused projections -> (B, L, D) bf16."""
    B, L, C = qkv.shape
    D = C // 3
    Dh = D // H
    kernel = functools.partial(_self_attn_kernel, H=H,
                               scale=1.0 / math.sqrt(Dh), causal=causal)
    # TODO(synk): for long sequences tile over Lq and flash-tile over Lk with
    # an online-softmax accumulator (also feeds v7x's second TensorCore).
    return pl.pallas_call(
        kernel,
        grid=(B,),
        in_specs=[
            pl.BlockSpec((1, L, C), lambda i: (i, 0, 0)),
            pl.BlockSpec((1, 1, L), lambda i: (i, 0, 0)),
        ],
        out_specs=pl.BlockSpec((1, L, D), lambda i: (i, 0, 0)),
        out_shape=jax.ShapeDtypeStruct((B, L, D), jnp.bfloat16),
        compiler_params=pltpu.CompilerParams(
            dimension_semantics=("parallel",),
            vmem_limit_bytes=VMEM_LIMIT),
        cost_estimate=pl.CostEstimate(
            flops=4 * B * H * L * L * Dh,
            transcendentals=B * H * L * L,
            bytes_accessed=2 * (qkv.size + B * L * D) + 4 * pad_bias.size),
    )(qkv, pad_bias)


def cross_attention(q, kv, pad_bias, H):
    """q: (B, Lq, D) bf16, kv: (B, Lk, 2D) bf16 -> (B, Lq, D) bf16."""
    B, Lq, D = q.shape
    _, Lk, C2 = kv.shape
    Dh = D // H
    kernel = functools.partial(_cross_attn_kernel, H=H, scale=1.0 / math.sqrt(Dh))
    return pl.pallas_call(
        kernel,
        grid=(B,),
        in_specs=[
            pl.BlockSpec((1, Lq, D), lambda i: (i, 0, 0)),
            pl.BlockSpec((1, Lk, C2), lambda i: (i, 0, 0)),
            pl.BlockSpec((1, 1, Lk), lambda i: (i, 0, 0)),
        ],
        out_specs=pl.BlockSpec((1, Lq, D), lambda i: (i, 0, 0)),
        out_shape=jax.ShapeDtypeStruct((B, Lq, D), jnp.bfloat16),
        compiler_params=pltpu.CompilerParams(
            dimension_semantics=("parallel",),
            vmem_limit_bytes=VMEM_LIMIT),
        cost_estimate=pl.CostEstimate(
            flops=4 * B * H * Lq * Lk * Dh,
            transcendentals=B * H * Lq * Lk,
            bytes_accessed=2 * (q.size + kv.size + B * Lq * D) + 4 * pad_bias.size),
    )(q, kv, pad_bias)


# --------------------------------------------------------------------------
# Residual-add + LayerNorm (standalone — only used by the large-Dff FFN fallback)
# --------------------------------------------------------------------------

def _add_ln_kernel(x_ref, y_ref, g_ref, b_ref, o_ref, *, eps):
    z = x_ref[...].astype(jnp.float32) + y_ref[...].astype(jnp.float32)
    mu = jnp.mean(z, axis=-1, keepdims=True)
    var = jnp.mean((z - mu) ** 2, axis=-1, keepdims=True)
    o_ref[...] = ((z - mu) * jax.lax.rsqrt(var + eps)
                  * g_ref[...] + b_ref[...]).astype(o_ref.dtype)


def add_ln(x, y, p, eps=1e-5):
    B, L, D = x.shape
    M = B * L
    tm = _tile(M, 256, 8)
    kernel = functools.partial(_add_ln_kernel, eps=eps)
    out = pl.pallas_call(
        kernel,
        grid=(M // tm,),
        in_specs=[
            pl.BlockSpec((tm, D), lambda i: (i, 0)),
            pl.BlockSpec((tm, D), lambda i: (i, 0)),
            pl.BlockSpec((1, D), lambda i: (0, 0)),
            pl.BlockSpec((1, D), lambda i: (0, 0)),
        ],
        out_specs=pl.BlockSpec((tm, D), lambda i: (i, 0)),
        out_shape=jax.ShapeDtypeStruct((M, D), jnp.bfloat16),
        compiler_params=pltpu.CompilerParams(
            dimension_semantics=("parallel",),
            vmem_limit_bytes=VMEM_LIMIT),
    )(x.reshape(M, D), y.reshape(M, D), p["g"].reshape(1, D), p["b"].reshape(1, D))
    return out.reshape(B, L, D)


# --------------------------------------------------------------------------
# Fused FFN + residual + LayerNorm:
#     out = LayerNorm(x + relu(x @ w1 + b1) @ w2 + b2)
# Dff intermediate never leaves VMEM; residual is x itself (already resident).
# --------------------------------------------------------------------------

def _ffn_res_ln_kernel(x_ref, w1_ref, b1_ref, w2_ref, b2_ref, g_ref, bb_ref,
                       o_ref, *, eps):
    x = x_ref[...]                                           # (tm, D) bf16
    h = jnp.dot(x, w1_ref[...], preferred_element_type=jnp.float32) + b1_ref[...]
    h = jnp.maximum(h, 0.0)
    y = jnp.dot(h.astype(jnp.bfloat16), w2_ref[...],
                preferred_element_type=jnp.float32) + b2_ref[...]
    z = y + x.astype(jnp.float32)
    mu = jnp.mean(z, axis=-1, keepdims=True)
    var = jnp.mean((z - mu) ** 2, axis=-1, keepdims=True)
    o_ref[...] = ((z - mu) * jax.lax.rsqrt(var + eps)
                  * g_ref[...] + bb_ref[...]).astype(o_ref.dtype)


def ffn_res_ln(x, p, ln, eps=1e-5):
    B, L, D = x.shape
    Dff = p["w1"].shape[1]
    M = B * L
    tm = _tile(M, 256, 8)

    # VMEM-footprint guard (double-buffered bf16 weights + blocks + f32 temps)
    est = (2 * 2 * (D * Dff + Dff * D)
           + 2 * 2 * 2 * tm * D
           + 4 * tm * Dff + 4 * tm * D)
    if est > (VMEM_LIMIT * 3) // 4:
        # Large-Dff fallback: two tiled linears + separate residual+LN
        # keeps the v7x 64 MiB VMEM ceiling safe.
        h = linear(x.reshape(M, D), p["w1"], p["b1"], relu=True)
        y = linear(h, p["w2"], p["b2"])
        return add_ln(x, y.reshape(B, L, D), ln, eps)

    kernel = functools.partial(_ffn_res_ln_kernel, eps=eps)
    out = pl.pallas_call(
        kernel,
        grid=(M // tm,),
        in_specs=[
            pl.BlockSpec((tm, D), lambda i: (i, 0)),
            pl.BlockSpec((D, Dff), lambda i: (0, 0)),
            pl.BlockSpec((1, Dff), lambda i: (0, 0)),
            pl.BlockSpec((Dff, D), lambda i: (0, 0)),
            pl.BlockSpec((1, D), lambda i: (0, 0)),
            pl.BlockSpec((1, D), lambda i: (0, 0)),
            pl.BlockSpec((1, D), lambda i: (0, 0)),
        ],
        out_specs=pl.BlockSpec((tm, D), lambda i: (i, 0)),
        out_shape=jax.ShapeDtypeStruct((M, D), jnp.bfloat16),
        compiler_params=pltpu.CompilerParams(
            dimension_semantics=("parallel",),
            vmem_limit_bytes=VMEM_LIMIT),
        cost_estimate=pl.CostEstimate(
            flops=4 * M * D * Dff + 10 * M * D,
            transcendentals=M,
            bytes_accessed=2 * (2 * M * D + 2 * D * Dff) + 4 * (Dff + 3 * D)),
    )(x.reshape(M, D), p["w1"], p["b1"].reshape(1, Dff),
      p["w2"], p["b2"].reshape(1, D),
      ln["g"].reshape(1, D), ln["b"].reshape(1, D))
    return out.reshape(B, L, D)


# --------------------------------------------------------------------------
# Attention blocks (fused projections, head-last layout, fused res+LN epilogue)
# --------------------------------------------------------------------------

def self_attn_block(x, p, ln, pad_bias, H, causal):
    """LayerNorm(x + SelfMHA(x)); x: (B, L, D) bf16."""
    B, L, D = x.shape
    M = B * L
    x2d = x.reshape(M, D)
    qkv = linear(x2d, p["w_qkv"], p["b_qkv"])            # (M, 3D) bf16, fused
    attn = self_attention(qkv.reshape(B, L, 3 * D), pad_bias, H, causal)
    out = linear_res_ln(attn.reshape(M, D), p["wo"], p["bo"], x2d, ln)
    return out.reshape(B, L, D)


def cross_attn_block(x_q, enc_out, p, ln, pad_bias, H):
    """LayerNorm(x_q + CrossMHA(x_q, enc_out))."""
    B, Lq, D = x_q.shape
    _, Lk, _ = enc_out.shape
    xq2d = x_q.reshape(B * Lq, D)
    q = linear(xq2d, p["wq"], p["bq"]).reshape(B, Lq, D)
    kv = linear(enc_out.reshape(B * Lk, D), p["w_kv"], p["b_kv"]).reshape(B, Lk, 2 * D)
    attn = cross_attention(q, kv, pad_bias, H)
    out = linear_res_ln(attn.reshape(B * Lq, D), p["wo"], p["bo"], xq2d, ln)
    return out.reshape(B, Lq, D)


# --------------------------------------------------------------------------
# Parameter construction (deterministic, synthetic) — weights in bf16
# --------------------------------------------------------------------------

def _init_w(key, shape, scale=0.02):
    return (scale * jax.random.normal(key, shape, dtype=jnp.float32)).astype(jnp.bfloat16)


def make_self_attn_params(key, D):
    k1, k2 = jax.random.split(key)
    return {
        "w_qkv": _init_w(k1, (D, 3 * D)), "b_qkv": jnp.zeros((3 * D,), jnp.float32),
        "wo": _init_w(k2, (D, D)), "bo": jnp.zeros((D,), jnp.float32),
    }


def make_cross_attn_params(key, D):
    k1, k2, k3 = jax.random.split(key, 3)
    return {
        "wq": _init_w(k1, (D, D)), "bq": jnp.zeros((D,), jnp.float32),
        "w_kv": _init_w(k2, (D, 2 * D)), "b_kv": jnp.zeros((2 * D,), jnp.float32),
        "wo": _init_w(k3, (D, D)), "bo": jnp.zeros((D,), jnp.float32),
    }


def make_ffn_params(key, D, Dff):
    k1, k2 = jax.random.split(key)
    return {
        "w1": _init_w(k1, (D, Dff)), "b1": jnp.zeros((Dff,), jnp.float32),
        "w2": _init_w(k2, (Dff, D)), "b2": jnp.zeros((D,), jnp.float32),
    }


def make_ln_params(D):
    return {"g": jnp.ones((D,), jnp.float32), "b": jnp.zeros((D,), jnp.float32)}


def sinusoidal_pos_enc(L, D):
    pos = jnp.arange(L, dtype=jnp.float32)[:, None]
    i = jnp.arange(D // 2, dtype=jnp.float32)[None, :]
    angle = pos / jnp.power(10000.0, 2.0 * i / D)
    pe = jnp.zeros((L, D), jnp.float32)
    pe = pe.at[:, 0::2].set(jnp.sin(angle))
    pe = pe.at[:, 1::2].set(jnp.cos(angle))
    return pe


# --------------------------------------------------------------------------
# Transformer (encoder + decoder) composed from Pallas kernels
# --------------------------------------------------------------------------

class Encoder:
    def __init__(self, key, vocab, D, H, Dff, max_len):
        ks = jax.random.split(key, 3)
        self.D, self.H = D, H
        # TODO(synk): token-embedding gather left as plain JAX (jnp.take); a
        # Pallas DMA-gather buys nothing at these sizes.
        self.emb = jax.random.normal(ks[0], (vocab, D), dtype=jnp.float32)
        self.pe = sinusoidal_pos_enc(max_len, D)
        self.attn = make_self_attn_params(ks[1], D)
        self.ffn = make_ffn_params(ks[2], D, Dff)
        self.ln1 = make_ln_params(D)
        self.ln2 = make_ln_params(D)

    def __call__(self, src, src_mask):
        B, S = src.shape
        x = (jnp.take(self.emb, src, axis=0) * math.sqrt(self.D)
             + self.pe[:S]).astype(jnp.bfloat16)
        pad_bias = jnp.where(src_mask[:, 0], 0.0, NEG_INF).astype(jnp.float32)  # (B,1,S)
        x = self_attn_block(x, self.attn, self.ln1, pad_bias, self.H, causal=False)
        x = ffn_res_ln(x, self.ffn, self.ln2)
        return x


class Decoder:
    def __init__(self, key, vocab, D, H, Dff, max_len):
        ks = jax.random.split(key, 5)
        self.D, self.H = D, H
        self.emb = jax.random.normal(ks[0], (vocab, D), dtype=jnp.float32)
        self.pe = sinusoidal_pos_enc(max_len, D)
        self.self_attn = make_self_attn_params(ks[1], D)
        self.cross_attn = make_cross_attn_params(ks[2], D)
        self.ffn = make_ffn_params(ks[3], D, Dff)
        self.ln1 = make_ln_params(D)
        self.ln2 = make_ln_params(D)
        self.ln3 = make_ln_params(D)
        self.w_out = _init_w(ks[4], (D, vocab))
        self.b_out = jnp.zeros((vocab,), jnp.float32)

    def __call__(self, enc_out, src_mask, trg, trg_pad_mask):
        B, T = trg.shape
        x = (jnp.take(self.emb, trg, axis=0) * math.sqrt(self.D)
             + self.pe[:T]).astype(jnp.bfloat16)

        trg_bias = jnp.where(trg_pad_mask[:, 0], 0.0, NEG_INF).astype(jnp.float32)  # (B,1,T)
        src_bias = jnp.where(src_mask[:, 0], 0.0, NEG_INF).astype(jnp.float32)      # (B,1,S)

        # causal part of the target mask is generated inside the attention kernel
        x = self_attn_block(x, self.self_attn, self.ln1, trg_bias, self.H, causal=True)
        x = cross_attn_block(x, enc_out, self.cross_attn, self.ln2, src_bias, self.H)
        x = ffn_res_ln(x, self.ffn, self.ln3)

        logits = linear(x.reshape(B * T, self.D), self.w_out, self.b_out,
                        out_dtype=jnp.float32)
        return logits.reshape(B, T, -1)


class Transformer:
    """Mirror of the PyTorch module: forward = decoder(encoder(src, src_mask), ...)."""

    def __init__(self, encoder, decoder):
        self.encoder = encoder
        self.decoder = decoder

    def __call__(self, src, src_mask, trg, trg_pad_mask):
        return self.decoder(self.encoder(src, src_mask),
                            src_mask, trg, trg_pad_mask)


# --------------------------------------------------------------------------
# Demo
# --------------------------------------------------------------------------

if __name__ == "__main__":
    B, S, T = 2, 8, 8
    D, H, Dff = 32, 4, 64
    VOCAB = 16
    MAX_LEN = 32
    PAD = 0

    root = jax.random.PRNGKey(0)
    k_enc, k_dec, k_src, k_trg = jax.random.split(root, 4)

    encoder = Encoder(k_enc, VOCAB, D, H, Dff, MAX_LEN)
    decoder = Decoder(k_dec, VOCAB, D, H, Dff, MAX_LEN)
    model = Transformer(encoder, decoder)

    # deterministic token ids with trailing padding
    src = jax.random.randint(k_src, (B, S), 1, VOCAB, dtype=jnp.int32)
    trg = jax.random.randint(k_trg, (B, T), 1, VOCAB, dtype=jnp.int32)
    src = src.at[0, 6:].set(PAD).at[1, 7:].set(PAD)
    trg = trg.at[0, 7:].set(PAD)

    src_mask = (src != PAD)[:, None, None, :]       # (B, 1, 1, S) bool
    trg_pad_mask = (trg != PAD)[:, None, None, :]   # (B, 1, 1, T) bool

    fwd = jax.jit(lambda a, b, c, d: model(a, b, c, d))
    logits = fwd(src, src_mask, trg, trg_pad_mask)
    jax.block_until_ready(logits)
    assert logits.shape == (B, T, VOCAB)
    assert bool(jnp.all(jnp.isfinite(logits)))
    print("KERNEL_OK")
</pallas_src>

<mosaic_0001>
module attributes {stable_mosaic.version = 11 : i64} {
  func.func @_linear_kernel(%arg0: i32, %arg1: i32, %arg2: i32, %arg3: memref<16x32xbf16, #tpu.memory_space<vmem>>, %arg4: memref<32x96xbf16, #tpu.memory_space<vmem>>, %arg5: memref<1x96xf32, #tpu.memory_space<vmem>>, %arg6: memref<16x96xbf16, #tpu.memory_space<vmem>>, %arg7: memref<16x96xf32, #tpu.memory_space<vmem>>) attributes {dimension_semantics = [#tpu.dimension_semantics<parallel>, #tpu.dimension_semantics<parallel>, #tpu.dimension_semantics<arbitrary>], iteration_bounds = array<i64: 1, 1, 1>, scalar_prefetch = 0 : i64, scratch_operands = 1 : i64, tpu.core_type = #tpu.core_type<tc>, window_params = [{transform_indices = @transform_0, window_bounds = array<i64: 16, 32>}, {transform_indices = @transform_1, window_bounds = array<i64: 32, 96>}, {transform_indices = @transform_2, window_bounds = array<i64: 1, 96>}, {transform_indices = @transform_3, window_bounds = array<i64: 16, 96>}]} {
    %c0_i32 = arith.constant 0 : i32
    %0 = arith.cmpi eq, %arg2, %c0_i32 : i32
    %1 = arith.extui %0 : i1 to i32
    %c0_i32_0 = arith.constant 0 : i32
    %2 = arith.cmpi ne, %1, %c0_i32_0 : i32
    scf.if %2 {
      %cst_10 = arith.constant 0.000000e+00 : f32
      %12 = vector.broadcast %cst_10 : f32 to vector<16x96xf32>
      %c0_11 = arith.constant 0 : index
      %c0_12 = arith.constant 0 : index
      %13 = vector.load %arg7[%c0_11, %c0_12] : memref<16x96xf32, #tpu.memory_space<vmem>>, vector<16x96xf32>
      tpu.vector_store %arg7[%c0_11, %c0_12], %12 {strides = array<i32>} : memref<16x96xf32, #tpu.memory_space<vmem>>, vector<16x96xf32>,
    } else {
    }
    %c0 = arith.constant 0 : index
    %c0_1 = arith.constant 0 : index
    %3 = vector.load %arg7[%c0, %c0_1] : memref<16x96xf32, #tpu.memory_space<vmem>>, vector<16x96xf32>
    %c0_2 = arith.constant 0 : index
    %c0_3 = arith.constant 0 : index
    %4 = vector.load %arg3[%c0_2, %c0_3] : memref<16x32xbf16, #tpu.memory_space<vmem>>, vector<16x32xbf16>
    %c0_4 = arith.constant 0 : index
    %c0_5 = arith.constant 0 : index
    %5 = vector.load %arg4[%c0_4, %c0_5] : memref<32x96xbf16, #tpu.memory_space<vmem>>, vector<32x96xbf16>
    %cst = arith.constant dense<0.000000e+00> : vector<16x96xf32>
    %6 = tpu.matmul %4, %5, %cst {dimension_numbers = #tpu.dot_dimension_numbers<[1], [0], [0], [1], [0, 0, 1, 1], [], []>} : vector<16x32xbf16>, vector<32x96xbf16>, vector<16x96xf32> -> vector<16x96xf32>
    %7 = arith.addf %3, %6 : vector<16x96xf32>
    %c0_6 = arith.constant 0 : index
    %c0_7 = arith.constant 0 : index
    %8 = vector.load %arg7[%c0_6, %c0_7] : memref<16x96xf32, #tpu.memory_space<vmem>>, vector<16x96xf32>
    tpu.vector_store %arg7[%c0_6, %c0_7], %7 {strides = array<i32>} : memref<16x96xf32, #tpu.memory_space<vmem>>, vector<16x96xf32>,
    %c0_i32_8 = arith.constant 0 : i32
    %9 = arith.cmpi eq, %arg2, %c0_i32_8 : i32
    %10 = arith.extui %9 : i1 to i32
    %c0_i32_9 = arith.constant 0 : i32
    %11 = arith.cmpi ne, %10, %c0_i32_9 : i32
    scf.if %11 {
      %c0_10 = arith.constant 0 : index
      %c0_11 = arith.constant 0 : index
      %12 = vector.load %arg7[%c0_10, %c0_11] : memref<16x96xf32, #tpu.memory_space<vmem>>, vector<16x96xf32>
      %c0_12 = arith.constant 0 : index
      %c0_13 = arith.constant 0 : index
      %13 = vector.load %arg5[%c0_12, %c0_13] : memref<1x96xf32, #tpu.memory_space<vmem>>, vector<1x96xf32>
      %14 = vector.broadcast %13 : vector<1x96xf32> to vector<16x96xf32>
      %15 = arith.addf %12, %14 : vector<16x96xf32>
      %16 = arith.truncf %15 : vector<16x96xf32> to vector<16x96xbf16>
      %c0_14 = arith.constant 0 : index
      %c0_15 = arith.constant 0 : index
      %17 = vector.load %arg6[%c0_14, %c0_15] : memref<16x96xbf16, #tpu.memory_space<vmem>>, vector<16x96xbf16>
      tpu.vector_store %arg6[%c0_14, %c0_15], %16 {strides = array<i32>} : memref<16x96xbf16, #tpu.memory_space<vmem>>, vector<16x96xbf16>,
    } else {
    }
    return
  }
  func.func @transform_0(%arg0: i32, %arg1: i32, %arg2: i32) -> (i32, i32) {
    %c0_i32 = arith.constant 0 : i32
    return %arg0, %arg2 : i32, i32
  }
  func.func @transform_1(%arg0: i32, %arg1: i32, %arg2: i32) -> (i32, i32) {
    %c0_i32 = arith.constant 0 : i32
    return %arg2, %arg1 : i32, i32
  }
  func.func @transform_2(%arg0: i32, %arg1: i32, %arg2: i32) -> (i32, i32) {
    %c0_i32 = arith.constant 0 : i32
    %c0_i32_0 = arith.constant 0 : i32
    return %c0_i32, %arg1 : i32, i32
  }
  func.func @transform_3(%arg0: i32, %arg1: i32, %arg2: i32) -> (i32, i32) {
    %c0_i32 = arith.constant 0 : i32
    return %arg0, %arg1 : i32, i32
  }
}

module attributes {stable_mosaic.version = 11 : i64} {
  func.func @_self_attn_kernel(%arg0: i32, %arg1: memref<1x8x96xbf16, #tpu.memory_space<vmem>>, %arg2: memref<1x1x8xf32, #tpu.memory_space<vmem>>, %arg3: memref<1x8x32xbf16, #tpu.memory_space<vmem>>) attributes {dimension_semantics = [#tpu.dimension_semantics<parallel>], iteration_bounds = array<i64: 2>, scalar_prefetch = 0 : i64, scratch_operands = 0 : i64, tpu.core_type = #tpu.core_type<tc>, window_params = [{transform_indices = @transform_0, window_bounds = array<i64: 1, 8, 96>}, {transform_indices = @transform_1, window_bounds = array<i64: 1, 1, 8>}, {transform_indices = @transform_2, window_bounds = array<i64: 1, 8, 32>}]} {
    %c0 = arith.constant 0 : index
    %c0_0 = arith.constant 0 : index
    %c0_1 = arith.constant 0 : index
    %0 = vector.load %arg1[%c0, %c0_0, %c0_1] : memref<1x8x96xbf16, #tpu.memory_space<vmem>>, vector<1x8x96xbf16>
    %1 = vector.shape_cast %0 : vector<1x8x96xbf16> to vector<8x96xbf16>
    %2 = vector.extract_strided_slice %1 {offsets = [0, 0], sizes = [8, 32], strides = [1, 1]} : vector<8x96xbf16> to vector<8x32xbf16>
    %3 = vector.extract_strided_slice %1 {offsets = [0, 32], sizes = [8, 32], strides = [1, 1]} : vector<8x96xbf16> to vector<8x32xbf16>
    %4 = vector.extract_strided_slice %1 {offsets = [0, 64], sizes = [8, 32], strides = [1, 1]} : vector<8x96xbf16> to vector<8x32xbf16>
    %c0_2 = arith.constant 0 : index
    %c0_3 = arith.constant 0 : index
    %c0_4 = arith.constant 0 : index
    %5 = vector.load %arg2[%c0_2, %c0_3, %c0_4] : memref<1x1x8xf32, #tpu.memory_space<vmem>>, vector<1x1x8xf32>
    %6 = vector.shape_cast %5 : vector<1x1x8xf32> to vector<1x8xf32>
    %7 = vector.extract_strided_slice %2 {offsets = [0, 0], sizes = [8, 8], strides = [1, 1]} : vector<8x32xbf16> to vector<8x8xbf16>
    %8 = vector.extract_strided_slice %3 {offsets = [0, 0], sizes = [8, 8], strides = [1, 1]} : vector<8x32xbf16> to vector<8x8xbf16>
    %9 = vector.extract_strided_slice %4 {offsets = [0, 0], sizes = [8, 8], strides = [1, 1]} : vector<8x32xbf16> to vector<8x8xbf16>
    %cst = arith.constant dense<0.000000e+00> : vector<8x8xf32>
    %10 = tpu.matmul %7, %8, %cst {dimension_numbers = #tpu.dot_dimension_numbers<[1], [1], [0], [0], [0, 0, 1, 0], [], []>} : vector<8x8xbf16>, vector<8x8xbf16>, vector<8x8xf32> -> vector<8x8xf32>
    %cst_5 = arith.constant 0.353553385 : f32
    %11 = vector.broadcast %cst_5 : f32 to vector<8x8xf32>
    %12 = arith.mulf %10, %11 : vector<8x8xf32>
    %13 = vector.broadcast %6 : vector<1x8xf32> to vector<8x8xf32>
    %14 = arith.addf %12, %13 : vector<8x8xf32>
    %cst_6 = arith.constant dense<0xFF800000> : vector<8xf32>
    %15 = vector.multi_reduction <maximumf>, %14, %cst_6 [1] : vector<8x8xf32> to vector<8xf32>
    %16 = vector.shape_cast %15 : vector<8xf32> to vector<8x1xf32>
    %17 = vector.broadcast %16 : vector<8x1xf32> to vector<8x8xf32>
    %18 = arith.subf %14, %17 : vector<8x8xf32>
    %19 = math.exp %18 : vector<8x8xf32>
    %cst_7 = arith.constant dense<0.000000e+00> : vector<8xf32>
    %20 = vector.multi_reduction <add>, %19, %cst_7 [1] : vector<8x8xf32> to vector<8xf32>
    %21 = vector.shape_cast %20 : vector<8xf32> to vector<8x1xf32>
    %22 = tpu.reciprocal %21 {approx = true} : vector<8x1xf32> -> vector<8x1xf32>
    %23 = vector.broadcast %22 : vector<8x1xf32> to vector<8x8xf32>
    %24 = arith.mulf %19, %23 : vector<8x8xf32>
    %25 = arith.truncf %24 : vector<8x8xf32> to vector<8x8xbf16>
    %cst_8 = arith.constant dense<0.000000e+00> : vector<8x8xf32>
    %26 = tpu.matmul %25, %9, %cst_8 {dimension_numbers = #tpu.dot_dimension_numbers<[1], [0], [0], [1], [0, 0, 1, 1], [], []>} : vector<8x8xbf16>, vector<8x8xbf16>, vector<8x8xf32> -> vector<8x8xf32>
    %27 = arith.truncf %26 : vector<8x8xf32> to vector<8x8xbf16>
    %c0_9 = arith.constant 0 : index
    %c0_10 = arith.constant 0 : index
    %c0_11 = arith.constant 0 : index
    %28 = vector.load %arg3[%c0_9, %c0_10, %c0_11] : memref<1x8x32xbf16, #tpu.memory_space<vmem>>, vector<1x8x8xbf16>
    %29 = vector.shape_cast %28 : vector<1x8x8xbf16> to vector<8x8xbf16>
    %30 = vector.shape_cast %27 : vector<8x8xbf16> to vector<1x8x8xbf16>
    tpu.vector_store %arg3[%c0_9, %c0_10, %c0_11], %30 {strides = array<i32>} : memref<1x8x32xbf16, #tpu.memory_space<vmem>>, vector<1x8x8xbf16>,
    %31 = vector.extract_strided_slice %2 {offsets = [0, 8], sizes = [8, 8], strides = [1, 1]} : vector<8x32xbf16> to vector<8x8xbf16>
    %32 = vector.extract_strided_slice %3 {offsets = [0, 8], sizes = [8, 8], strides = [1, 1]} : vector<8x32xbf16> to vector<8x8xbf16>
    %33 = vector.extract_strided_slice %4 {offsets = [0, 8], sizes = [8, 8], strides = [1, 1]} : vector<8x32xbf16> to vector<8x8xbf16>
    %cst_12 = arith.constant dense<0.000000e+00> : vector<8x8xf32>
    %34 = tpu.matmul %31, %32, %cst_12 {dimension_numbers = #tpu.dot_dimension_numbers<[1], [1], [0], [0], [0, 0, 1, 0], [], []>} : vector<8x8xbf16>, vector<8x8xbf16>, vector<8x8xf32> -> vector<8x8xf32>
    %cst_13 = arith.constant 0.353553385 : f32
    %35 = vector.broadcast %cst_13 : f32 to vector<8x8xf32>
    %36 = arith.mulf %34, %35 : vector<8x8xf32>
    %37 = vector.broadcast %6 : vector<1x8xf32> to vector<8x8xf32>
    %38 = arith.addf %36, %37 : vector<8x8xf32>
    %cst_14 = arith.constant dense<0xFF800000> : vector<8xf32>
    %39 = vector.multi_reduction <maximumf>, %38, %cst_14 [1] : vector<8x8xf32> to vector<8xf32>
    %40 = vector.shape_cast %39 : vector<8xf32> to vector<8x1xf32>
    %41 = vector.broadcast %40 : vector<8x1xf32> to vector<8x8xf32>
    %42 = arith.subf %38, %41 : vector<8x8xf32>
    %43 = math.exp %42 : vector<8x8xf32>
    %cst_15 = arith.constant dense<0.000000e+00> : vector<8xf32>
    %44 = vector.multi_reduction <add>, %43, %cst_15 [1] : vector<8x8xf32> to vector<8xf32>
    %45 = vector.shape_cast %44 : vector<8xf32> to vector<8x1xf32>
    %46 = tpu.reciprocal %45 {approx = true} : vector<8x1xf32> -> vector<8x1xf32>
    %47 = vector.broadcast %46 : vector<8x1xf32> to vector<8x8xf32>
    %48 = arith.mulf %43, %47 : vector<8x8xf32>
    %49 = arith.truncf %48 : vector<8x8xf32> to vector<8x8xbf16>
    %cst_16 = arith.constant dense<0.000000e+00> : vector<8x8xf32>
    %50 = tpu.matmul %49, %33, %cst_16 {dimension_numbers = #tpu.dot_dimension_numbers<[1], [0], [0], [1], [0, 0, 1, 1], [], []>} : vector<8x8xbf16>, vector<8x8xbf16>, vector<8x8xf32> -> vector<8x8xf32>
    %51 = arith.truncf %50 : vector<8x8xf32> to vector<8x8xbf16>
    %c0_17 = arith.constant 0 : index
    %c0_18 = arith.constant 0 : index
    %c8 = arith.constant 8 : index
    %52 = vector.load %arg3[%c0_17, %c0_18, %c8] : memref<1x8x32xbf16, #tpu.memory_space<vmem>>, vector<1x8x8xbf16>
    %53 = vector.shape_cast %52 : vector<1x8x8xbf16> to vector<8x8xbf16>
    %54 = vector.shape_cast %51 : vector<8x8xbf16> to vector<1x8x8xbf16>
    tpu.vector_store %arg3[%c0_17, %c0_18, %c8], %54 {strides = array<i32>} : memref<1x8x32xbf16, #tpu.memory_space<vmem>>, vector<1x8x8xbf16>,
    %55 = vector.extract_strided_slice %2 {offsets = [0, 16], sizes = [8, 8], strides = [1, 1]} : vector<8x32xbf16> to vector<8x8xbf16>
    %56 = vector.extract_strided_slice %3 {offsets = [0, 16], sizes = [8, 8], strides = [1, 1]} : vector<8x32xbf16> to vector<8x8xbf16>
    %57 = vector.extract_strided_slice %4 {offsets = [0, 16], sizes = [8, 8], strides = [1, 1]} : vector<8x32xbf16> to vector<8x8xbf16>
    %cst_19 = arith.constant dense<0.000000e+00> : vector<8x8xf32>
    %58 = tpu.matmul %55, %56, %cst_19 {dimension_numbers = #tpu.dot_dimension_numbers<[1], [1], [0], [0], [0, 0, 1, 0], [], []>} : vector<8x8xbf16>, vector<8x8xbf16>, vector<8x8xf32> -> vector<8x8xf32>
    %cst_20 = arith.constant 0.353553385 : f32
    %59 = vector.broadcast %cst_20 : f32 to vector<8x8xf32>
    %60 = arith.mulf %58, %59 : vector<8x8xf32>
    %61 = vector.broadcast %6 : vector<1x8xf32> to vector<8x8xf32>
    %62 = arith.addf %60, %61 : vector<8x8xf32>
    %cst_21 = arith.constant dense<0xFF800000> : vector<8xf32>
    %63 = vector.multi_reduction <maximumf>, %62, %cst_21 [1] : vector<8x8xf32> to vector<8xf32>
    %64 = vector.shape_cast %63 : vector<8xf32> to vector<8x1xf32>
    %65 = vector.broadcast %64 : vector<8x1xf32> to vector<8x8xf32>
    %66 = arith.subf %62, %65 : vector<8x8xf32>
    %67 = math.exp %66 : vector<8x8xf32>
    %cst_22 = arith.constant dense<0.000000e+00> : vector<8xf32>
    %68 = vector.multi_reduction <add>, %67, %cst_22 [1] : vector<8x8xf32> to vector<8xf32>
    %69 = vector.shape_cast %68 : vector<8xf32> to vector<8x1xf32>
    %70 = tpu.reciprocal %69 {approx = true} : vector<8x1xf32> -> vector<8x1xf32>
    %71 = vector.broadcast %70 : vector<8x1xf32> to vector<8x8xf32>
    %72 = arith.mulf %67, %71 : vector<8x8xf32>
    %73 = arith.truncf %72 : vector<8x8xf32> to vector<8x8xbf16>
    %cst_23 = arith.constant dense<0.000000e+00> : vector<8x8xf32>
    %74 = tpu.matmul %73, %57, %cst_23 {dimension_numbers = #tpu.dot_dimension_numbers<[1], [0], [0], [1], [0, 0, 1, 1], [], []>} : vector<8x8xbf16>, vector<8x8xbf16>, vector<8x8xf32> -> vector<8x8xf32>
    %75 = arith.truncf %74 : vector<8x8xf32> to vector<8x8xbf16>
    %c0_24 = arith.constant 0 : index
    %c0_25 = arith.constant 0 : index
    %c16 = arith.constant 16 : index
    %76 = vector.load %arg3[%c0_24, %c0_25, %c16] : memref<1x8x32xbf16, #tpu.memory_space<vmem>>, vector<1x8x8xbf16>
    %77 = vector.shape_cast %76 : vector<1x8x8xbf16> to vector<8x8xbf16>
    %78 = vector.shape_cast %75 : vector<8x8xbf16> to vector<1x8x8xbf16>
    tpu.vector_store %arg3[%c0_24, %c0_25, %c16], %78 {strides = array<i32>} : memref<1x8x32xbf16, #tpu.memory_space<vmem>>, vector<1x8x8xbf16>,
    %79 = vector.extract_strided_slice %2 {offsets = [0, 24], sizes = [8, 8], strides = [1, 1]} : vector<8x32xbf16> to vector<8x8xbf16>
    %80 = vector.extract_strided_slice %3 {offsets = [0, 24], sizes = [8, 8], strides = [1, 1]} : vector<8x32xbf16> to vector<8x8xbf16>
    %81 = vector.extract_strided_slice %4 {offsets = [0, 24], sizes = [8, 8], strides = [1, 1]} : vector<8x32xbf16> to vector<8x8xbf16>
    %cst_26 = arith.constant dense<0.000000e+00> : vector<8x8xf32>
    %82 = tpu.matmul %79, %80, %cst_26 {dimension_numbers = #tpu.dot_dimension_numbers<[1], [1], [0], [0], [0, 0, 1, 0], [], []>} : vector<8x8xbf16>, vector<8x8xbf16>, vector<8x8xf32> -> vector<8x8xf32>
    %cst_27 = arith.constant 0.353553385 : f32
    %83 = vector.broadcast %cst_27 : f32 to vector<8x8xf32>
    %84 = arith.mulf %82, %83 : vector<8x8xf32>
    %85 = vector.broadcast %6 : vector<1x8xf32> to vector<8x8xf32>
    %86 = arith.addf %84, %85 : vector<8x8xf32>
    %cst_28 = arith.constant dense<0xFF800000> : vector<8xf32>
    %87 = vector.multi_reduction <maximumf>, %86, %cst_28 [1] : vector<8x8xf32> to vector<8xf32>
    %88 = vector.shape_cast %87 : vector<8xf32> to vector<8x1xf32>
    %89 = vector.broadcast %88 : vector<8x1xf32> to vector<8x8xf32>
    %90 = arith.subf %86, %89 : vector<8x8xf32>
    %91 = math.exp %90 : vector<8x8xf32>
    %cst_29 = arith.constant dense<0.000000e+00> : vector<8xf32>
    %92 = vector.multi_reduction <add>, %91, %cst_29 [1] : vector<8x8xf32> to vector<8xf32>
    %93 = vector.shape_cast %92 : vector<8xf32> to vector<8x1xf32>
    %94 = tpu.reciprocal %93 {approx = true} : vector<8x1xf32> -> vector<8x1xf32>
    %95 = vector.broadcast %94 : vector<8x1xf32> to vector<8x8xf32>
    %96 = arith.mulf %91, %95 : vector<8x8xf32>
    %97 = arith.truncf %96 : vector<8x8xf32> to vector<8x8xbf16>
    %cst_30 = arith.constant dense<0.000000e+00> : vector<8x8xf32>
    %98 = tpu.matmul %97, %81, %cst_30 {dimension_numbers = #tpu.dot_dimension_numbers<[1], [0], [0], [1], [0, 0, 1, 1], [], []>} : vector<8x8xbf16>, vector<8x8xbf16>, vector<8x8xf32> -> vector<8x8xf32>
    %99 = arith.truncf %98 : vector<8x8xf32> to vector<8x8xbf16>
    %c0_31 = arith.constant 0 : index
    %c0_32 = arith.constant 0 : index
    %c24 = arith.constant 24 : index
    %100 = vector.load %arg3[%c0_31, %c0_32, %c24] : memref<1x8x32xbf16, #tpu.memory_space<vmem>>, vector<1x8x8xbf16>
    %101 = vector.shape_cast %100 : vector<1x8x8xbf16> to vector<8x8xbf16>
    %102 = vector.shape_cast %99 : vector<8x8xbf16> to vector<1x8x8xbf16>
    tpu.vector_store %arg3[%c0_31, %c0_32, %c24], %102 {strides = array<i32>} : memref<1x8x32xbf16, #tpu.memory_space<vmem>>, vector<1x8x8xbf16>,
    return
  }
  func.func @transform_0(%arg0: i32) -> (i32, i32, i32) {
    %c0_i32 = arith.constant 0 : i32
    %c0_i32_0 = arith.constant 0 : i32
    %c0_i32_1 = arith.constant 0 : i32
    return %arg0, %c0_i32, %c0_i32_0 : i32, i32, i32
  }
  func.func @transform_1(%arg0: i32) -> (i32, i32, i32) {
    %c0_i32 = arith.constant 0 : i32
    %c0_i32_0 = arith.constant 0 : i32
    %c0_i32_1 = arith.constant 0 : i32
    return %arg0, %c0_i32, %c0_i32_0 : i32, i32, i32
  }
  func.func @transform_2(%arg0: i32) -> (i32, i32, i32) {
    %c0_i32 = arith.constant 0 : i32
    %c0_i32_0 = arith.constant 0 : i32
    %c0_i32_1 = arith.constant 0 : i32
    return %arg0, %c0_i32, %c0_i32_0 : i32, i32, i32
  }
}

module attributes {stable_mosaic.version = 11 : i64} {
  func.func @_linear_res_ln_kernel(%arg0: i32, %arg1: i32, %arg2: memref<16x32xbf16, #tpu.memory_space<vmem>>, %arg3: memref<32x32xbf16, #tpu.memory_space<vmem>>, %arg4: memref<1x32xf32, #tpu.memory_space<vmem>>, %arg5: memref<16x32xbf16, #tpu.memory_space<vmem>>, %arg6: memref<1x32xf32, #tpu.memory_space<vmem>>, %arg7: memref<1x32xf32, #tpu.memory_space<vmem>>, %arg8: memref<16x32xbf16, #tpu.memory_space<vmem>>, %arg9: memref<16x32xf32, #tpu.memory_space<vmem>>) attributes {dimension_semantics = [#tpu.dimension_semantics<parallel>, #tpu.dimension_semantics<arbitrary>], iteration_bounds = array<i64: 1, 1>, scalar_prefetch = 0 : i64, scratch_operands = 1 : i64, tpu.core_type = #tpu.core_type<tc>, window_params = [{transform_indices = @transform_0, window_bounds = array<i64: 16, 32>}, {transform_indices = @transform_1, window_bounds = array<i64: 32, 32>}, {pipeline_mode = #tpu.pipeline_mode<synchronous>, transform_indices = @transform_2, window_bounds = array<i64: 1, 32>}, {transform_indices = @transform_3, window_bounds = array<i64: 16, 32>}, {pipeline_mode = #tpu.pipeline_mode<synchronous>, transform_indices = @transform_4, window_bounds = array<i64: 1, 32>}, {pipeline_mode = #tpu.pipeline_mode<synchronous>, transform_indices = @transform_5, window_bounds = array<i64: 1, 32>}, {transform_indices = @transform_6, window_bounds = array<i64: 16, 32>}]} {
    %c0_i32 = arith.constant 0 : i32
    %0 = arith.cmpi eq, %arg1, %c0_i32 : i32
    %1 = arith.extui %0 : i1 to i32
    %c0_i32_0 = arith.constant 0 : i32
    %2 = arith.cmpi ne, %1, %c0_i32_0 : i32
    scf.if %2 {
      %cst_10 = arith.constant 0.000000e+00 : f32
      %12 = vector.broadcast %cst_10 : f32 to vector<16x32xf32>
      %c0_11 = arith.constant 0 : index
      %c0_12 = arith.constant 0 : index
      %13 = vector.load %arg9[%c0_11, %c0_12] : memref<16x32xf32, #tpu.memory_space<vmem>>, vector<16x32xf32>
      tpu.vector_store %arg9[%c0_11, %c0_12], %12 {strides = array<i32>} : memref<16x32xf32, #tpu.memory_space<vmem>>, vector<16x32xf32>,
    } else {
    }
    %c0 = arith.constant 0 : index
    %c0_1 = arith.constant 0 : index
    %3 = vector.load %arg9[%c0, %c0_1] : memref<16x32xf32, #tpu.memory_space<vmem>>, vector<16x32xf32>
    %c0_2 = arith.constant 0 : index
    %c0_3 = arith.constant 0 : index
    %4 = vector.load %arg2[%c0_2, %c0_3] : memref<16x32xbf16, #tpu.memory_space<vmem>>, vector<16x32xbf16>
    %c0_4 = arith.constant 0 : index
    %c0_5 = arith.constant 0 : index
    %5 = vector.load %arg3[%c0_4, %c0_5] : memref<32x32xbf16, #tpu.memory_space<vmem>>, vector<32x32xbf16>
    %cst = arith.constant dense<0.000000e+00> : vector<16x32xf32>
    %6 = tpu.matmul %4, %5, %cst {dimension_numbers = #tpu.dot_dimension_numbers<[1], [0], [0], [1], [0, 0, 1, 1], [], []>} : vector<16x32xbf16>, vector<32x32xbf16>, vector<16x32xf32> -> vector<16x32xf32>
    %7 = arith.addf %3, %6 : vector<16x32xf32>
    %c0_6 = arith.constant 0 : index
    %c0_7 = arith.constant 0 : index
    %8 = vector.load %arg9[%c0_6, %c0_7] : memref<16x32xf32, #tpu.memory_space<vmem>>, vector<16x32xf32>
    tpu.vector_store %arg9[%c0_6, %c0_7], %7 {strides = array<i32>} : memref<16x32xf32, #tpu.memory_space<vmem>>, vector<16x32xf32>,
    %c0_i32_8 = arith.constant 0 : i32
    %9 = arith.cmpi eq, %arg1, %c0_i32_8 : i32
    %10 = arith.extui %9 : i1 to i32
    %c0_i32_9 = arith.constant 0 : i32
    %11 = arith.cmpi ne, %10, %c0_i32_9 : i32
    scf.if %11 {
      %c0_10 = arith.constant 0 : index
      %c0_11 = arith.constant 0 : index
      %12 = vector.load %arg9[%c0_10, %c0_11] : memref<16x32xf32, #tpu.memory_space<vmem>>, vector<16x32xf32>
      %c0_12 = arith.constant 0 : index
      %c0_13 = arith.constant 0 : index
      %13 = vector.load %arg4[%c0_12, %c0_13] : memref<1x32xf32, #tpu.memory_space<vmem>>, vector<1x32xf32>
      %14 = vector.broadcast %13 : vector<1x32xf32> to vector<16x32xf32>
      %15 = arith.addf %12, %14 : vector<16x32xf32>
      %c0_14 = arith.constant 0 : index
      %c0_15 = arith.constant 0 : index
      %16 = vector.load %arg5[%c0_14, %c0_15] : memref<16x32xbf16, #tpu.memory_space<vmem>>, vector<16x32xbf16>
      %17 = arith.extf %16 : vector<16x32xbf16> to vector<16x32xf32>
      %18 = arith.addf %15, %17 : vector<16x32xf32>
      %cst_16 = arith.constant dense<0.000000e+00> : vector<16xf32>
      %19 = vector.multi_reduction <add>, %18, %cst_16 [1] : vector<16x32xf32> to vector<16xf32>
      %20 = vector.shape_cast %19 : vector<16xf32> to vector<16x1xf32>
      %cst_17 = arith.constant 3.200000e+01 : f32
      %21 = vector.broadcast %cst_17 : f32 to vector<16x1xf32>
      %22 = arith.divf %20, %21 : vector<16x1xf32>
      %23 = vector.broadcast %22 : vector<16x1xf32> to vector<16x32xf32>
      %24 = arith.subf %18, %23 : vector<16x32xf32>
      %25 = arith.mulf %24, %24 : vector<16x32xf32>
      %cst_18 = arith.constant dense<0.000000e+00> : vector<16xf32>
      %26 = vector.multi_reduction <add>, %25, %cst_18 [1] : vector<16x32xf32> to vector<16xf32>
      %27 = vector.shape_cast %26 : vector<16xf32> to vector<16x1xf32>
      %cst_19 = arith.constant 3.200000e+01 : f32
      %28 = vector.broadcast %cst_19 : f32 to vector<16x1xf32>
      %29 = arith.divf %27, %28 : vector<16x1xf32>
      %30 = vector.broadcast %22 : vector<16x1xf32> to vector<16x32xf32>
      %31 = arith.subf %18, %30 : vector<16x32xf32>
      %cst_20 = arith.constant 9.99999974E-6 : f32
      %32 = vector.broadcast %cst_20 : f32 to vector<16x1xf32>
      %33 = arith.addf %29, %32 : vector<16x1xf32>
      %34 = math.rsqrt %33 : vector<16x1xf32>
      %35 = vector.broadcast %34 : vector<16x1xf32> to vector<16x32xf32>
      %36 = arith.mulf %31, %35 : vector<16x32xf32>
      %c0_21 = arith.constant 0 : index
      %c0_22 = arith.constant 0 : index
      %37 = vector.load %arg6[%c0_21, %c0_22] : memref<1x32xf32, #tpu.memory_space<vmem>>, vector<1x32xf32>
      %38 = vector.broadcast %37 : vector<1x32xf32> to vector<16x32xf32>
      %39 = arith.mulf %36, %38 : vector<16x32xf32>
      %c0_23 = arith.constant 0 : index
      %c0_24 = arith.constant 0 : index
      %40 = vector.load %arg7[%c0_23, %c0_24] : memref<1x32xf32, #tpu.memory_space<vmem>>, vector<1x32xf32>
      %41 = vector.broadcast %40 : vector<1x32xf32> to vector<16x32xf32>
      %42 = arith.addf %39, %41 : vector<16x32xf32>
      %43 = arith.truncf %42 : vector<16x32xf32> to vector<16x32xbf16>
      %c0_25 = arith.constant 0 : index
      %c0_26 = arith.constant 0 : index
      %44 = vector.load %arg8[%c0_25, %c0_26] : memref<16x32xbf16, #tpu.memory_space<vmem>>, vector<16x32xbf16>
      tpu.vector_store %arg8[%c0_25, %c0_26], %43 {strides = array<i32>} : memref<16x32xbf16, #tpu.memory_space<vmem>>, vector<16x32xbf16>,
    } else {
    }
    return
  }
  func.func @transform_0(%arg0: i32, %arg1: i32) -> (i32, i32) {
    %c0_i32 = arith.constant 0 : i32
    return %arg0, %arg1 : i32, i32
  }
  func.func @transform_1(%arg0: i32, %arg1: i32) -> (i32, i32) {
    %c0_i32 = arith.constant 0 : i32
    %c0_i32_0 = arith.constant 0 : i32
    return %arg1, %c0_i32 : i32, i32
  }
  func.func @transform_2(%arg0: i32, %arg1: i32) -> (i32, i32) {
    %c0_i32 = arith.constant 0 : i32
    %c0_i32_0 = arith.constant 0 : i32
    %c0_i32_1 = arith.constant 0 : i32
    return %c0_i32, %c0_i32_0 : i32, i32
  }
  func.func @transform_3(%arg0: i32, %arg1: i32) -> (i32, i32) {
    %c0_i32 = arith.constant 0 : i32
    %c0_i32_0 = arith.constant 0 : i32
    return %arg0, %c0_i32 : i32, i32
  }
  func.func @transform_4(%arg0: i32, %arg1: i32) -> (i32, i32) {
    %c0_i32 = arith.constant 0 : i32
    %c0_i32_0 = arith.constant 0 : i32
    %c0_i32_1 = arith.constant 0 : i32
    return %c0_i32, %c0_i32_0 : i32, i32
  }
  func.func @transform_5(%arg0: i32, %arg1: i32) -> (i32, i32) {
    %c0_i32 = arith.constant 0 : i32
    %c0_i32_0 = arith.constant 0 : i32
    %c0_i32_1 = arith.constant 0 : i32
    return %c0_i32, %c0_i32_0 : i32, i32
  }
  func.func @transform_6(%arg0: i32, %arg1: i32) -> (i32, i32) {
    %c0_i32 = arith.constant 0 : i32
    %c0_i32_0 = arith.constant 0 : i32
    return %arg0, %c0_i32 : i32, i32
  }
}

module attributes {stable_mosaic.version = 11 : i64} {
  func.func @_ffn_res_ln_kernel(%arg0: i32, %arg1: memref<16x32xbf16, #tpu.memory_space<vmem>>, %arg2: memref<32x64xbf16, #tpu.memory_space<vmem>>, %arg3: memref<1x64xf32, #tpu.memory_space<vmem>>, %arg4: memref<64x32xbf16, #tpu.memory_space<vmem>>, %arg5: memref<1x32xf32, #tpu.memory_space<vmem>>, %arg6: memref<1x32xf32, #tpu.memory_space<vmem>>, %arg7: memref<1x32xf32, #tpu.memory_space<vmem>>, %arg8: memref<16x32xbf16, #tpu.memory_space<vmem>>) attributes {dimension_semantics = [#tpu.dimension_semantics<parallel>], iteration_bounds = array<i64: 1>, scalar_prefetch = 0 : i64, scratch_operands = 0 : i64, tpu.core_type = #tpu.core_type<tc>, window_params = [{transform_indices = @transform_0, window_bounds = array<i64: 16, 32>}, {pipeline_mode = #tpu.pipeline_mode<synchronous>, transform_indices = @transform_1, window_bounds = array<i64: 32, 64>}, {pipeline_mode = #tpu.pipeline_mode<synchronous>, transform_indices = @transform_2, window_bounds = array<i64: 1, 64>}, {pipeline_mode = #tpu.pipeline_mode<synchronous>, transform_indices = @transform_3, window_bounds = array<i64: 64, 32>}, {pipeline_mode = #tpu.pipeline_mode<synchronous>, transform_indices = @transform_4, window_bounds = array<i64: 1, 32>}, {pipeline_mode = #tpu.pipeline_mode<synchronous>, transform_indices = @transform_5, window_bounds = array<i64: 1, 32>}, {pipeline_mode = #tpu.pipeline_mode<synchronous>, transform_indices = @transform_6, window_bounds = array<i64: 1, 32>}, {transform_indices = @transform_7, window_bounds = array<i64: 16, 32>}]} {
    %c0 = arith.constant 0 : index
    %c0_0 = arith.constant 0 : index
    %0 = vector.load %arg1[%c0, %c0_0] : memref<16x32xbf16, #tpu.memory_space<vmem>>, vector<16x32xbf16>
    %c0_1 = arith.constant 0 : index
    %c0_2 = arith.constant 0 : index
    %1 = vector.load %arg2[%c0_1, %c0_2] : memref<32x64xbf16, #tpu.memory_space<vmem>>, vector<32x64xbf16>
    %cst = arith.constant dense<0.000000e+00> : vector<16x64xf32>
    %2 = tpu.matmul %0, %1, %cst {dimension_numbers = #tpu.dot_dimension_numbers<[1], [0], [0], [1], [0, 0, 1, 1], [], []>} : vector<16x32xbf16>, vector<32x64xbf16>, vector<16x64xf32> -> vector<16x64xf32>
    %c0_3 = arith.constant 0 : index
    %c0_4 = arith.constant 0 : index
    %3 = vector.load %arg3[%c0_3, %c0_4] : memref<1x64xf32, #tpu.memory_space<vmem>>, vector<1x64xf32>
    %4 = vector.broadcast %3 : vector<1x64xf32> to vector<16x64xf32>
    %5 = arith.addf %2, %4 : vector<16x64xf32>
    %cst_5 = arith.constant 0.000000e+00 : f32
    %6 = vector.broadcast %cst_5 : f32 to vector<16x64xf32>
    %7 = arith.maximumf %5, %6 : vector<16x64xf32>
    %8 = arith.truncf %7 : vector<16x64xf32> to vector<16x64xbf16>
    %c0_6 = arith.constant 0 : index
    %c0_7 = arith.constant 0 : index
    %9 = vector.load %arg4[%c0_6, %c0_7] : memref<64x32xbf16, #tpu.memory_space<vmem>>, vector<64x32xbf16>
    %cst_8 = arith.constant dense<0.000000e+00> : vector<16x32xf32>
    %10 = tpu.matmul %8, %9, %cst_8 {dimension_numbers = #tpu.dot_dimension_numbers<[1], [0], [0], [1], [0, 0, 1, 1], [], []>} : vector<16x64xbf16>, vector<64x32xbf16>, vector<16x32xf32> -> vector<16x32xf32>
    %c0_9 = arith.constant 0 : index
    %c0_10 = arith.constant 0 : index
    %11 = vector.load %arg5[%c0_9, %c0_10] : memref<1x32xf32, #tpu.memory_space<vmem>>, vector<1x32xf32>
    %12 = vector.broadcast %11 : vector<1x32xf32> to vector<16x32xf32>
    %13 = arith.addf %10, %12 : vector<16x32xf32>
    %14 = arith.extf %0 : vector<16x32xbf16> to vector<16x32xf32>
    %15 = arith.addf %13, %14 : vector<16x32xf32>
    %cst_11 = arith.constant dense<0.000000e+00> : vector<16xf32>
    %16 = vector.multi_reduction <add>, %15, %cst_11 [1] : vector<16x32xf32> to vector<16xf32>
    %17 = vector.shape_cast %16 : vector<16xf32> to vector<16x1xf32>
    %cst_12 = arith.constant 3.200000e+01 : f32
    %18 = vector.broadcast %cst_12 : f32 to vector<16x1xf32>
    %19 = arith.divf %17, %18 : vector<16x1xf32>
    %20 = vector.broadcast %19 : vector<16x1xf32> to vector<16x32xf32>
    %21 = arith.subf %15, %20 : vector<16x32xf32>
    %22 = arith.mulf %21, %21 : vector<16x32xf32>
    %cst_13 = arith.constant dense<0.000000e+00> : vector<16xf32>
    %23 = vector.multi_reduction <add>, %22, %cst_13 [1] : vector<16x32xf32> to vector<16xf32>
    %24 = vector.shape_cast %23 : vector<16xf32> to vector<16x1xf32>
    %cst_14 = arith.constant 3.200000e+01 : f32
    %25 = vector.broadcast %cst_14 : f32 to vector<16x1xf32>
    %26 = arith.divf %24, %25 : vector<16x1xf32>
    %27 = vector.broadcast %19 : vector<16x1xf32> to vector<16x32xf32>
    %28 = arith.subf %15, %27 : vector<16x32xf32>
    %cst_15 = arith.constant 9.99999974E-6 : f32
    %29 = vector.broadcast %cst_15 : f32 to vector<16x1xf32>
    %30 = arith.addf %26, %29 : vector<16x1xf32>
    %31 = math.rsqrt %30 : vector<16x1xf32>
    %32 = vector.broadcast %31 : vector<16x1xf32> to vector<16x32xf32>
    %33 = arith.mulf %28, %32 : vector<16x32xf32>
    %c0_16 = arith.constant 0 : index
    %c0_17 = arith.constant 0 : index
    %34 = vector.load %arg6[%c0_16, %c0_17] : memref<1x32xf32, #tpu.memory_space<vmem>>, vector<1x32xf32>
    %35 = vector.broadcast %34 : vector<1x32xf32> to vector<16x32xf32>
    %36 = arith.mulf %33, %35 : vector<16x32xf32>
    %c0_18 = arith.constant 0 : index
    %c0_19 = arith.constant 0 : index
    %37 = vector.load %arg7[%c0_18, %c0_19] : memref<1x32xf32, #tpu.memory_space<vmem>>, vector<1x32xf32>
    %38 = vector.broadcast %37 : vector<1x32xf32> to vector<16x32xf32>
    %39 = arith.addf %36, %38 : vector<16x32xf32>
    %40 = arith.truncf %39 : vector<16x32xf32> to vector<16x32xbf16>
    %c0_20 = arith.constant 0 : index
    %c0_21 = arith.constant 0 : index
    %41 = vector.load %arg8[%c0_20, %c0_21] : memref<16x32xbf16, #tpu.memory_space<vmem>>, vector<16x32xbf16>
    tpu.vector_store %arg8[%c0_20, %c0_21], %40 {strides = array<i32>} : memref<16x32xbf16, #tpu.memory_space<vmem>>, vector<16x32xbf16>,
    return
  }
  func.func @transform_0(%arg0: i32) -> (i32, i32) {
    %c0_i32 = arith.constant 0 : i32
    %c0_i32_0 = arith.constant 0 : i32
    return %arg0, %c0_i32 : i32, i32
  }
  func.func @transform_1(%arg0: i32) -> (i32, i32) {
    %c0_i32 = arith.constant 0 : i32
    %c0_i32_0 = arith.constant 0 : i32
    %c0_i32_1 = arith.constant 0 : i32
    return %c0_i32, %c0_i32_0 : i32, i32
  }
  func.func @transform_2(%arg0: i32) -> (i32, i32) {
    %c0_i32 = arith.constant 0 : i32
    %c0_i32_0 = arith.constant 0 : i32
    %c0_i32_1 = arith.constant 0 : i32
    return %c0_i32, %c0_i32_0 : i32, i32
  }
  func.func @transform_3(%arg0: i32) -> (i32, i32) {
    %c0_i32 = arith.constant 0 : i32
    %c0_i32_0 = arith.constant 0 : i32
    %c0_i32_1 = arith.constant 0 : i32
    return %c0_i32, %c0_i32_0 : i32, i32
  }
  func.func @transform_4(%arg0: i32) -> (i32, i32) {
    %c0_i32 = arith.constant 0 : i32
    %c0_i32_0 = arith.constant 0 : i32
    %c0_i32_1 = arith.constant 0 : i32
    return %c0_i32, %c0_i32_0 : i32, i32
  }
  func.func @transform_5(%arg0: i32) -> (i32, i32) {
    %c0_i32 = arith.constant 0 : i32
    %c0_i32_0 = arith.constant 0 : i32
    %c0_i32_1 = arith.constant 0 : i32
    return %c0_i32, %c0_i32_0 : i32, i32
  }
  func.func @transform_6(%arg0: i32) -> (i32, i32) {
    %c0_i32 = arith.constant 0 : i32
    %c0_i32_0 = arith.constant 0 : i32
    %c0_i32_1 = arith.constant 0 : i32
    return %c0_i32, %c0_i32_0 : i32, i32
  }
  func.func @transform_7(%arg0: i32) -> (i32, i32) {
    %c0_i32 = arith.constant 0 : i32
    %c0_i32_0 = arith.constant 0 : i32
    return %arg0, %c0_i32 : i32, i32
  }
}

module attributes {stable_mosaic.version = 11 : i64} {
  func.func @_linear_kernel(%arg0: i32, %arg1: i32, %arg2: i32, %arg3: memref<16x32xbf16, #tpu.memory_space<vmem>>, %arg4: memref<32x32xbf16, #tpu.memory_space<vmem>>, %arg5: memref<1x32xf32, #tpu.memory_space<vmem>>, %arg6: memref<16x32xbf16, #tpu.memory_space<vmem>>, %arg7: memref<16x32xf32, #tpu.memory_space<vmem>>) attributes {dimension_semantics = [#tpu.dimension_semantics<parallel>, #tpu.dimension_semantics<parallel>, #tpu.dimension_semantics<arbitrary>], iteration_bounds = array<i64: 1, 1, 1>, scalar_prefetch = 0 : i64, scratch_operands = 1 : i64, tpu.core_type = #tpu.core_type<tc>, window_params = [{transform_indices = @transform_0, window_bounds = array<i64: 16, 32>}, {transform_indices = @transform_1, window_bounds = array<i64: 32, 32>}, {transform_indices = @transform_2, window_bounds = array<i64: 1, 32>}, {transform_indices = @transform_3, window_bounds = array<i64: 16, 32>}]} {
    %c0_i32 = arith.constant 0 : i32
    %0 = arith.cmpi eq, %arg2, %c0_i32 : i32
    %1 = arith.extui %0 : i1 to i32
    %c0_i32_0 = arith.constant 0 : i32
    %2 = arith.cmpi ne, %1, %c0_i32_0 : i32
    scf.if %2 {
      %cst_10 = arith.constant 0.000000e+00 : f32
      %12 = vector.broadcast %cst_10 : f32 to vector<16x32xf32>
      %c0_11 = arith.constant 0 : index
      %c0_12 = arith.constant 0 : index
      %13 = vector.load %arg7[%c0_11, %c0_12] : memref<16x32xf32, #tpu.memory_space<vmem>>, vector<16x32xf32>
      tpu.vector_store %arg7[%c0_11, %c0_12], %12 {strides = array<i32>} : memref<16x32xf32, #tpu.memory_space<vmem>>, vector<16x32xf32>,
    } else {
    }
    %c0 = arith.constant 0 : index
    %c0_1 = arith.constant 0 : index
    %3 = vector.load %arg7[%c0, %c0_1] : memref<16x32xf32, #tpu.memory_space<vmem>>, vector<16x32xf32>
    %c0_2 = arith.constant 0 : index
    %c0_3 = arith.constant 0 : index
    %4 = vector.load %arg3[%c0_2, %c0_3] : memref<16x32xbf16, #tpu.memory_space<vmem>>, vector<16x32xbf16>
    %c0_4 = arith.constant 0 : index
    %c0_5 = arith.constant 0 : index
    %5 = vector.load %arg4[%c0_4, %c0_5] : memref<32x32xbf16, #tpu.memory_space<vmem>>, vector<32x32xbf16>
    %cst = arith.constant dense<0.000000e+00> : vector<16x32xf32>
    %6 = tpu.matmul %4, %5, %cst {dimension_numbers = #tpu.dot_dimension_numbers<[1], [0], [0], [1], [0, 0, 1, 1], [], []>} : vector<16x32xbf16>, vector<32x32xbf16>, vector<16x32xf32> -> vector<16x32xf32>
    %7 = arith.addf %3, %6 : vector<16x32xf32>
    %c0_6 = arith.constant 0 : index
    %c0_7 = arith.constant 0 : index
    %8 = vector.load %arg7[%c0_6, %c0_7] : memref<16x32xf32, #tpu.memory_space<vmem>>, vector<16x32xf32>
    tpu.vector_store %arg7[%c0_6, %c0_7], %7 {strides = array<i32>} : memref<16x32xf32, #tpu.memory_space<vmem>>, vector<16x32xf32>,
    %c0_i32_8 = arith.constant 0 : i32
    %9 = arith.cmpi eq, %arg2, %c0_i32_8 : i32
    %10 = arith.extui %9 : i1 to i32
    %c0_i32_9 = arith.constant 0 : i32
    %11 = arith.cmpi ne, %10, %c0_i32_9 : i32
    scf.if %11 {
      %c0_10 = arith.constant 0 : index
      %c0_11 = arith.constant 0 : index
      %12 = vector.load %arg7[%c0_10, %c0_11] : memref<16x32xf32, #tpu.memory_space<vmem>>, vector<16x32xf32>
      %c0_12 = arith.constant 0 : index
      %c0_13 = arith.constant 0 : index
      %13 = vector.load %arg5[%c0_12, %c0_13] : memref<1x32xf32, #tpu.memory_space<vmem>>, vector<1x32xf32>
      %14 = vector.broadcast %13 : vector<1x32xf32> to vector<16x32xf32>
      %15 = arith.addf %12, %14 : vector<16x32xf32>
      %16 = arith.truncf %15 : vector<16x32xf32> to vector<16x32xbf16>
      %c0_14 = arith.constant 0 : index
      %c0_15 = arith.constant 0 : index
      %17 = vector.load %arg6[%c0_14, %c0_15] : memref<16x32xbf16, #tpu.memory_space<vmem>>, vector<16x32xbf16>
      tpu.vector_store %arg6[%c0_14, %c0_15], %16 {strides = array<i32>} : memref<16x32xbf16, #tpu.memory_space<vmem>>, vector<16x32xbf16>,
    } else {
    }
    return
  }
  func.func @transform_0(%arg0: i32, %arg1: i32, %arg2: i32) -> (i32, i32) {
    %c0_i32 = arith.constant 0 : i32
    return %arg0, %arg2 : i32, i32
  }
  func.func @transform_1(%arg0: i32, %arg1: i32, %arg2: i32) -> (i32, i32) {
    %c0_i32 = arith.constant 0 : i32
    return %arg2, %arg1 : i32, i32
  }
  func.func @transform_2(%arg0: i32, %arg1: i32, %arg2: i32) -> (i32, i32) {
    %c0_i32 = arith.constant 0 : i32
    %c0_i32_0 = arith.constant 0 : i32
    return %c0_i32, %arg1 : i32, i32
  }
  func.func @transform_3(%arg0: i32, %arg1: i32, %arg2: i32) -> (i32, i32) {
    %c0_i32 = arith.constant 0 : i32
    return %arg0, %arg1 : i32, i32
  }
}

module attributes {stable_mosaic.version = 11 : i64} {
  func.func @_self_attn_kernel(%arg0: i32, %arg1: memref<1x8x96xbf16, #tpu.memory_space<vmem>>, %arg2: memref<1x1x8xf32, #tpu.memory_space<vmem>>, %arg3: memref<1x8x32xbf16, #tpu.memory_space<vmem>>) attributes {dimension_semantics = [#tpu.dimension_semantics<parallel>], iteration_bounds = array<i64: 2>, scalar_prefetch = 0 : i64, scratch_operands = 0 : i64, tpu.core_type = #tpu.core_type<tc>, window_params = [{transform_indices = @transform_0, window_bounds = array<i64: 1, 8, 96>}, {transform_indices = @transform_1, window_bounds = array<i64: 1, 1, 8>}, {transform_indices = @transform_2, window_bounds = array<i64: 1, 8, 32>}]} {
    %c0 = arith.constant 0 : index
    %c0_0 = arith.constant 0 : index
    %c0_1 = arith.constant 0 : index
    %0 = vector.load %arg1[%c0, %c0_0, %c0_1] : memref<1x8x96xbf16, #tpu.memory_space<vmem>>, vector<1x8x96xbf16>
    %1 = vector.shape_cast %0 : vector<1x8x96xbf16> to vector<8x96xbf16>
    %2 = vector.extract_strided_slice %1 {offsets = [0, 0], sizes = [8, 32], strides = [1, 1]} : vector<8x96xbf16> to vector<8x32xbf16>
    %3 = vector.extract_strided_slice %1 {offsets = [0, 32], sizes = [8, 32], strides = [1, 1]} : vector<8x96xbf16> to vector<8x32xbf16>
    %4 = vector.extract_strided_slice %1 {offsets = [0, 64], sizes = [8, 32], strides = [1, 1]} : vector<8x96xbf16> to vector<8x32xbf16>
    %c0_2 = arith.constant 0 : index
    %c0_3 = arith.constant 0 : index
    %c0_4 = arith.constant 0 : index
    %5 = vector.load %arg2[%c0_2, %c0_3, %c0_4] : memref<1x1x8xf32, #tpu.memory_space<vmem>>, vector<1x1x8xf32>
    %6 = vector.shape_cast %5 : vector<1x1x8xf32> to vector<1x8xf32>
    %7 = tpu.iota {dimensions = array<i32: 0>} : vector<8x8xi32>
    %8 = tpu.iota {dimensions = array<i32: 1>} : vector<8x8xi32>
    %9 = arith.cmpi sle, %8, %7 : vector<8x8xi32>
    %cst = arith.constant 0.000000e+00 : f32
    %cst_5 = arith.constant -1.000000e+09 : f32
    %10 = vector.broadcast %cst : f32 to vector<8x8xf32>
    %11 = vector.broadcast %cst_5 : f32 to vector<8x8xf32>
    %12 = arith.select %9, %10, %11 : vector<8x8xi1>, vector<8x8xf32>
    %13 = vector.broadcast %6 : vector<1x8xf32> to vector<8x8xf32>
    %14 = arith.addf %13, %12 : vector<8x8xf32>
    %15 = vector.extract_strided_slice %2 {offsets = [0, 0], sizes = [8, 8], strides = [1, 1]} : vector<8x32xbf16> to vector<8x8xbf16>
    %16 = vector.extract_strided_slice %3 {offsets = [0, 0], sizes = [8, 8], strides = [1, 1]} : vector<8x32xbf16> to vector<8x8xbf16>
    %17 = vector.extract_strided_slice %4 {offsets = [0, 0], sizes = [8, 8], strides = [1, 1]} : vector<8x32xbf16> to vector<8x8xbf16>
    %cst_6 = arith.constant dense<0.000000e+00> : vector<8x8xf32>
    %18 = tpu.matmul %15, %16, %cst_6 {dimension_numbers = #tpu.dot_dimension_numbers<[1], [1], [0], [0], [0, 0, 1, 0], [], []>} : vector<8x8xbf16>, vector<8x8xbf16>, vector<8x8xf32> -> vector<8x8xf32>
    %cst_7 = arith.constant 0.353553385 : f32
    %19 = vector.broadcast %cst_7 : f32 to vector<8x8xf32>
    %20 = arith.mulf %18, %19 : vector<8x8xf32>
    %21 = arith.addf %20, %14 : vector<8x8xf32>
    %cst_8 = arith.constant dense<0xFF800000> : vector<8xf32>
    %22 = vector.multi_reduction <maximumf>, %21, %cst_8 [1] : vector<8x8xf32> to vector<8xf32>
    %23 = vector.shape_cast %22 : vector<8xf32> to vector<8x1xf32>
    %24 = vector.broadcast %23 : vector<8x1xf32> to vector<8x8xf32>
    %25 = arith.subf %21, %24 : vector<8x8xf32>
    %26 = math.exp %25 : vector<8x8xf32>
    %cst_9 = arith.constant dense<0.000000e+00> : vector<8xf32>
    %27 = vector.multi_reduction <add>, %26, %cst_9 [1] : vector<8x8xf32> to vector<8xf32>
    %28 = vector.shape_cast %27 : vector<8xf32> to vector<8x1xf32>
    %29 = tpu.reciprocal %28 {approx = true} : vector<8x1xf32> -> vector<8x1xf32>
    %30 = vector.broadcast %29 : vector<8x1xf32> to vector<8x8xf32>
    %31 = arith.mulf %26, %30 : vector<8x8xf32>
    %32 = arith.truncf %31 : vector<8x8xf32> to vector<8x8xbf16>
    %cst_10 = arith.constant dense<0.000000e+00> : vector<8x8xf32>
    %33 = tpu.matmul %32, %17, %cst_10 {dimension_numbers = #tpu.dot_dimension_numbers<[1], [0], [0], [1], [0, 0, 1, 1], [], []>} : vector<8x8xbf16>, vector<8x8xbf16>, vector<8x8xf32> -> vector<8x8xf32>
    %34 = arith.truncf %33 : vector<8x8xf32> to vector<8x8xbf16>
    %c0_11 = arith.constant 0 : index
    %c0_12 = arith.constant 0 : index
    %c0_13 = arith.constant 0 : index
    %35 = vector.load %arg3[%c0_11, %c0_12, %c0_13] : memref<1x8x32xbf16, #tpu.memory_space<vmem>>, vector<1x8x8xbf16>
    %36 = vector.shape_cast %35 : vector<1x8x8xbf16> to vector<8x8xbf16>
    %37 = vector.shape_cast %34 : vector<8x8xbf16> to vector<1x8x8xbf16>
    tpu.vector_store %arg3[%c0_11, %c0_12, %c0_13], %37 {strides = array<i32>} : memref<1x8x32xbf16, #tpu.memory_space<vmem>>, vector<1x8x8xbf16>,
    %38 = vector.extract_strided_slice %2 {offsets = [0, 8], sizes = [8, 8], strides = [1, 1]} : vector<8x32xbf16> to vector<8x8xbf16>
    %39 = vector.extract_strided_slice %3 {offsets = [0, 8], sizes = [8, 8], strides = [1, 1]} : vector<8x32xbf16> to vector<8x8xbf16>
    %40 = vector.extract_strided_slice %4 {offsets = [0, 8], sizes = [8, 8], strides = [1, 1]} : vector<8x32xbf16> to vector<8x8xbf16>
    %cst_14 = arith.constant dense<0.000000e+00> : vector<8x8xf32>
    %41 = tpu.matmul %38, %39, %cst_14 {dimension_numbers = #tpu.dot_dimension_numbers<[1], [1], [0], [0], [0, 0, 1, 0], [], []>} : vector<8x8xbf16>, vector<8x8xbf16>, vector<8x8xf32> -> vector<8x8xf32>
    %cst_15 = arith.constant 0.353553385 : f32
    %42 = vector.broadcast %cst_15 : f32 to vector<8x8xf32>
    %43 = arith.mulf %41, %42 : vector<8x8xf32>
    %44 = arith.addf %43, %14 : vector<8x8xf32>
    %cst_16 = arith.constant dense<0xFF800000> : vector<8xf32>
    %45 = vector.multi_reduction <maximumf>, %44, %cst_16 [1] : vector<8x8xf32> to vector<8xf32>
    %46 = vector.shape_cast %45 : vector<8xf32> to vector<8x1xf32>
    %47 = vector.broadcast %46 : vector<8x1xf32> to vector<8x8xf32>
    %48 = arith.subf %44, %47 : vector<8x8xf32>
    %49 = math.exp %48 : vector<8x8xf32>
    %cst_17 = arith.constant dense<0.000000e+00> : vector<8xf32>
    %50 = vector.multi_reduction <add>, %49, %cst_17 [1] : vector<8x8xf32> to vector<8xf32>
    %51 = vector.shape_cast %50 : vector<8xf32> to vector<8x1xf32>
    %52 = tpu.reciprocal %51 {approx = true} : vector<8x1xf32> -> vector<8x1xf32>
    %53 = vector.broadcast %52 : vector<8x1xf32> to vector<8x8xf32>
    %54 = arith.mulf %49, %53 : vector<8x8xf32>
    %55 = arith.truncf %54 : vector<8x8xf32> to vector<8x8xbf16>
    %cst_18 = arith.constant dense<0.000000e+00> : vector<8x8xf32>
    %56 = tpu.matmul %55, %40, %cst_18 {dimension_numbers = #tpu.dot_dimension_numbers<[1], [0], [0], [1], [0, 0, 1, 1], [], []>} : vector<8x8xbf16>, vector<8x8xbf16>, vector<8x8xf32> -> vector<8x8xf32>
    %57 = arith.truncf %56 : vector<8x8xf32> to vector<8x8xbf16>
    %c0_19 = arith.constant 0 : index
    %c0_20 = arith.constant 0 : index
    %c8 = arith.constant 8 : index
    %58 = vector.load %arg3[%c0_19, %c0_20, %c8] : memref<1x8x32xbf16, #tpu.memory_space<vmem>>, vector<1x8x8xbf16>
    %59 = vector.shape_cast %58 : vector<1x8x8xbf16> to vector<8x8xbf16>
    %60 = vector.shape_cast %57 : vector<8x8xbf16> to vector<1x8x8xbf16>
    tpu.vector_store %arg3[%c0_19, %c0_20, %c8], %60 {strides = array<i32>} : memref<1x8x32xbf16, #tpu.memory_space<vmem>>, vector<1x8x8xbf16>,
    %61 = vector.extract_strided_slice %2 {offsets = [0, 16], sizes = [8, 8], strides = [1, 1]} : vector<8x32xbf16> to vector<8x8xbf16>
    %62 = vector.extract_strided_slice %3 {offsets = [0, 16], sizes = [8, 8], strides = [1, 1]} : vector<8x32xbf16> to vector<8x8xbf16>
    %63 = vector.extract_strided_slice %4 {offsets = [0, 16], sizes = [8, 8], strides = [1, 1]} : vector<8x32xbf16> to vector<8x8xbf16>
    %cst_21 = arith.constant dense<0.000000e+00> : vector<8x8xf32>
    %64 = tpu.matmul %61, %62, %cst_21 {dimension_numbers = #tpu.dot_dimension_numbers<[1], [1], [0], [0], [0, 0, 1, 0], [], []>} : vector<8x8xbf16>, vector<8x8xbf16>, vector<8x8xf32> -> vector<8x8xf32>
    %cst_22 = arith.constant 0.353553385 : f32
    %65 = vector.broadcast %cst_22 : f32 to vector<8x8xf32>
    %66 = arith.mulf %64, %65 : vector<8x8xf32>
    %67 = arith.addf %66, %14 : vector<8x8xf32>
    %cst_23 = arith.constant dense<0xFF800000> : vector<8xf32>
    %68 = vector.multi_reduction <maximumf>, %67, %cst_23 [1] : vector<8x8xf32> to vector<8xf32>
    %69 = vector.shape_cast %68 : vector<8xf32> to vector<8x1xf32>
    %70 = vector.broadcast %69 : vector<8x1xf32> to vector<8x8xf32>
    %71 = arith.subf %67, %70 : vector<8x8xf32>
    %72 = math.exp %71 : vector<8x8xf32>
    %cst_24 = arith.constant dense<0.000000e+00> : vector<8xf32>
    %73 = vector.multi_reduction <add>, %72, %cst_24 [1] : vector<8x8xf32> to vector<8xf32>
    %74 = vector.shape_cast %73 : vector<8xf32> to vector<8x1xf32>
    %75 = tpu.reciprocal %74 {approx = true} : vector<8x1xf32> -> vector<8x1xf32>
    %76 = vector.broadcast %75 : vector<8x1xf32> to vector<8x8xf32>
    %77 = arith.mulf %72, %76 : vector<8x8xf32>
    %78 = arith.truncf %77 : vector<8x8xf32> to vector<8x8xbf16>
    %cst_25 = arith.constant dense<0.000000e+00> : vector<8x8xf32>
    %79 = tpu.matmul %78, %63, %cst_25 {dimension_numbers = #tpu.dot_dimension_numbers<[1], [0], [0], [1], [0, 0, 1, 1], [], []>} : vector<8x8xbf16>, vector<8x8xbf16>, vector<8x8xf32> -> vector<8x8xf32>
    %80 = arith.truncf %79 : vector<8x8xf32> to vector<8x8xbf16>
    %c0_26 = arith.constant 0 : index
    %c0_27 = arith.constant 0 : index
    %c16 = arith.constant 16 : index
    %81 = vector.load %arg3[%c0_26, %c0_27, %c16] : memref<1x8x32xbf16, #tpu.memory_space<vmem>>, vector<1x8x8xbf16>
    %82 = vector.shape_cast %81 : vector<1x8x8xbf16> to vector<8x8xbf16>
    %83 = vector.shape_cast %80 : vector<8x8xbf16> to vector<1x8x8xbf16>
    tpu.vector_store %arg3[%c0_26, %c0_27, %c16], %83 {strides = array<i32>} : memref<1x8x32xbf16, #tpu.memory_space<vmem>>, vector<1x8x8xbf16>,
    %84 = vector.extract_strided_slice %2 {offsets = [0, 24], sizes = [8, 8], strides = [1, 1]} : vector<8x32xbf16> to vector<8x8xbf16>
    %85 = vector.extract_strided_slice %3 {offsets = [0, 24], sizes = [8, 8], strides = [1, 1]} : vector<8x32xbf16> to vector<8x8xbf16>
    %86 = vector.extract_strided_slice %4 {offsets = [0, 24], sizes = [8, 8], strides = [1, 1]} : vector<8x32xbf16> to vector<8x8xbf16>
    %cst_28 = arith.constant dense<0.000000e+00> : vector<8x8xf32>
    %87 = tpu.matmul %84, %85, %cst_28 {dimension_numbers = #tpu.dot_dimension_numbers<[1], [1], [0], [0], [0, 0, 1, 0], [], []>} : vector<8x8xbf16>, vector<8x8xbf16>, vector<8x8xf32> -> vector<8x8xf32>
    %cst_29 = arith.constant 0.353553385 : f32
    %88 = vector.broadcast %cst_29 : f32 to vector<8x8xf32>
    %89 = arith.mulf %87, %88 : vector<8x8xf32>
    %90 = arith.addf %89, %14 : vector<8x8xf32>
    %cst_30 = arith.constant dense<0xFF800000> : vector<8xf32>
    %91 = vector.multi_reduction <maximumf>, %90, %cst_30 [1] : vector<8x8xf32> to vector<8xf32>
    %92 = vector.shape_cast %91 : vector<8xf32> to vector<8x1xf32>
    %93 = vector.broadcast %92 : vector<8x1xf32> to vector<8x8xf32>
    %94 = arith.subf %90, %93 : vector<8x8xf32>
    %95 = math.exp %94 : vector<8x8xf32>
    %cst_31 = arith.constant dense<0.000000e+00> : vector<8xf32>
    %96 = vector.multi_reduction <add>, %95, %cst_31 [1] : vector<8x8xf32> to vector<8xf32>
    %97 = vector.shape_cast %96 : vector<8xf32> to vector<8x1xf32>
    %98 = tpu.reciprocal %97 {approx = true} : vector<8x1xf32> -> vector<8x1xf32>
    %99 = vector.broadcast %98 : vector<8x1xf32> to vector<8x8xf32>
    %100 = arith.mulf %95, %99 : vector<8x8xf32>
    %101 = arith.truncf %100 : vector<8x8xf32> to vector<8x8xbf16>
    %cst_32 = arith.constant dense<0.000000e+00> : vector<8x8xf32>
    %102 = tpu.matmul %101, %86, %cst_32 {dimension_numbers = #tpu.dot_dimension_numbers<[1], [0], [0], [1], [0, 0, 1, 1], [], []>} : vector<8x8xbf16>, vector<8x8xbf16>, vector<8x8xf32> -> vector<8x8xf32>
    %103 = arith.truncf %102 : vector<8x8xf32> to vector<8x8xbf16>
    %c0_33 = arith.constant 0 : index
    %c0_34 = arith.constant 0 : index
    %c24 = arith.constant 24 : index
    %104 = vector.load %arg3[%c0_33, %c0_34, %c24] : memref<1x8x32xbf16, #tpu.memory_space<vmem>>, vector<1x8x8xbf16>
    %105 = vector.shape_cast %104 : vector<1x8x8xbf16> to vector<8x8xbf16>
    %106 = vector.shape_cast %103 : vector<8x8xbf16> to vector<1x8x8xbf16>
    tpu.vector_store %arg3[%c0_33, %c0_34, %c24], %106 {strides = array<i32>} : memref<1x8x32xbf16, #tpu.memory_space<vmem>>, vector<1x8x8xbf16>,
    return
  }
  func.func @transform_0(%arg0: i32) -> (i32, i32, i32) {
    %c0_i32 = arith.constant 0 : i32
    %c0_i32_0 = arith.constant 0 : i32
    %c0_i32_1 = arith.constant 0 : i32
    return %arg0, %c0_i32, %c0_i32_0 : i32, i32, i32
  }
  func.func @transform_1(%arg0: i32) -> (i32, i32, i32) {
    %c0_i32 = arith.constant 0 : i32
    %c0_i32_0 = arith.constant 0 : i32
    %c0_i32_1 = arith.constant 0 : i32
    return %arg0, %c0_i32, %c0_i32_0 : i32, i32, i32
  }
  func.func @transform_2(%arg0: i32) -> (i32, i32, i32) {
    %c0_i32 = arith.constant 0 : i32
    %c0_i32_0 = arith.constant 0 : i32
    %c0_i32_1 = arith.constant 0 : i32
    return %arg0, %c0_i32, %c0_i32_0 : i32, i32, i32
  }
}

module attributes {stable_mosaic.version = 11 : i64} {
  func.func @_linear_kernel(%arg0: i32, %arg1: i32, %arg2: i32, %arg3: memref<16x32xbf16, #tpu.memory_space<vmem>>, %arg4: memref<32x64xbf16, #tpu.memory_space<vmem>>, %arg5: memref<1x64xf32, #tpu.memory_space<vmem>>, %arg6: memref<16x64xbf16, #tpu.memory_space<vmem>>, %arg7: memref<16x64xf32, #tpu.memory_space<vmem>>) attributes {dimension_semantics = [#tpu.dimension_semantics<parallel>, #tpu.dimension_semantics<parallel>, #tpu.dimension_semantics<arbitrary>], iteration_bounds = array<i64: 1, 1, 1>, scalar_prefetch = 0 : i64, scratch_operands = 1 : i64, tpu.core_type = #tpu.core_type<tc>, window_params = [{transform_indices = @transform_0, window_bounds = array<i64: 16, 32>}, {transform_indices = @transform_1, window_bounds = array<i64: 32, 64>}, {transform_indices = @transform_2, window_bounds = array<i64: 1, 64>}, {transform_indices = @transform_3, window_bounds = array<i64: 16, 64>}]} {
    %c0_i32 = arith.constant 0 : i32
    %0 = arith.cmpi eq, %arg2, %c0_i32 : i32
    %1 = arith.extui %0 : i1 to i32
    %c0_i32_0 = arith.constant 0 : i32
    %2 = arith.cmpi ne, %1, %c0_i32_0 : i32
    scf.if %2 {
      %cst_10 = arith.constant 0.000000e+00 : f32
      %12 = vector.broadcast %cst_10 : f32 to vector<16x64xf32>
      %c0_11 = arith.constant 0 : index
      %c0_12 = arith.constant 0 : index
      %13 = vector.load %arg7[%c0_11, %c0_12] : memref<16x64xf32, #tpu.memory_space<vmem>>, vector<16x64xf32>
      tpu.vector_store %arg7[%c0_11, %c0_12], %12 {strides = array<i32>} : memref<16x64xf32, #tpu.memory_space<vmem>>, vector<16x64xf32>,
    } else {
    }
    %c0 = arith.constant 0 : index
    %c0_1 = arith.constant 0 : index
    %3 = vector.load %arg7[%c0, %c0_1] : memref<16x64xf32, #tpu.memory_space<vmem>>, vector<16x64xf32>
    %c0_2 = arith.constant 0 : index
    %c0_3 = arith.constant 0 : index
    %4 = vector.load %arg3[%c0_2, %c0_3] : memref<16x32xbf16, #tpu.memory_space<vmem>>, vector<16x32xbf16>
    %c0_4 = arith.constant 0 : index
    %c0_5 = arith.constant 0 : index
    %5 = vector.load %arg4[%c0_4, %c0_5] : memref<32x64xbf16, #tpu.memory_space<vmem>>, vector<32x64xbf16>
    %cst = arith.constant dense<0.000000e+00> : vector<16x64xf32>
    %6 = tpu.matmul %4, %5, %cst {dimension_numbers = #tpu.dot_dimension_numbers<[1], [0], [0], [1], [0, 0, 1, 1], [], []>} : vector<16x32xbf16>, vector<32x64xbf16>, vector<16x64xf32> -> vector<16x64xf32>
    %7 = arith.addf %3, %6 : vector<16x64xf32>
    %c0_6 = arith.constant 0 : index
    %c0_7 = arith.constant 0 : index
    %8 = vector.load %arg7[%c0_6, %c0_7] : memref<16x64xf32, #tpu.memory_space<vmem>>, vector<16x64xf32>
    tpu.vector_store %arg7[%c0_6, %c0_7], %7 {strides = array<i32>} : memref<16x64xf32, #tpu.memory_space<vmem>>, vector<16x64xf32>,
    %c0_i32_8 = arith.constant 0 : i32
    %9 = arith.cmpi eq, %arg2, %c0_i32_8 : i32
    %10 = arith.extui %9 : i1 to i32
    %c0_i32_9 = arith.constant 0 : i32
    %11 = arith.cmpi ne, %10, %c0_i32_9 : i32
    scf.if %11 {
      %c0_10 = arith.constant 0 : index
      %c0_11 = arith.constant 0 : index
      %12 = vector.load %arg7[%c0_10, %c0_11] : memref<16x64xf32, #tpu.memory_space<vmem>>, vector<16x64xf32>
      %c0_12 = arith.constant 0 : index
      %c0_13 = arith.constant 0 : index
      %13 = vector.load %arg5[%c0_12, %c0_13] : memref<1x64xf32, #tpu.memory_space<vmem>>, vector<1x64xf32>
      %14 = vector.broadcast %13 : vector<1x64xf32> to vector<16x64xf32>
      %15 = arith.addf %12, %14 : vector<16x64xf32>
      %16 = arith.truncf %15 : vector<16x64xf32> to vector<16x64xbf16>
      %c0_14 = arith.constant 0 : index
      %c0_15 = arith.constant 0 : index
      %17 = vector.load %arg6[%c0_14, %c0_15] : memref<16x64xbf16, #tpu.memory_space<vmem>>, vector<16x64xbf16>
      tpu.vector_store %arg6[%c0_14, %c0_15], %16 {strides = array<i32>} : memref<16x64xbf16, #tpu.memory_space<vmem>>, vector<16x64xbf16>,
    } else {
    }
    return
  }
  func.func @transform_0(%arg0: i32, %arg1: i32, %arg2: i32) -> (i32, i32) {
    %c0_i32 = arith.constant 0 : i32
    return %arg0, %arg2 : i32, i32
  }
  func.func @transform_1(%arg0: i32, %arg1: i32, %arg2: i32) -> (i32, i32) {
    %c0_i32 = arith.constant 0 : i32
    return %arg2, %arg1 : i32, i32
  }
  func.func @transform_2(%arg0: i32, %arg1: i32, %arg2: i32) -> (i32, i32) {
    %c0_i32 = arith.constant 0 : i32
    %c0_i32_0 = arith.constant 0 : i32
    return %c0_i32, %arg1 : i32, i32
  }
  func.func @transform_3(%arg0: i32, %arg1: i32, %arg2: i32) -> (i32, i32) {
    %c0_i32 = arith.constant 0 : i32
    return %arg0, %arg1 : i32, i32
  }
}

module attributes {stable_mosaic.version = 11 : i64} {
  func.func @_cross_attn_kernel(%arg0: i32, %arg1: memref<1x8x32xbf16, #tpu.memory_space<vmem>>, %arg2: memref<1x8x64xbf16, #tpu.memory_space<vmem>>, %arg3: memref<1x1x8xf32, #tpu.memory_space<vmem>>, %arg4: memref<1x8x32xbf16, #tpu.memory_space<vmem>>) attributes {dimension_semantics = [#tpu.dimension_semantics<parallel>], iteration_bounds = array<i64: 2>, scalar_prefetch = 0 : i64, scratch_operands = 0 : i64, tpu.core_type = #tpu.core_type<tc>, window_params = [{transform_indices = @transform_0, window_bounds = array<i64: 1, 8, 32>}, {transform_indices = @transform_1, window_bounds = array<i64: 1, 8, 64>}, {transform_indices = @transform_2, window_bounds = array<i64: 1, 1, 8>}, {transform_indices = @transform_3, window_bounds = array<i64: 1, 8, 32>}]} {
    %c0 = arith.constant 0 : index
    %c0_0 = arith.constant 0 : index
    %c0_1 = arith.constant 0 : index
    %0 = vector.load %arg1[%c0, %c0_0, %c0_1] : memref<1x8x32xbf16, #tpu.memory_space<vmem>>, vector<1x8x32xbf16>
    %1 = vector.shape_cast %0 : vector<1x8x32xbf16> to vector<8x32xbf16>
    %c0_2 = arith.constant 0 : index
    %c0_3 = arith.constant 0 : index
    %c0_4 = arith.constant 0 : index
    %2 = vector.load %arg2[%c0_2, %c0_3, %c0_4] : memref<1x8x64xbf16, #tpu.memory_space<vmem>>, vector<1x8x64xbf16>
    %3 = vector.shape_cast %2 : vector<1x8x64xbf16> to vector<8x64xbf16>
    %4 = vector.extract_strided_slice %3 {offsets = [0, 0], sizes = [8, 32], strides = [1, 1]} : vector<8x64xbf16> to vector<8x32xbf16>
    %5 = vector.extract_strided_slice %3 {offsets = [0, 32], sizes = [8, 32], strides = [1, 1]} : vector<8x64xbf16> to vector<8x32xbf16>
    %c0_5 = arith.constant 0 : index
    %c0_6 = arith.constant 0 : index
    %c0_7 = arith.constant 0 : index
    %6 = vector.load %arg3[%c0_5, %c0_6, %c0_7] : memref<1x1x8xf32, #tpu.memory_space<vmem>>, vector<1x1x8xf32>
    %7 = vector.shape_cast %6 : vector<1x1x8xf32> to vector<1x8xf32>
    %8 = vector.extract_strided_slice %1 {offsets = [0, 0], sizes = [8, 8], strides = [1, 1]} : vector<8x32xbf16> to vector<8x8xbf16>
    %9 = vector.extract_strided_slice %4 {offsets = [0, 0], sizes = [8, 8], strides = [1, 1]} : vector<8x32xbf16> to vector<8x8xbf16>
    %10 = vector.extract_strided_slice %5 {offsets = [0, 0], sizes = [8, 8], strides = [1, 1]} : vector<8x32xbf16> to vector<8x8xbf16>
    %cst = arith.constant dense<0.000000e+00> : vector<8x8xf32>
    %11 = tpu.matmul %8, %9, %cst {dimension_numbers = #tpu.dot_dimension_numbers<[1], [1], [0], [0], [0, 0, 1, 0], [], []>} : vector<8x8xbf16>, vector<8x8xbf16>, vector<8x8xf32> -> vector<8x8xf32>
    %cst_8 = arith.constant 0.353553385 : f32
    %12 = vector.broadcast %cst_8 : f32 to vector<8x8xf32>
    %13 = arith.mulf %11, %12 : vector<8x8xf32>
    %14 = vector.broadcast %7 : vector<1x8xf32> to vector<8x8xf32>
    %15 = arith.addf %13, %14 : vector<8x8xf32>
    %cst_9 = arith.constant dense<0xFF800000> : vector<8xf32>
    %16 = vector.multi_reduction <maximumf>, %15, %cst_9 [1] : vector<8x8xf32> to vector<8xf32>
    %17 = vector.shape_cast %16 : vector<8xf32> to vector<8x1xf32>
    %18 = vector.broadcast %17 : vector<8x1xf32> to vector<8x8xf32>
    %19 = arith.subf %15, %18 : vector<8x8xf32>
    %20 = math.exp %19 : vector<8x8xf32>
    %cst_10 = arith.constant dense<0.000000e+00> : vector<8xf32>
    %21 = vector.multi_reduction <add>, %20, %cst_10 [1] : vector<8x8xf32> to vector<8xf32>
    %22 = vector.shape_cast %21 : vector<8xf32> to vector<8x1xf32>
    %23 = tpu.reciprocal %22 {approx = true} : vector<8x1xf32> -> vector<8x1xf32>
    %24 = vector.broadcast %23 : vector<8x1xf32> to vector<8x8xf32>
    %25 = arith.mulf %20, %24 : vector<8x8xf32>
    %26 = arith.truncf %25 : vector<8x8xf32> to vector<8x8xbf16>
    %cst_11 = arith.constant dense<0.000000e+00> : vector<8x8xf32>
    %27 = tpu.matmul %26, %10, %cst_11 {dimension_numbers = #tpu.dot_dimension_numbers<[1], [0], [0], [1], [0, 0, 1, 1], [], []>} : vector<8x8xbf16>, vector<8x8xbf16>, vector<8x8xf32> -> vector<8x8xf32>
    %28 = arith.truncf %27 : vector<8x8xf32> to vector<8x8xbf16>
    %c0_12 = arith.constant 0 : index
    %c0_13 = arith.constant 0 : index
    %c0_14 = arith.constant 0 : index
    %29 = vector.load %arg4[%c0_12, %c0_13, %c0_14] : memref<1x8x32xbf16, #tpu.memory_space<vmem>>, vector<1x8x8xbf16>
    %30 = vector.shape_cast %29 : vector<1x8x8xbf16> to vector<8x8xbf16>
    %31 = vector.shape_cast %28 : vector<8x8xbf16> to vector<1x8x8xbf16>
    tpu.vector_store %arg4[%c0_12, %c0_13, %c0_14], %31 {strides = array<i32>} : memref<1x8x32xbf16, #tpu.memory_space<vmem>>, vector<1x8x8xbf16>,
    %32 = vector.extract_strided_slice %1 {offsets = [0, 8], sizes = [8, 8], strides = [1, 1]} : vector<8x32xbf16> to vector<8x8xbf16>
    %33 = vector.extract_strided_slice %4 {offsets = [0, 8], sizes = [8, 8], strides = [1, 1]} : vector<8x32xbf16> to vector<8x8xbf16>
    %34 = vector.extract_strided_slice %5 {offsets = [0, 8], sizes = [8, 8], strides = [1, 1]} : vector<8x32xbf16> to vector<8x8xbf16>
    %cst_15 = arith.constant dense<0.000000e+00> : vector<8x8xf32>
    %35 = tpu.matmul %32, %33, %cst_15 {dimension_numbers = #tpu.dot_dimension_numbers<[1], [1], [0], [0], [0, 0, 1, 0], [], []>} : vector<8x8xbf16>, vector<8x8xbf16>, vector<8x8xf32> -> vector<8x8xf32>
    %cst_16 = arith.constant 0.353553385 : f32
    %36 = vector.broadcast %cst_16 : f32 to vector<8x8xf32>
    %37 = arith.mulf %35, %36 : vector<8x8xf32>
    %38 = vector.broadcast %7 : vector<1x8xf32> to vector<8x8xf32>
    %39 = arith.addf %37, %38 : vector<8x8xf32>
    %cst_17 = arith.constant dense<0xFF800000> : vector<8xf32>
    %40 = vector.multi_reduction <maximumf>, %39, %cst_17 [1] : vector<8x8xf32> to vector<8xf32>
    %41 = vector.shape_cast %40 : vector<8xf32> to vector<8x1xf32>
    %42 = vector.broadcast %41 : vector<8x1xf32> to vector<8x8xf32>
    %43 = arith.subf %39, %42 : vector<8x8xf32>
    %44 = math.exp %43 : vector<8x8xf32>
    %cst_18 = arith.constant dense<0.000000e+00> : vector<8xf32>
    %45 = vector.multi_reduction <add>, %44, %cst_18 [1] : vector<8x8xf32> to vector<8xf32>
    %46 = vector.shape_cast %45 : vector<8xf32> to vector<8x1xf32>
    %47 = tpu.reciprocal %46 {approx = true} : vector<8x1xf32> -> vector<8x1xf32>
    %48 = vector.broadcast %47 : vector<8x1xf32> to vector<8x8xf32>
    %49 = arith.mulf %44, %48 : vector<8x8xf32>
    %50 = arith.truncf %49 : vector<8x8xf32> to vector<8x8xbf16>
    %cst_19 = arith.constant dense<0.000000e+00> : vector<8x8xf32>
    %51 = tpu.matmul %50, %34, %cst_19 {dimension_numbers = #tpu.dot_dimension_numbers<[1], [0], [0], [1], [0, 0, 1, 1], [], []>} : vector<8x8xbf16>, vector<8x8xbf16>, vector<8x8xf32> -> vector<8x8xf32>
    %52 = arith.truncf %51 : vector<8x8xf32> to vector<8x8xbf16>
    %c0_20 = arith.constant 0 : index
    %c0_21 = arith.constant 0 : index
    %c8 = arith.constant 8 : index
    %53 = vector.load %arg4[%c0_20, %c0_21, %c8] : memref<1x8x32xbf16, #tpu.memory_space<vmem>>, vector<1x8x8xbf16>
    %54 = vector.shape_cast %53 : vector<1x8x8xbf16> to vector<8x8xbf16>
    %55 = vector.shape_cast %52 : vector<8x8xbf16> to vector<1x8x8xbf16>
    tpu.vector_store %arg4[%c0_20, %c0_21, %c8], %55 {strides = array<i32>} : memref<1x8x32xbf16, #tpu.memory_space<vmem>>, vector<1x8x8xbf16>,
    %56 = vector.extract_strided_slice %1 {offsets = [0, 16], sizes = [8, 8], strides = [1, 1]} : vector<8x32xbf16> to vector<8x8xbf16>
    %57 = vector.extract_strided_slice %4 {offsets = [0, 16], sizes = [8, 8], strides = [1, 1]} : vector<8x32xbf16> to vector<8x8xbf16>
    %58 = vector.extract_strided_slice %5 {offsets = [0, 16], sizes = [8, 8], strides = [1, 1]} : vector<8x32xbf16> to vector<8x8xbf16>
    %cst_22 = arith.constant dense<0.000000e+00> : vector<8x8xf32>
    %59 = tpu.matmul %56, %57, %cst_22 {dimension_numbers = #tpu.dot_dimension_numbers<[1], [1], [0], [0], [0, 0, 1, 0], [], []>} : vector<8x8xbf16>, vector<8x8xbf16>, vector<8x8xf32> -> vector<8x8xf32>
    %cst_23 = arith.constant 0.353553385 : f32
    %60 = vector.broadcast %cst_23 : f32 to vector<8x8xf32>
    %61 = arith.mulf %59, %60 : vector<8x8xf32>
    %62 = vector.broadcast %7 : vector<1x8xf32> to vector<8x8xf32>
    %63 = arith.addf %61, %62 : vector<8x8xf32>
    %cst_24 = arith.constant dense<0xFF800000> : vector<8xf32>
    %64 = vector.multi_reduction <maximumf>, %63, %cst_24 [1] : vector<8x8xf32> to vector<8xf32>
    %65 = vector.shape_cast %64 : vector<8xf32> to vector<8x1xf32>
    %66 = vector.broadcast %65 : vector<8x1xf32> to vector<8x8xf32>
    %67 = arith.subf %63, %66 : vector<8x8xf32>
    %68 = math.exp %67 : vector<8x8xf32>
    %cst_25 = arith.constant dense<0.000000e+00> : vector<8xf32>
    %69 = vector.multi_reduction <add>, %68, %cst_25 [1] : vector<8x8xf32> to vector<8xf32>
    %70 = vector.shape_cast %69 : vector<8xf32> to vector<8x1xf32>
    %71 = tpu.reciprocal %70 {approx = true} : vector<8x1xf32> -> vector<8x1xf32>
    %72 = vector.broadcast %71 : vector<8x1xf32> to vector<8x8xf32>
    %73 = arith.mulf %68, %72 : vector<8x8xf32>
    %74 = arith.truncf %73 : vector<8x8xf32> to vector<8x8xbf16>
    %cst_26 = arith.constant dense<0.000000e+00> : vector<8x8xf32>
    %75 = tpu.matmul %74, %58, %cst_26 {dimension_numbers = #tpu.dot_dimension_numbers<[1], [0], [0], [1], [0, 0, 1, 1], [], []>} : vector<8x8xbf16>, vector<8x8xbf16>, vector<8x8xf32> -> vector<8x8xf32>
    %76 = arith.truncf %75 : vector<8x8xf32> to vector<8x8xbf16>
    %c0_27 = arith.constant 0 : index
    %c0_28 = arith.constant 0 : index
    %c16 = arith.constant 16 : index
    %77 = vector.load %arg4[%c0_27, %c0_28, %c16] : memref<1x8x32xbf16, #tpu.memory_space<vmem>>, vector<1x8x8xbf16>
    %78 = vector.shape_cast %77 : vector<1x8x8xbf16> to vector<8x8xbf16>
    %79 = vector.shape_cast %76 : vector<8x8xbf16> to vector<1x8x8xbf16>
    tpu.vector_store %arg4[%c0_27, %c0_28, %c16], %79 {strides = array<i32>} : memref<1x8x32xbf16, #tpu.memory_space<vmem>>, vector<1x8x8xbf16>,
    %80 = vector.extract_strided_slice %1 {offsets = [0, 24], sizes = [8, 8], strides = [1, 1]} : vector<8x32xbf16> to vector<8x8xbf16>
    %81 = vector.extract_strided_slice %4 {offsets = [0, 24], sizes = [8, 8], strides = [1, 1]} : vector<8x32xbf16> to vector<8x8xbf16>
    %82 = vector.extract_strided_slice %5 {offsets = [0, 24], sizes = [8, 8], strides = [1, 1]} : vector<8x32xbf16> to vector<8x8xbf16>
    %cst_29 = arith.constant dense<0.000000e+00> : vector<8x8xf32>
    %83 = tpu.matmul %80, %81, %cst_29 {dimension_numbers = #tpu.dot_dimension_numbers<[1], [1], [0], [0], [0, 0, 1, 0], [], []>} : vector<8x8xbf16>, vector<8x8xbf16>, vector<8x8xf32> -> vector<8x8xf32>
    %cst_30 = arith.constant 0.353553385 : f32
    %84 = vector.broadcast %cst_30 : f32 to vector<8x8xf32>
    %85 = arith.mulf %83, %84 : vector<8x8xf32>
    %86 = vector.broadcast %7 : vector<1x8xf32> to vector<8x8xf32>
    %87 = arith.addf %85, %86 : vector<8x8xf32>
    %cst_31 = arith.constant dense<0xFF800000> : vector<8xf32>
    %88 = vector.multi_reduction <maximumf>, %87, %cst_31 [1] : vector<8x8xf32> to vector<8xf32>
    %89 = vector.shape_cast %88 : vector<8xf32> to vector<8x1xf32>
    %90 = vector.broadcast %89 : vector<8x1xf32> to vector<8x8xf32>
    %91 = arith.subf %87, %90 : vector<8x8xf32>
    %92 = math.exp %91 : vector<8x8xf32>
    %cst_32 = arith.constant dense<0.000000e+00> : vector<8xf32>
    %93 = vector.multi_reduction <add>, %92, %cst_32 [1] : vector<8x8xf32> to vector<8xf32>
    %94 = vector.shape_cast %93 : vector<8xf32> to vector<8x1xf32>
    %95 = tpu.reciprocal %94 {approx = true} : vector<8x1xf32> -> vector<8x1xf32>
    %96 = vector.broadcast %95 : vector<8x1xf32> to vector<8x8xf32>
    %97 = arith.mulf %92, %96 : vector<8x8xf32>
    %98 = arith.truncf %97 : vector<8x8xf32> to vector<8x8xbf16>
    %cst_33 = arith.constant dense<0.000000e+00> : vector<8x8xf32>
    %99 = tpu.matmul %98, %82, %cst_33 {dimension_numbers = #tpu.dot_dimension_numbers<[1], [0], [0], [1], [0, 0, 1, 1], [], []>} : vector<8x8xbf16>, vector<8x8xbf16>, vector<8x8xf32> -> vector<8x8xf32>
    %100 = arith.truncf %99 : vector<8x8xf32> to vector<8x8xbf16>
    %c0_34 = arith.constant 0 : index
    %c0_35 = arith.constant 0 : index
    %c24 = arith.constant 24 : index
    %101 = vector.load %arg4[%c0_34, %c0_35, %c24] : memref<1x8x32xbf16, #tpu.memory_space<vmem>>, vector<1x8x8xbf16>
    %102 = vector.shape_cast %101 : vector<1x8x8xbf16> to vector<8x8xbf16>
    %103 = vector.shape_cast %100 : vector<8x8xbf16> to vector<1x8x8xbf16>
    tpu.vector_store %arg4[%c0_34, %c0_35, %c24], %103 {strides = array<i32>} : memref<1x8x32xbf16, #tpu.memory_space<vmem>>, vector<1x8x8xbf16>,
    return
  }
  func.func @transform_0(%arg0: i32) -> (i32, i32, i32) {
    %c0_i32 = arith.constant 0 : i32
    %c0_i32_0 = arith.constant 0 : i32
    %c0_i32_1 = arith.constant 0 : i32
    return %arg0, %c0_i32, %c0_i32_0 : i32, i32, i32
  }
  func.func @transform_1(%arg0: i32) -> (i32, i32, i32) {
    %c0_i32 = arith.constant 0 : i32
    %c0_i32_0 = arith.constant 0 : i32
    %c0_i32_1 = arith.constant 0 : i32
    return %arg0, %c0_i32, %c0_i32_0 : i32, i32, i32
  }
  func.func @transform_2(%arg0: i32) -> (i32, i32, i32) {
    %c0_i32 = arith.constant 0 : i32
    %c0_i32_0 = arith.constant 0 : i32
    %c0_i32_1 = arith.constant 0 : i32
    return %arg0, %c0_i32, %c0_i32_0 : i32, i32, i32
  }
  func.func @transform_3(%arg0: i32) -> (i32, i32, i32) {
    %c0_i32 = arith.constant 0 : i32
    %c0_i32_0 = arith.constant 0 : i32
    %c0_i32_1 = arith.constant 0 : i32
    return %arg0, %c0_i32, %c0_i32_0 : i32, i32, i32
  }
}

module attributes {stable_mosaic.version = 11 : i64} {
  func.func @_linear_kernel(%arg0: i32, %arg1: i32, %arg2: i32, %arg3: memref<16x32xbf16, #tpu.memory_space<vmem>>, %arg4: memref<32x16xbf16, #tpu.memory_space<vmem>>, %arg5: memref<1x16xf32, #tpu.memory_space<vmem>>, %arg6: memref<16x16xf32, #tpu.memory_space<vmem>>, %arg7: memref<16x16xf32, #tpu.memory_space<vmem>>) attributes {dimension_semantics = [#tpu.dimension_semantics<parallel>, #tpu.dimension_semantics<parallel>, #tpu.dimension_semantics<arbitrary>], iteration_bounds = array<i64: 1, 1, 1>, scalar_prefetch = 0 : i64, scratch_operands = 1 : i64, tpu.core_type = #tpu.core_type<tc>, window_params = [{transform_indices = @transform_0, window_bounds = array<i64: 16, 32>}, {transform_indices = @transform_1, window_bounds = array<i64: 32, 16>}, {transform_indices = @transform_2, window_bounds = array<i64: 1, 16>}, {transform_indices = @transform_3, window_bounds = array<i64: 16, 16>}]} {
    %c0_i32 = arith.constant 0 : i32
    %0 = arith.cmpi eq, %arg2, %c0_i32 : i32
    %1 = arith.extui %0 : i1 to i32
    %c0_i32_0 = arith.constant 0 : i32
    %2 = arith.cmpi ne, %1, %c0_i32_0 : i32
    scf.if %2 {
      %cst_10 = arith.constant 0.000000e+00 : f32
      %12 = vector.broadcast %cst_10 : f32 to vector<16x16xf32>
      %c0_11 = arith.constant 0 : index
      %c0_12 = arith.constant 0 : index
      %13 = vector.load %arg7[%c0_11, %c0_12] : memref<16x16xf32, #tpu.memory_space<vmem>>, vector<16x16xf32>
      tpu.vector_store %arg7[%c0_11, %c0_12], %12 {strides = array<i32>} : memref<16x16xf32, #tpu.memory_space<vmem>>, vector<16x16xf32>,
    } else {
    }
    %c0 = arith.constant 0 : index
    %c0_1 = arith.constant 0 : index
    %3 = vector.load %arg7[%c0, %c0_1] : memref<16x16xf32, #tpu.memory_space<vmem>>, vector<16x16xf32>
    %c0_2 = arith.constant 0 : index
    %c0_3 = arith.constant 0 : index
    %4 = vector.load %arg3[%c0_2, %c0_3] : memref<16x32xbf16, #tpu.memory_space<vmem>>, vector<16x32xbf16>
    %c0_4 = arith.constant 0 : index
    %c0_5 = arith.constant 0 : index
    %5 = vector.load %arg4[%c0_4, %c0_5] : memref<32x16xbf16, #tpu.memory_space<vmem>>, vector<32x16xbf16>
    %cst = arith.constant dense<0.000000e+00> : vector<16x16xf32>
    %6 = tpu.matmul %4, %5, %cst {dimension_numbers = #tpu.dot_dimension_numbers<[1], [0], [0], [1], [0, 0, 1, 1], [], []>} : vector<16x32xbf16>, vector<32x16xbf16>, vector<16x16xf32> -> vector<16x16xf32>
    %7 = arith.addf %3, %6 : vector<16x16xf32>
    %c0_6 = arith.constant 0 : index
    %c0_7 = arith.constant 0 : index
    %8 = vector.load %arg7[%c0_6, %c0_7] : memref<16x16xf32, #tpu.memory_space<vmem>>, vector<16x16xf32>
    tpu.vector_store %arg7[%c0_6, %c0_7], %7 {strides = array<i32>} : memref<16x16xf32, #tpu.memory_space<vmem>>, vector<16x16xf32>,
    %c0_i32_8 = arith.constant 0 : i32
    %9 = arith.cmpi eq, %arg2, %c0_i32_8 : i32
    %10 = arith.extui %9 : i1 to i32
    %c0_i32_9 = arith.constant 0 : i32
    %11 = arith.cmpi ne, %10, %c0_i32_9 : i32
    scf.if %11 {
      %c0_10 = arith.constant 0 : index
      %c0_11 = arith.constant 0 : index
      %12 = vector.load %arg7[%c0_10, %c0_11] : memref<16x16xf32, #tpu.memory_space<vmem>>, vector<16x16xf32>
      %c0_12 = arith.constant 0 : index
      %c0_13 = arith.constant 0 : index
      %13 = vector.load %arg5[%c0_12, %c0_13] : memref<1x16xf32, #tpu.memory_space<vmem>>, vector<1x16xf32>
      %14 = vector.broadcast %13 : vector<1x16xf32> to vector<16x16xf32>
      %15 = arith.addf %12, %14 : vector<16x16xf32>
      %c0_14 = arith.constant 0 : index
      %c0_15 = arith.constant 0 : index
      %16 = vector.load %arg6[%c0_14, %c0_15] : memref<16x16xf32, #tpu.memory_space<vmem>>, vector<16x16xf32>
      tpu.vector_store %arg6[%c0_14, %c0_15], %15 {strides = array<i32>} : memref<16x16xf32, #tpu.memory_space<vmem>>, vector<16x16xf32>,
    } else {
    }
    return
  }
  func.func @transform_0(%arg0: i32, %arg1: i32, %arg2: i32) -> (i32, i32) {
    %c0_i32 = arith.constant 0 : i32
    return %arg0, %arg2 : i32, i32
  }
  func.func @transform_1(%arg0: i32, %arg1: i32, %arg2: i32) -> (i32, i32) {
    %c0_i32 = arith.constant 0 : i32
    return %arg2, %arg1 : i32, i32
  }
  func.func @transform_2(%arg0: i32, %arg1: i32, %arg2: i32) -> (i32, i32) {
    %c0_i32 = arith.constant 0 : i32
    %c0_i32_0 = arith.constant 0 : i32
    return %c0_i32, %arg1 : i32, i32
  }
  func.func @transform_3(%arg0: i32, %arg1: i32, %arg2: i32) -> (i32, i32) {
    %c0_i32 = arith.constant 0 : i32
    return %arg0, %arg1 : i32, i32
  }
}

</mosaic_0001>

<llo_original>
// kernel: _lambda_.16
$region0: #{_lambda_.16}
  #allocation0 [shape = 'u32[]', space=smem, size = 0x4, offset = 0x4, fixed_abs, tag = 'smem constant byte address 0x4 - core index']
  #allocation1 [shape = 'u32[144,128]{1,0:T(1,128)}', space=vmem, size = 0x12000, scoped, tag = 'internal scratch']
  %s0 = inlined_call_operand.vmem [shape: bf16[16,32], index: 0, kind: input, shape index: {}]
  %s1 = inlined_call_operand.vmem [shape: bf16[32,64], index: 1, kind: input, shape index: {}]
  %s2 = inlined_call_operand.vmem [shape: f32[1,64], index: 2, kind: input, shape index: {}]
  %s3 = inlined_call_operand.vmem [shape: bf16[64,32], index: 3, kind: input, shape index: {}]
  %s4 = inlined_call_operand.vmem [shape: f32[1,32], index: 4, kind: input, shape index: {}, may-alias: {4,6}]
  %s5 = inlined_call_operand.vmem [shape: f32[1,32], index: 5, kind: input, shape index: {}]
  %s6 = inlined_call_operand.vmem [shape: f32[1,32], index: 6, kind: input, shape index: {}, may-alias: {4,6}]
  %s7 = inlined_call_operand.vmem [shape: bf16[16,32], index: 7, kind: output, shape index: {}]
  %s8 = sld [smem:[#allocation0]]
  $region38: #{_lambda_.16} parent=0
    _
  %s10 = ssub.s32 1, %s8
  %s11 = scalar_select 0, %s10, %s8
  // Predicated region
  $region2: #{_lambda_.16} parent=0 // pred_check
    _
  $region3: #{_lambda_.16} parent=0 // pred_check_branch
    %13 = sbr.rel (0) target = $region5
  $region4: #{_lambda_.16} parent=0 // pred_region
    _
  $region5: #{_lambda_.16} parent=0 // pred_fallthru
    _
  // Predicated region
  $region6: #{_lambda_.16} parent=0 // pred_check
    _
  $region7: #{_lambda_.16} parent=0 // pred_check_branch
    %15 = sbr.rel (0) target = $region9
  $region8: #{_lambda_.16} parent=0 // pred_region
    _
  $region9: #{_lambda_.16} parent=0 // pred_fallthru
    _
  // Predicated region
  $region10: #{_lambda_.16} parent=0 // pred_check
    _
  $region11: #{_lambda_.16} parent=0 // pred_check_branch
    %17 = sbr.rel (0) target = $region13
  $region12: #{_lambda_.16} parent=0 // pred_region
    _
  $region13: #{_lambda_.16} parent=0 // pred_fallthru
    _
  // Predicated region
  $region14: #{_lambda_.16} parent=0 // pred_check
    _
  $region15: #{_lambda_.16} parent=0 // pred_check_branch
    %19 = sbr.rel (0) target = $region17
  $region16: #{_lambda_.16} parent=0 // pred_region
    _
  $region17: #{_lambda_.16} parent=0 // pred_fallthru
    _
  // Predicated region
  $region18: #{_lambda_.16} parent=0 // pred_check
    _
  $region19: #{_lambda_.16} parent=0 // pred_check_branch
    %21 = sbr.rel (0) target = $region21
  $region20: #{_lambda_.16} parent=0 // pred_region
    _
  $region21: #{_lambda_.16} parent=0 // pred_fallthru
    _
  // Predicated region
  $region22: #{_lambda_.16} parent=0 // pred_check
    _
  $region23: #{_lambda_.16} parent=0 // pred_check_branch
    %23 = sbr.rel (0) target = $region25
  $region24: #{_lambda_.16} parent=0 // pred_region
    _
  $region25: #{_lambda_.16} parent=0 // pred_fallthru
    _
  // Predicated region
  $region26: #{_lambda_.16} parent=0 // pred_check
    _
  $region27: #{_lambda_.16} parent=0 // pred_check_branch
    %25 = sbr.rel (0) target = $region29
  $region28: #{_lambda_.16} parent=0 // pred_region
    _
  $region29: #{_lambda_.16} parent=0 // pred_fallthru
    _
  %v27 = vld [vmem:[%s0] sm:$0xf]
  %v28 = vld [vmem:[%s0 + $0x4] sm:$0xf]
  %v29 = vld [vmem:[%s1] sm:$0xf]
  %v30 = vld [vmem:[%s1 + $0x4] sm:$0xf]
  %v31 = vld [vmem:[%s1 + $0x8] sm:$0xf]
  %v32 = vld [vmem:[%s1 + $0xc] sm:$0xf]
  %v33 = vld [vmem:[%s2] sm:$0x1]
  %v35 = vlaneseq
  %v36 = vshrl.u32 %v35, 7
  %v37 = vsub.s32 0, %v36
  %v38 = vrot.slane %v33, %v37
  %v42 = vunpack.c.l.b16 %v27
  %v43 = vunpack.c.l.b16 %v28
  %v44 = vpack.c.b16 %v43, %v42
  %v49 = vunpack.c.l.b16 %v29
  %v50 = vunpack.c.l.b16 %v30
  %v51 = vunpack.c.l.b16 %v31
  %v52 = vunpack.c.l.b16 %v32
  %v53 = vpack.c.b16 %v50, %v49
  %v54 = vpack.c.b16 %v52, %v51
  %vm57 = vcmask 261120
  %v59 = vsel %vm57, %v44, 0
  %61 = vmatprep.subr.bf16.mxu0 0
  %62 = vmatpush1.bf16.msra.mxu0 %v53
  %63 = vmatprep.subr.bf16.mxu0 0
  %64 = vmatpush1.bf16.msra.mxu0 %v54
  %65 = vmatprep.subr.bf16.mxu0 0
  %66 = vmatpush1.bf16.msra.mxu0 0
  %67 = vmatprep.subr.bf16.mxu0 0
  %68 = vmatpush1.bf16.msra.mxu0 0
  %69 = vmatprep.subr.bf16.mxu0 0
  %70 = vmatpush1.bf16.msra.mxu0 0
  %71 = vmatprep.subr.bf16.mxu0 0
  %72 = vmatpush1.bf16.msra.mxu0 0
  %73 = vmatprep.subr.bf16.mxu0 0
  %74 = vmatpush1.bf16.msra.mxu0 0
  %75 = vmatprep.subr.bf16.mxu0 0
  %76 = vmatpush1.bf16.msra.mxu0 0
  %77 = vmatprep.subr.bf16.mxu0 0
  %78 = vmatpush1.bf16.msra.mxu0 0
  %79 = vmatprep.subr.bf16.mxu0 0
  %80 = vmatpush1.bf16.msra.mxu0 0
  %81 = vmatprep.subr.bf16.mxu0 0
  %82 = vmatpush1.bf16.msra.mxu0 0
  %83 = vmatprep.subr.bf16.mxu0 0
  %84 = vmatpush1.bf16.msra.mxu0 0
  %85 = vmatprep.subr.bf16.mxu0 0
  %86 = vmatpush1.bf16.msra.mxu0 0
  %87 = vmatprep.subr.bf16.mxu0 0
  %88 = vmatpush1.bf16.msra.mxu0 0
  %89 = vmatprep.subr.bf16.mxu0 0
  %90 = vmatpush1.bf16.msra.mxu0 0
  %91 = vmatprep.subr.bf16.mxu0 0
  %92 = vmatpush1.bf16.msra.mxu0 0
  %93 = vmatprep.mubr.bf16.mxu0 0
  %94 = vmatmul.mubr.bf16.gmra.mrb[0].mxu0 %v59
  %v95 = vpop.f32.mrb[0].mxu0
  %v96 = vadd.f32 %v38, %v95
  %v97 = vpop.f32.mrb[0].mxu0
  %v98 = vpop.f32.mrb[0].mxu0
  %v99 = vadd.f32 %v38, %v98
  %v100 = vpop.f32.mrb[0].mxu0
  %101 = vdwg.mxu0
  %v102 = vmax.f32 %v96, 0.0
  %v103 = vmax.f32 %v99, 0.0
  %v104 = vpack.c.bf16 %v103, %v102
  %v105 = vld [vmem:[%s3] sm:$0xf]
  %v106 = vld [vmem:[%s3 + $0x4] sm:$0xf]
  %v107 = vld [vmem:[%s3 + $0x8] sm:$0xf]
  %v108 = vld [vmem:[%s3 + $0xc] sm:$0xf]
  %v109 = vld [vmem:[%s3 + $0x10] sm:$0xf]
  %v110 = vld [vmem:[%s3 + $0x14] sm:$0xf]
  %v111 = vld [vmem:[%s3 + $0x18] sm:$0xf]
  %v112 = vld [vmem:[%s3 + $0x1c] sm:$0xf]
  %v113 = vld [vmem:[%s4] sm:$0x1]
  %v115 = vlaneseq
  %v116 = vshrl.u32 %v115, 7
  %v117 = vsub.s32 0, %v116
  %v118 = vrot.slane %v113, %v117
  %v128 = vunpack.c.l.b16 %v105
  %v129 = vunpack.c.l.b16 %v106
  %v130 = vunpack.c.l.b16 %v107
  %v131 = vunpack.c.l.b16 %v108
  %v132 = vunpack.c.l.b16 %v109
  %v133 = vunpack.c.l.b16 %v110
  %v134 = vunpack.c.l.b16 %v111
  %v135 = vunpack.c.l.b16 %v112
  %v136 = vpack.c.b16 %v129, %v128
  %v137 = vpack.c.b16 %v131, %v130
  %v138 = vpack.c.b16 %v133, %v132
  %v139 = vpack.c.b16 %v135, %v134
  %vm144 = vcmask 523264
  %v146 = vsel %vm144, %v104, 0
  %148 = vmatprep.subr.bf16.mxu0 0
  %149 = vmatpush1.bf16.msra.mxu0 %v136
  %150 = vmatprep.subr.bf16.mxu0 0
  %151 = vmatpush1.bf16.msra.mxu0 %v137
  %152 = vmatprep.subr.bf16.mxu0 0
  %153 = vmatpush1.bf16.msra.mxu0 %v138
  %154 = vmatprep.subr.bf16.mxu0 0
  %155 = vmatpush1.bf16.msra.mxu0 %v139
  %156 = vmatprep.subr.bf16.mxu0 0
  %157 = vmatpush1.bf16.msra.mxu0 0
  %158 = vmatprep.subr.bf16.mxu0 0
  %159 = vmatpush1.bf16.msra.mxu0 0
  %160 = vmatprep.subr.bf16.mxu0 0
  %161 = vmatpush1.bf16.msra.mxu0 0
  %162 = vmatprep.subr.bf16.mxu0 0
  %163 = vmatpush1.bf16.msra.mxu0 0
  %164 = vmatprep.subr.bf16.mxu0 0
  %165 = vmatpush1.bf16.msra.mxu0 0
  %166 = vmatprep.subr.bf16.mxu0 0
  %167 = vmatpush1.bf16.msra.mxu0 0
  %168 = vmatprep.subr.bf16.mxu0 0
  %169 = vmatpush1.bf16.msra.mxu0 0
  %170 = vmatprep.subr.bf16.mxu0 0
  %171 = vmatpush1.bf16.msra.mxu0 0
  %172 = vmatprep.subr.bf16.mxu0 0
  %173 = vmatpush1.bf16.msra.mxu0 0
  %174 = vmatprep.subr.bf16.mxu0 0
  %175 = vmatpush1.bf16.msra.mxu0 0
  %176 = vmatprep.subr.bf16.mxu0 0
  %177 = vmatpush1.bf16.msra.mxu0 0
  %178 = vmatprep.subr.bf16.mxu0 0
  %179 = vmatpush1.bf16.msra.mxu0 0
  %180 = vmatprep.mubr.bf16.mxu0 0
  %181 = vmatmul.mubr.bf16.gmra.mrb[0].mxu0 %v146
  %v182 = vpop.f32.mrb[0].mxu0
  %v183 = vadd.f32 %v118, %v182
  %v184 = vpop.f32.mrb[0].mxu0
  %v185 = vpop.f32.mrb[0].mxu0
  %v186 = vadd.f32 %v118, %v185
  %v187 = vpop.f32.mrb[0].mxu0
  %188 = vdwg.mxu0
  %v189 = vunpack.c.l.bf16 %v27
  %v190 = vunpack.c.l.bf16 %v28
  %v191 = vadd.f32 %v183, %v189
  %v192 = vadd.f32 %v186, %v190
  %v193 = vsel %vm57, %v191, 0.0
  %194 = vadd.xlane.f32.xlu0 %v193
  %v195 = vpop.xlane.xlu0 %194
  %v196 = vsel %vm57, %v192, 0.0
  %197 = vadd.xlane.f32.xlu0 %v196
  %v198 = vpop.xlane.xlu0 %197
  %v199 = vrcp.pop 32.0
  %v200 = vmul.f32 %v195, %v199
  %v201 = vmul.f32 %v198, %v199
  %v202 = vsub.f32 %v191, %v200
  %v203 = vsub.f32 %v192, %v201
  %v204 = vmul.f32 %v202, %v202
  %v205 = vmul.f32 %v203, %v203
  %v206 = vsel %vm57, %v204, 0.0
  %207 = vadd.xlane.f32.xlu0 %v206
  %v208 = vpop.xlane.xlu0 %207
  %v209 = vsel %vm57, %v205, 0.0
  %210 = vadd.xlane.f32.xlu0 %v209
  %v211 = vpop.xlane.xlu0 %210
  %v212 = vmul.f32 %v208, %v199
  %v213 = vmul.f32 %v211, %v199
  %v214 = vadd.f32 %v212, 1e-05
  %v215 = vadd.f32 %v213, 1e-05
  %v216 = vrsqrt.pop %v214
  %v217 = vrsqrt.pop %v215
  %v218 = vmul.f32 %v202, %v216
  %v219 = vmul.f32 %v203, %v217
  %v220 = vld [vmem:[%s5] sm:$0x1]
  %v222 = vlaneseq
  %v223 = vshrl.u32 %v222, 7
  %v224 = vsub.s32 0, %v223
  %v225 = vrot.slane %v220, %v224
  %v227 = vmul.f32 %v218, %v225
  %v228 = vmul.f32 %v219, %v225
  %v229 = vld [vmem:[%s6] sm:$0x1]
  %v231 = vlaneseq
  %v232 = vshrl.u32 %v231, 7
  %v233 = vsub.s32 0, %v232
  %v234 = vrot.slane %v229, %v233
  %v236 = vadd.f32 %v227, %v234
  %v237 = vadd.f32 %v228, %v234
  %v238 = vpack.c.bf16 %v237, %v236
  %v240 = vunpack.c.l.b16 %v238
  %v241 = vunpack.c.h.b16 %v238
  %v242 = vpack.c.b16 %v240, %v240
  %v243 = vpack.c.b16 %v241, %v241
  %vm246 = vcmask 257024
  %247 = vst.msk [vmem:[%s7] sm:$0xf] %vm246, %v242
  %248 = vst.msk [vmem:[%s7 + $0x4] sm:$0xf] %vm246, %v243
  // Predicated region
  $region30: #{_lambda_.16} parent=0 // pred_check
    _
  $region31: #{_lambda_.16} parent=0 // pred_check_branch
    %250 = sbr.rel (0) target = $region33
  $region32: #{_lambda_.16} parent=0 // pred_region
    _
  $region33: #{_lambda_.16} parent=0 // pred_fallthru
    _
  // Predicated region
  $region34: #{_lambda_.16} parent=0 // pred_check
    _
  $region35: #{_lambda_.16} parent=0 // pred_check_branch
    %252 = sbr.rel (0) target = $region37
  $region36: #{_lambda_.16} parent=0 // pred_region
    _
  $region37: #{_lambda_.16} parent=0 // pred_fallthru
    _

// kernel: _lambda_.15
$region0: #{_lambda_.15}
  #allocation0 [shape = 'u32[]', space=smem, size = 0x4, offset = 0x4, fixed_abs, tag = 'smem constant byte address 0x4 - core index']
  #allocation1 [shape = 'u32[144,128]{1,0:T(1,128)}', space=vmem, size = 0x12000, scoped, tag = 'internal scratch']
  #allocation2 [shape = 'f32[16,32]{1,0:T(8,128)}', space=vmem, size = 0x2000, scoped, tag = 'scratch operand']
  %s0 = inlined_call_operand.vmem [shape: bf16[16,32], index: 0, kind: input, shape index: {}]
  %s1 = inlined_call_operand.vmem [shape: bf16[32,32], index: 1, kind: input, shape index: {}]
  %s2 = inlined_call_operand.vmem [shape: f32[1,32], index: 2, kind: input, shape index: {}, may-alias: {2,5}]
  %s3 = inlined_call_operand.vmem [shape: bf16[16,32], index: 3, kind: input, shape index: {}]
  %s4 = inlined_call_operand.vmem [shape: f32[1,32], index: 4, kind: input, shape index: {}]
  %s5 = inlined_call_operand.vmem [shape: f32[1,32], index: 5, kind: input, shape index: {}, may-alias: {2,5}]
  %s6 = inlined_call_operand.vmem [shape: bf16[16,32], index: 6, kind: output, shape index: {}]
  %s7 = sld [smem:[#allocation0]]
  $region42: #{_lambda_.15} parent=0
    _
  %s9 = ssub.s32 1, %s7
  %s10 = scalar_select 0, %s9, %s7
  // Predicated region
  $region2: #{_lambda_.15} parent=0 // pred_check
    _
  $region3: #{_lambda_.15} parent=0 // pred_check_branch
    %12 = sbr.rel (0) target = $region5
  $region4: #{_lambda_.15} parent=0 // pred_region
    _
  $region5: #{_lambda_.15} parent=0 // pred_fallthru
    _
  // Predicated region
  $region6: #{_lambda_.15} parent=0 // pred_check
    _
  $region7: #{_lambda_.15} parent=0 // pred_check_branch
    %14 = sbr.rel (0) target = $region9
  $region8: #{_lambda_.15} parent=0 // pred_region
    _
  $region9: #{_lambda_.15} parent=0 // pred_fallthru
    _
  // Predicated region
  $region10: #{_lambda_.15} parent=0 // pred_check
    _
  $region11: #{_lambda_.15} parent=0 // pred_check_branch
    %16 = sbr.rel (0) target = $region13
  $region12: #{_lambda_.15} parent=0 // pred_region
    _
  $region13: #{_lambda_.15} parent=0 // pred_fallthru
    _
  // Predicated region
  $region14: #{_lambda_.15} parent=0 // pred_check
    _
  $region15: #{_lambda_.15} parent=0 // pred_check_branch
    %18 = sbr.rel (0) target = $region17
  $region16: #{_lambda_.15} parent=0 // pred_region
    _
  $region17: #{_lambda_.15} parent=0 // pred_fallthru
    _
  // Predicated region
  $region18: #{_lambda_.15} parent=0 // pred_check
    _
  $region19: #{_lambda_.15} parent=0 // pred_check_branch
    %20 = sbr.rel (0) target = $region21
  $region20: #{_lambda_.15} parent=0 // pred_region
    _
  $region21: #{_lambda_.15} parent=0 // pred_fallthru
    _
  // Predicated region
  $region22: #{_lambda_.15} parent=0 // pred_check
    _
  $region23: #{_lambda_.15} parent=0 // pred_check_branch
    %22 = sbr.rel (0) target = $region25
  $region24: #{_lambda_.15} parent=0 // pred_region
    _
  $region25: #{_lambda_.15} parent=0 // pred_fallthru
    _
  %p24 = scmp.eq.s32.totalorder 0, 0
  // Predicated region
  $region26: #{_lambda_.15} parent=0 // pred_check
    %p25 = pneg %p24
  $region27: #{_lambda_.15} parent=0 // pred_check_branch
    %27 = sbr.rel (%p25) target = $region29
  $region28: #{_lambda_.15} parent=0 // pred_region
    %vm28 = vcmask 261120
    %29 = vst.msk [vmem:[#allocation2] sm:$0xff] %vm28, 0.0
    %30 = vst.msk [vmem:[#allocation2 + $0x8] sm:$0xff] %vm28, 0.0
  $region29: #{_lambda_.15} parent=0 // pred_fallthru
    _
  %v31 = vld [vmem:[#allocation2] sm:$0xff]
  %v32 = vld [vmem:[#allocation2 + $0x8] sm:$0xff]
  %v33 = vld [vmem:[%s0] sm:$0xf]
  %v34 = vld [vmem:[%s0 + $0x4] sm:$0xf]
  %v35 = vld [vmem:[%s1] sm:$0xf]
  %v36 = vld [vmem:[%s1 + $0x4] sm:$0xf]
  %v37 = vld [vmem:[%s1 + $0x8] sm:$0xf]
  %v38 = vld [vmem:[%s1 + $0xc] sm:$0xf]
  %v41 = vunpack.c.l.b16 %v33
  %v42 = vunpack.c.l.b16 %v34
  %v43 = vpack.c.b16 %v42, %v41
  %v48 = vunpack.c.l.b16 %v35
  %v49 = vunpack.c.l.b16 %v36
  %v50 = vunpack.c.l.b16 %v37
  %v51 = vunpack.c.l.b16 %v38
  %v52 = vpack.c.b16 %v49, %v48
  %v53 = vpack.c.b16 %v51, %v50
  %vm56 = vcmask 261120
  %v58 = vsel %vm56, %v43, 0
  %60 = vmatprep.subr.bf16.mxu0 0
  %61 = vmatpush1.bf16.msra.mxu0 %v52
  %62 = vmatprep.subr.bf16.mxu0 0
  %63 = vmatpush1.bf16.msra.mxu0 %v53
  %64 = vmatprep.subr.bf16.mxu0 0
  %65 = vmatpush1.bf16.msra.mxu0 0
  %66 = vmatprep.subr.bf16.mxu0 0
  %67 = vmatpush1.bf16.msra.mxu0 0
  %68 = vmatprep.subr.bf16.mxu0 0
  %69 = vmatpush1.bf16.msra.mxu0 0
  %70 = vmatprep.subr.bf16.mxu0 0
  %71 = vmatpush1.bf16.msra.mxu0 0
  %72 = vmatprep.subr.bf16.mxu0 0
  %73 = vmatpush1.bf16.msra.mxu0 0
  %74 = vmatprep.subr.bf16.mxu0 0
  %75 = vmatpush1.bf16.msra.mxu0 0
  %76 = vmatprep.subr.bf16.mxu0 0
  %77 = vmatpush1.bf16.msra.mxu0 0
  %78 = vmatprep.subr.bf16.mxu0 0
  %79 = vmatpush1.bf16.msra.mxu0 0
  %80 = vmatprep.subr.bf16.mxu0 0
  %81 = vmatpush1.bf16.msra.mxu0 0
  %82 = vmatprep.subr.bf16.mxu0 0
  %83 = vmatpush1.bf16.msra.mxu0 0
  %84 = vmatprep.subr.bf16.mxu0 0
  %85 = vmatpush1.bf16.msra.mxu0 0
  %86 = vmatprep.subr.bf16.mxu0 0
  %87 = vmatpush1.bf16.msra.mxu0 0
  %88 = vmatprep.subr.bf16.mxu0 0
  %89 = vmatpush1.bf16.msra.mxu0 0
  %90 = vmatprep.subr.bf16.mxu0 0
  %91 = vmatpush1.bf16.msra.mxu0 0
  %92 = vmatprep.mubr.bf16.mxu0 0
  %93 = vmatmul.mubr.bf16.gmra.mrb[0].mxu0 %v58
  %v94 = vpop.f32.mrb[0].mxu0
  %v95 = vadd.f32 0.0, %v94
  %v96 = vpop.f32.mrb[0].mxu0
  %v97 = vpop.f32.mrb[0].mxu0
  %v98 = vadd.f32 0.0, %v97
  %v99 = vpop.f32.mrb[0].mxu0
  %100 = vdwg.mxu0
  %v101 = vadd.f32 %v31, %v95
  %v102 = vadd.f32 %v32, %v98
  %103 = vst.msk [vmem:[#allocation2] sm:$0xff] %vm56, %v101
  %104 = vst.msk [vmem:[#allocation2 + $0x8] sm:$0xff] %vm56, %v102
  // Predicated region
  $region30: #{_lambda_.15} parent=0 // pred_check
    %p105 = pneg %p24
  $region31: #{_lambda_.15} parent=0 // pred_check_branch
    %107 = sbr.rel (%p105) target = $region33
  $region32: #{_lambda_.15} parent=0 // pred_region
    %v108 = vld [vmem:[#allocation2] sm:$0xff]
    %v109 = vld [vmem:[#allocation2 + $0x8] sm:$0xff]
    %v110 = vld [vmem:[%s2] sm:$0x1]
    %v112 = vlaneseq
    %v113 = vshrl.u32 %v112, 7
    %v114 = vsub.s32 0, %v113
    %v115 = vrot.slane %v110, %v114
    %v117 = vadd.f32 %v108, %v115
    %v118 = vadd.f32 %v109, %v115
    %v119 = vld [vmem:[%s3] sm:$0xf]
    %v120 = vld [vmem:[%s3 + $0x4] sm:$0xf]
    %v121 = vunpack.c.l.bf16 %v119
    %v122 = vunpack.c.l.bf16 %v120
    %v123 = vadd.f32 %v117, %v121
    %v124 = vadd.f32 %v118, %v122
    %v125 = vsel %vm56, %v123, 0.0
    %126 = vadd.xlane.f32.xlu0 %v125
    %v127 = vpop.xlane.xlu0 %126
    %v128 = vsel %vm56, %v124, 0.0
    %129 = vadd.xlane.f32.xlu0 %v128
    %v130 = vpop.xlane.xlu0 %129
    %v131 = vrcp.pop 32.0
    %v132 = vmul.f32 %v127, %v131
    %v133 = vmul.f32 %v130, %v131
    %v134 = vsub.f32 %v123, %v132
    %v135 = vsub.f32 %v124, %v133
    %v136 = vmul.f32 %v134, %v134
    %v137 = vmul.f32 %v135, %v135
    %v138 = vsel %vm56, %v136, 0.0
    %139 = vadd.xlane.f32.xlu0 %v138
    %v140 = vpop.xlane.xlu0 %139
    %v141 = vsel %vm56, %v137, 0.0
    %142 = vadd.xlane.f32.xlu0 %v141
    %v143 = vpop.xlane.xlu0 %142
    %v144 = vmul.f32 %v140, %v131
    %v145 = vmul.f32 %v143, %v131
    %v146 = vadd.f32 %v144, 1e-05
    %v147 = vadd.f32 %v145, 1e-05
    %v148 = vrsqrt.pop %v146
    %v149 = vrsqrt.pop %v147
    %v150 = vmul.f32 %v134, %v148
    %v151 = vmul.f32 %v135, %v149
    %v152 = vld [vmem:[%s4] sm:$0x1]
    %v154 = vlaneseq
    %v155 = vshrl.u32 %v154, 7
    %v156 = vsub.s32 0, %v155
    %v157 = vrot.slane %v152, %v156
    %v159 = vmul.f32 %v150, %v157
    %v160 = vmul.f32 %v151, %v157
    %v161 = vld [vmem:[%s5] sm:$0x1]
    %v163 = vlaneseq
    %v164 = vshrl.u32 %v163, 7
    %v165 = vsub.s32 0, %v164
    %v166 = vrot.slane %v161, %v165
    %v168 = vadd.f32 %v159, %v166
    %v169 = vadd.f32 %v160, %v166
    %v170 = vpack.c.bf16 %v169, %v168
    %v172 = vunpack.c.l.b16 %v170
    %v173 = vunpack.c.h.b16 %v170
    %v174 = vpack.c.b16 %v172, %v172
    %v175 = vpack.c.b16 %v173, %v173
    %vm178 = vcmask 257024
    %179 = vst.msk [vmem:[%s6] sm:$0xf] %vm178, %v174
    %180 = vst.msk [vmem:[%s6 + $0x4] sm:$0xf] %vm178, %v175
  $region33: #{_lambda_.15} parent=0 // pred_fallthru
    _
  // Predicated region
  $region34: #{_lambda_.15} parent=0 // pred_check
    _
  $region35: #{_lambda_.15} parent=0 // pred_check_branch
    %182 = sbr.rel (0) target = $region37
  $region36: #{_lambda_.15} parent=0 // pred_region
    _
  $region37: #{_lambda_.15} parent=0 // pred_fallthru
    _
  // Predicated region
  $region38: #{_lambda_.15} parent=0 // pred_check
    _
  $region39: #{_lambda_.15} parent=0 // pred_check_branch
    %184 = sbr.rel (0) target = $region41
  $region40: #{_lambda_.15} parent=0 // pred_region
    _
  $region41: #{_lambda_.15} parent=0 // pred_fallthru
    _

// kernel: _lambda_.13
$region0: #{_lambda_.13}
  #allocation0 [shape = 'u32[]', space=smem, size = 0x4, offset = 0x4, fixed_abs, tag = 'smem constant byte address 0x4 - core index']
  #allocation1 [shape = 'u32[144,128]{1,0:T(1,128)}', space=vmem, size = 0x12000, scoped, tag = 'internal scratch']
  #allocation2 [shape = 'f32[16,96]{1,0:T(8,128)}', space=vmem, size = 0x2000, scoped, tag = 'scratch operand']
  %s0 = inlined_call_operand.vmem [shape: bf16[16,32], index: 0, kind: input, shape index: {}]
  %s1 = inlined_call_operand.vmem [shape: bf16[32,96], index: 1, kind: input, shape index: {}]
  %s2 = inlined_call_operand.vmem [shape: f32[1,96], index: 2, kind: input, shape index: {}]
  %s3 = inlined_call_operand.vmem [shape: bf16[16,96], index: 3, kind: output, shape index: {}]
  %s4 = sld [smem:[#allocation0]]
  $region30: #{_lambda_.13} parent=0
    _
  %s6 = ssub.s32 1, %s4
  %s7 = scalar_select 0, %s6, %s4
  // Predicated region
  $region2: #{_lambda_.13} parent=0 // pred_check
    _
  $region3: #{_lambda_.13} parent=0 // pred_check_branch
    %9 = sbr.rel (0) target = $region5
  $region4: #{_lambda_.13} parent=0 // pred_region
    _
  $region5: #{_lambda_.13} parent=0 // pred_fallthru
    _
  // Predicated region
  $region6: #{_lambda_.13} parent=0 // pred_check
    _
  $region7: #{_lambda_.13} parent=0 // pred_check_branch
    %11 = sbr.rel (0) target = $region9
  $region8: #{_lambda_.13} parent=0 // pred_region
    _
  $region9: #{_lambda_.13} parent=0 // pred_fallthru
    _
  // Predicated region
  $region10: #{_lambda_.13} parent=0 // pred_check
    _
  $region11: #{_lambda_.13} parent=0 // pred_check_branch
    %13 = sbr.rel (0) target = $region13
  $region12: #{_lambda_.13} parent=0 // pred_region
    _
  $region13: #{_lambda_.13} parent=0 // pred_fallthru
    _
  %p15 = scmp.eq.s32.totalorder 0, 0
  // Predicated region
  $region14: #{_lambda_.13} parent=0 // pred_check
    %p16 = pneg %p15
  $region15: #{_lambda_.13} parent=0 // pred_check_branch
    %18 = sbr.rel (%p16) target = $region17
  $region16: #{_lambda_.13} parent=0 // pred_region
    %vm19 = vcmask 785408
    %20 = vst.msk [vmem:[#allocation2] sm:$0xff] %vm19, 0.0
    %21 = vst.msk [vmem:[#allocation2 + $0x8] sm:$0xff] %vm19, 0.0
  $region17: #{_lambda_.13} parent=0 // pred_fallthru
    _
  %v22 = vld [vmem:[#allocation2] sm:$0xff]
  %v23 = vld [vmem:[#allocation2 + $0x8] sm:$0xff]
  %v24 = vld [vmem:[%s0] sm:$0xf]
  %v25 = vld [vmem:[%s0 + $0x4] sm:$0xf]
  %v26 = vld [vmem:[%s1] sm:$0xf]
  %v27 = vld [vmem:[%s1 + $0x4] sm:$0xf]
  %v28 = vld [vmem:[%s1 + $0x8] sm:$0xf]
  %v29 = vld [vmem:[%s1 + $0xc] sm:$0xf]
  %v32 = vunpack.c.l.b16 %v24
  %v33 = vunpack.c.l.b16 %v25
  %v34 = vpack.c.b16 %v33, %v32
  %v39 = vunpack.c.l.b16 %v26
  %v40 = vunpack.c.l.b16 %v27
  %v41 = vunpack.c.l.b16 %v28
  %v42 = vunpack.c.l.b16 %v29
  %v43 = vpack.c.b16 %v40, %v39
  %v44 = vpack.c.b16 %v42, %v41
  %vm47 = vcmask 261120
  %v49 = vsel %vm47, %v34, 0
  %51 = vmatprep.subr.bf16.mxu0 0
  %52 = vmatpush1.bf16.msra.mxu0 %v43
  %53 = vmatprep.subr.bf16.mxu0 0
  %54 = vmatpush1.bf16.msra.mxu0 %v44
  %55 = vmatprep.subr.bf16.mxu0 0
  %56 = vmatpush1.bf16.msra.mxu0 0
  %57 = vmatprep.subr.bf16.mxu0 0
  %58 = vmatpush1.bf16.msra.mxu0 0
  %59 = vmatprep.subr.bf16.mxu0 0
  %60 = vmatpush1.bf16.msra.mxu0 0
  %61 = vmatprep.subr.bf16.mxu0 0
  %62 = vmatpush1.bf16.msra.mxu0 0
  %63 = vmatprep.subr.bf16.mxu0 0
  %64 = vmatpush1.bf16.msra.mxu0 0
  %65 = vmatprep.subr.bf16.mxu0 0
  %66 = vmatpush1.bf16.msra.mxu0 0
  %67 = vmatprep.subr.bf16.mxu0 0
  %68 = vmatpush1.bf16.msra.mxu0 0
  %69 = vmatprep.subr.bf16.mxu0 0
  %70 = vmatpush1.bf16.msra.mxu0 0
  %71 = vmatprep.subr.bf16.mxu0 0
  %72 = vmatpush1.bf16.msra.mxu0 0
  %73 = vmatprep.subr.bf16.mxu0 0
  %74 = vmatpush1.bf16.msra.mxu0 0
  %75 = vmatprep.subr.bf16.mxu0 0
  %76 = vmatpush1.bf16.msra.mxu0 0
  %77 = vmatprep.subr.bf16.mxu0 0
  %78 = vmatpush1.bf16.msra.mxu0 0
  %79 = vmatprep.subr.bf16.mxu0 0
  %80 = vmatpush1.bf16.msra.mxu0 0
  %81 = vmatprep.subr.bf16.mxu0 0
  %82 = vmatpush1.bf16.msra.mxu0 0
  %83 = vmatprep.mubr.bf16.mxu0 0
  %84 = vmatmul.mubr.bf16.gmra.mrb[0].mxu0 %v49
  %v85 = vpop.f32.mrb[0].mxu0
  %v86 = vadd.f32 0.0, %v85
  %v87 = vpop.f32.mrb[0].mxu0
  %v88 = vpop.f32.mrb[0].mxu0
  %v89 = vadd.f32 0.0, %v88
  %v90 = vpop.f32.mrb[0].mxu0
  %91 = vdwg.mxu0
  %v92 = vadd.f32 %v22, %v86
  %v93 = vadd.f32 %v23, %v89
  %vm94 = vcmask 785408
  %95 = vst.msk [vmem:[#allocation2] sm:$0xff] %vm94, %v92
  %96 = vst.msk [vmem:[#allocation2 + $0x8] sm:$0xff] %vm94, %v93
  // Predicated region
  $region18: #{_lambda_.13} parent=0 // pred_check
    %p97 = pneg %p15
  $region19: #{_lambda_.13} parent=0 // pred_check_branch
    %99 = sbr.rel (%p97) target = $region21
  $region20: #{_lambda_.13} parent=0 // pred_region
    %v100 = vld [vmem:[#allocation2] sm:$0xff]
    %v101 = vld [vmem:[#allocation2 + $0x8] sm:$0xff]
    %v102 = vld [vmem:[%s2] sm:$0x1]
    %v104 = vlaneseq
    %v105 = vshrl.u32 %v104, 7
    %v106 = vsub.s32 0, %v105
    %v107 = vrot.slane %v102, %v106
    %v109 = vadd.f32 %v100, %v107
    %v110 = vadd.f32 %v101, %v107
    %v111 = vpack.c.bf16 %v110, %v109
    %v113 = vunpack.c.l.b16 %v111
    %v114 = vunpack.c.h.b16 %v111
    %v115 = vpack.c.b16 %v113, %v113
    %v116 = vpack.c.b16 %v114, %v114
    %vm119 = vcmask 781312
    %120 = vst.msk [vmem:[%s3] sm:$0xf] %vm119, %v115
    %121 = vst.msk [vmem:[%s3 + $0x4] sm:$0xf] %vm119, %v116
  $region21: #{_lambda_.13} parent=0 // pred_fallthru
    _
  // Predicated region
  $region22: #{_lambda_.13} parent=0 // pred_check
    _
  $region23: #{_lambda_.13} parent=0 // pred_check_branch
    %123 = sbr.rel (0) target = $region25
  $region24: #{_lambda_.13} parent=0 // pred_region
    _
  $region25: #{_lambda_.13} parent=0 // pred_fallthru
    _
  // Predicated region
  $region26: #{_lambda_.13} parent=0 // pred_check
    _
  $region27: #{_lambda_.13} parent=0 // pred_check_branch
    %125 = sbr.rel (0) target = $region29
  $region28: #{_lambda_.13} parent=0 // pred_region
    _
  $region29: #{_lambda_.13} parent=0 // pred_fallthru
    _

// kernel: _lambda_.14
$region0: #{_lambda_.14}
  #allocation0 [shape = 'u32[]', space=smem, size = 0x4, offset = 0x4, fixed_abs, tag = 'smem constant byte address 0x4 - core index']
  #allocation1 [shape = 'u32[144,128]{1,0:T(1,128)}', space=vmem, size = 0x12000, scoped, tag = 'internal scratch']
  %s0 = inlined_call_operand.vmem [shape: bf16[2,8,96], index: 0, kind: input, shape index: {}]
  %s1 = inlined_call_operand.vmem [shape: f32[2,1,8], index: 1, kind: input, shape index: {}]
  %s2 = inlined_call_operand.vmem [shape: bf16[2,8,32], index: 2, kind: output, shape index: {}]
  %s3 = sld [smem:[#allocation0]]
  $region41: #{_lambda_.14} parent=0
    _
  %s5 = ssub.s32 1, %s3
  %s6 = scalar_select 0, %s5, %s3
  loop: start=0, step=1, limit=4
  $region2: #{_lambda_.14} parent=0 // loop_pre_header
    _
  $region3: #{_lambda_.14} parent=0 // loop_header
    %s8 = sphi 0, %s12
    %p9 = scmp.ge.s32.totalorder %s8, 4
    %s18 = sphi 0, %s20
    %s21 = sphi 0, %s18
    %s22 = sphi 0, %s21
    %s38 = sphi 0, %s22
    %s44 = sphi 0, %s46
    %s47 = sphi 0, %s44
    %s48 = sphi 0, %s47
    %s64 = sphi 0, %s48
    %s70 = sphi 0, %s72
    %s73 = sphi 0, %s70
    %s74 = sphi 0, %s73
    %s90 = sphi 0, %s74
  $region4: #{_lambda_.14} parent=0 // loop_header_branch
    %11 = sbr.rel (%p9) target = $region8
  $region5: #{_lambda_.14} parent=0 // loop_body
    %s13 = ssub.s32 %s8, 1
    %s14 = ssub.s32 %s8, 2
    %s15 = sadd.s32 %s8, 1
    %s16 = ssub.s32 %s8, %s15
    %p17 = scmp.eq.s32.totalorder %s16, 0
    %s19 = sadd.s32 %s18, 1
    %s20 = scalar_select %p17, %s18, %s19
    %p23 = pneg %p17
    %p24 = scmp.eq.s32.totalorder %s8, 1
    %p25 = por %p23, %p24
    %p26 = scmp.ne.s32.totalorder %s18, %s21
    %p27 = scmp.eq.s32.totalorder %s8, 0
    %p28 = por %p26, %p27
    %p29 = scmp.ne.s32.totalorder %s18, %s21
    %p30 = scmp.eq.s32.totalorder %s13, 1
    %p31 = por %p29, %p30
    %p32 = scmp.ne.s32.totalorder %s21, %s22
    %p33 = scmp.eq.s32.totalorder %s13, 0
    %p34 = por %p32, %p33
    %p35 = scmp.ne.s32.totalorder %s21, %s22
    %p36 = scmp.eq.s32.totalorder %s14, 1
    %p37 = por %p35, %p36
    %p39 = scmp.ne.s32.totalorder %s22, %s38
    %p40 = scmp.eq.s32.totalorder %s14, 0
    %p41 = por %p39, %p40
    %s42 = ssub.s32 %s8, %s15
    %p43 = scmp.eq.s32.totalorder %s42, 0
    %s45 = sadd.s32 %s44, 1
    %s46 = scalar_select %p43, %s44, %s45
    %p49 = pneg %p43
    %p50 = scmp.eq.s32.totalorder %s8, 1
    %p51 = por %p49, %p50
    %p52 = scmp.ne.s32.totalorder %s44, %s47
    %p53 = scmp.eq.s32.totalorder %s8, 0
    %p54 = por %p52, %p53
    %p55 = scmp.ne.s32.totalorder %s44, %s47
    %p56 = scmp.eq.s32.totalorder %s13, 1
    %p57 = por %p55, %p56
    %p58 = scmp.ne.s32.totalorder %s47, %s48
    %p59 = scmp.eq.s32.totalorder %s13, 0
    %p60 = por %p58, %p59
    %p61 = scmp.ne.s32.totalorder %s47, %s48
    %p62 = scmp.eq.s32.totalorder %s14, 1
    %p63 = por %p61, %p62
    %p65 = scmp.ne.s32.totalorder %s48, %s64
    %p66 = scmp.eq.s32.totalorder %s14, 0
    %p67 = por %p65, %p66
    %s68 = ssub.s32 %s8, %s15
    %p69 = scmp.eq.s32.totalorder %s68, 0
    %s71 = sadd.s32 %s70, 1
    %s72 = scalar_select %p69, %s70, %s71
    %p75 = pneg %p69
    %p76 = scmp.eq.s32.totalorder %s8, 1
    %p77 = por %p75, %p76
    %p78 = scmp.ne.s32.totalorder %s70, %s73
    %p79 = scmp.eq.s32.totalorder %s8, 0
    %p80 = por %p78, %p79
    %p81 = scmp.ne.s32.totalorder %s70, %s73
    %p82 = scmp.eq.s32.totalorder %s13, 1
    %p83 = por %p81, %p82
    %p84 = scmp.ne.s32.totalorder %s73, %s74
    %p85 = scmp.eq.s32.totalorder %s13, 0
    %p86 = por %p84, %p85
    %p87 = scmp.ne.s32.totalorder %s73, %s74
    %p88 = scmp.eq.s32.totalorder %s14, 1
    %p89 = por %p87, %p88
    %p91 = scmp.ne.s32.totalorder %s74, %s90
    %p92 = scmp.eq.s32.totalorder %s14, 0
    %p93 = por %p91, %p92
    %p94 = scmp.le.s32.totalorder 1, %s8
    %p95 = scmp.lt.s32.totalorder %s8, 3
    %p96 = pnand %p94, %p95
    %p97 = pneg %p96
    // Predicated region
    $region9: #{_lambda_.14} parent=5 // pred_check
      _
    $region10: #{_lambda_.14} parent=5 // pred_check_branch
      %99 = sbr.rel (%p96) target = $region12
    $region11: #{_lambda_.14} parent=5 // pred_region
      %s100 = ssub.s32 %s8, 1
    $region12: #{_lambda_.14} parent=5 // pred_fallthru
      _
    %p101 = scmp.lt.s32.totalorder %s8, 2
    // Predicated region
    $region13: #{_lambda_.14} parent=5 // pred_check
      %p102 = pneg %p101
    $region14: #{_lambda_.14} parent=5 // pred_check_branch
      %104 = sbr.rel (%p102) target = $region16
    $region15: #{_lambda_.14} parent=5 // pred_region
      // Predicated region
      $region17: #{_lambda_.14} parent=15 // pred_check
        %p105 = pneg %p28
      $region18: #{_lambda_.14} parent=15 // pred_check_branch
        %107 = sbr.rel (%p105) target = $region20
      $region19: #{_lambda_.14} parent=15 // pred_region
        %p108 = scmp.lt.s32.totalorder %s8, 1
        %s109 = scalar_select %p108, %s8, 1
        %s110 = smul.addr %s109, 4
        %s111 = scalar_lea.vmem %s0, %s110
      $region20: #{_lambda_.14} parent=15 // pred_fallthru
        _
      // Predicated region
      $region21: #{_lambda_.14} parent=15 // pred_check
        %p112 = pneg %p54
      $region22: #{_lambda_.14} parent=15 // pred_check_branch
        %114 = sbr.rel (%p112) target = $region24
      $region23: #{_lambda_.14} parent=15 // pred_region
        %p115 = scmp.lt.s32.totalorder %s8, 1
        %s116 = scalar_select %p115, %s8, 1
        %s117 = scalar_lea.vmem %s1, %s116
      $region24: #{_lambda_.14} parent=15 // pred_fallthru
        _
    $region16: #{_lambda_.14} parent=5 // pred_fallthru
      _
    %p118 = scmp.le.s32.totalorder 1, %s8
    %p119 = scmp.lt.s32.totalorder %s8, 3
    %p120 = pnand %p118, %p119
    %p121 = pneg %p120
    // Predicated region
    $region25: #{_lambda_.14} parent=5 // pred_check
      _
    $region26: #{_lambda_.14} parent=5 // pred_check_branch
      %123 = sbr.rel (%p120) target = $region28
    $region27: #{_lambda_.14} parent=5 // pred_region
      %s124 = ssub.s32 %s8, 1
      %p125 = scmp.lt.s32.totalorder %s13, 1
      %s126 = scalar_select %p125, %s13, 1
      %s127 = smul.addr %s126, 4
      %s128 = scalar_lea.vmem %s0, %s127
      %p129 = pneg %p34
      %p130 = pneg %p31
      %p131 = scmp.lt.s32.totalorder %s13, 1
      %s132 = scalar_select %p131, %s13, 1
      %s133 = scalar_lea.vmem %s1, %s132
      %p134 = pneg %p60
      %p135 = pneg %p57
      %p136 = pneg %p86
      %p137 = pneg %p83
      %p138 = scmp.lt.s32.totalorder %s13, 1
      %s139 = scalar_select %p138, %s13, 1
      %s140 = smul.addr %s139, 4
      %s141 = scalar_lea.vmem %s2, %s140
      %p142 = scmp.lt.s32.totalorder %s13, 1
      %s143 = scalar_select %p142, %s13, 1
      %s144 = smul.addr %s143, 4
      %s145 = scalar_lea.vmem %s0, %s144
      %p146 = scmp.lt.s32.totalorder %s13, 1
      %s147 = scalar_select %p146, %s13, 1
      %s148 = scalar_lea.vmem %s1, %s147
      %p149 = scmp.lt.s32.totalorder %s13, 1
      %s150 = scalar_select %p149, %s13, 1
      %s151 = smul.addr %s150, 4
      %s152 = scalar_lea.vmem %s2, %s151
      %v154 = vld [vmem:[%s145] sm:$0xf]
      %v155 = vld [vmem:[%s148] sm:$0x1]
      %v157 = vunpack.c.l.b16 %v154
      %v158 = vpack.c.b16 %v157, %v157
      %159 = vrot.lane.b32.xlu0 %v158, 96
      %v160 = vpop.permute.xlu0 %159
      %vm161 = vcmask 64512
      %v163 = vsel %vm161, %v154, 0
      %v166 = vsel %vm161, %v160, 0
      %168 = vmatprep.subr.bf16.mxu0 0
      %169 = vmatpush1.bf16.xpose.msra.mxu0 %v166
      %170 = vmatprep.subr.bf16.mxu0 0
      %171 = vmatpush1.bf16.xpose.msra.mxu0 0
      %172 = vmatprep.subr.bf16.mxu0 0
      %173 = vmatpush1.bf16.xpose.msra.mxu0 0
      %174 = vmatprep.subr.bf16.mxu0 0
      %175 = vmatpush1.bf16.xpose.msra.mxu0 0
      %176 = vmatprep.subr.bf16.mxu0 0
      %177 = vmatpush1.bf16.xpose.msra.mxu0 0
      %178 = vmatprep.subr.bf16.mxu0 0
      %179 = vmatpush1.bf16.xpose.msra.mxu0 0
      %180 = vmatprep.subr.bf16.mxu0 0
      %181 = vmatpush1.bf16.xpose.msra.mxu0 0
      %182 = vmatprep.subr.bf16.mxu0 0
      %183 = vmatpush1.bf16.xpose.msra.mxu0 0
      %184 = vmatprep.subr.bf16.mxu0 0
      %185 = vmatpush1.bf16.xpose.msra.mxu0 0
      %186 = vmatprep.subr.bf16.mxu0 0
      %187 = vmatpush1.bf16.xpose.msra.mxu0 0
      %188 = vmatprep.subr.bf16.mxu0 0
      %189 = vmatpush1.bf16.xpose.msra.mxu0 0
      %190 = vmatprep.subr.bf16.mxu0 0
      %191 = vmatpush1.bf16.xpose.msra.mxu0 0
      %192 = vmatprep.subr.bf16.mxu0 0
      %193 = vmatpush1.bf16.xpose.msra.mxu0 0
      %194 = vmatprep.subr.bf16.mxu0 0
      %195 = vmatpush1.bf16.xpose.msra.mxu0 0
      %196 = vmatprep.subr.bf16.mxu0 0
      %197 = vmatpush1.bf16.xpose.msra.mxu0 0
      %198 = vmatprep.subr.bf16.mxu0 0
      %199 = vmatpush1.bf16.xpose.msra.mxu0 0
      %200 = vmatprep.mubr.bf16.mxu0 0
      %201 = vmatmul.mubr.bf16.gmra.mrb[0].mxu0 %v163
      %v202 = vpop.f32.mrb[0].mxu0
      %v203 = vadd.f32 0.0, %v202
      %v204 = vpop.f32.mrb[0].mxu0
      %v205 = vpop.f32.mrb[0].mxu0
      %v206 = vpop.f32.mrb[0].mxu0
      %207 = vdwg.mxu0
      %v208 = vmul.f32 %v203, 0.35355338
      %v210 = vlaneseq
      %v211 = vshrl.u32 %v210, 7
      %v212 = vsub.s32 0, %v211
      %v213 = vrot.slane %v155, %v212
      %v215 = vadd.f32 %v208, %v213
      %v216 = vsel %vm161, %v215, -inf
      %217 = vmax.xlane.f32.xlu0 %v216
      %v218 = vpop.xlane.xlu0 %217
      %v219 = vsub.f32 %v215, %v218
      %v220 = vmul.f32 %v219, 1.442695
      %v221 = vpow.pop %v220
      %v222 = vsel %vm161, %v221, 0.0
      %223 = vadd.xlane.f32.xlu0 %v222
      %v224 = vpop.xlane.xlu0 %223
      %v225 = vrcp.pop %v224
      %v226 = vmul.f32 %v221, %v225
      %v227 = vpack.c.bf16 %v226, %v226
      %228 = vrot.lane.b32.xlu0 %v158, 64
      %v229 = vpop.permute.xlu0 %228
      %v231 = vsel %vm161, %v227, 0
      %vm233 = vcmask 1043456
      %v235 = vsel %vm233, %v229, 0
      %237 = vmatprep.subr.bf16.mxu0 0
      %238 = vmatpush1.bf16.msra.mxu0 %v235
      %239 = vmatprep.subr.bf16.mxu0 0
      %240 = vmatpush1.bf16.msra.mxu0 0
      %241 = vmatprep.subr.bf16.mxu0 0
      %242 = vmatpush1.bf16.msra.mxu0 0
      %243 = vmatprep.subr.bf16.mxu0 0
      %244 = vmatpush1.bf16.msra.mxu0 0
      %245 = vmatprep.subr.bf16.mxu0 0
      %246 = vmatpush1.bf16.msra.mxu0 0
      %247 = vmatprep.subr.bf16.mxu0 0
      %248 = vmatpush1.bf16.msra.mxu0 0
      %249 = vmatprep.subr.bf16.mxu0 0
      %250 = vmatpush1.bf16.msra.mxu0 0
      %251 = vmatprep.subr.bf16.mxu0 0
      %252 = vmatpush1.bf16.msra.mxu0 0
      %253 = vmatprep.subr.bf16.mxu0 0
      %254 = vmatpush1.bf16.msra.mxu0 0
      %255 = vmatprep.subr.bf16.mxu0 0
      %256 = vmatpush1.bf16.msra.mxu0 0
      %257 = vmatprep.subr.bf16.mxu0 0
      %258 = vmatpush1.bf16.msra.mxu0 0
      %259 = vmatprep.subr.bf16.mxu0 0
      %260 = vmatpush1.bf16.msra.mxu0 0
      %261 = vmatprep.subr.bf16.mxu0 0
      %262 = vmatpush1.bf16.msra.mxu0 0
      %263 = vmatprep.subr.bf16.mxu0 0
      %264 = vmatpush1.bf16.msra.mxu0 0
      %265 = vmatprep.subr.bf16.mxu0 0
      %266 = vmatpush1.bf16.msra.mxu0 0
      %267 = vmatprep.subr.bf16.mxu0 0
      %268 = vmatpush1.bf16.msra.mxu0 0
      %269 = vmatprep.mubr.bf16.mxu0 0
      %270 = vmatmul.mubr.bf16.gmra.mrb[0].mxu0 %v231
      %v271 = vpop.f32.mrb[0].mxu0
      %v272 = vadd.f32 0.0, %v271
      %v273 = vpop.f32.mrb[0].mxu0
      %v274 = vpop.f32.mrb[0].mxu0
      %v275 = vpop.f32.mrb[0].mxu0
      %276 = vdwg.mxu0
      %v277 = vpack.c.bf16 %v272, %v272
      %vm278 = vcmask 60416
      %279 = vst.msk [vmem:[%s152] sm:$0xf] %vm278, %v277
      %280 = vrot.lane.b32.xlu0 %v158, 120
      %v281 = vpop.permute.xlu0 %280
      %282 = vrot.lane.b32.xlu0 %v158, 88
      %v283 = vpop.permute.xlu0 %282
      %v285 = vsel %vm161, %v281, 0
      %v288 = vsel %vm161, %v283, 0
      %290 = vmatprep.subr.bf16.mxu0 0
      %291 = vmatpush1.bf16.xpose.msra.mxu0 %v288
      %292 = vmatprep.subr.bf16.mxu0 0
      %293 = vmatpush1.bf16.xpose.msra.mxu0 0
      %294 = vmatprep.subr.bf16.mxu0 0
      %295 = vmatpush1.bf16.xpose.msra.mxu0 0
      %296 = vmatprep.subr.bf16.mxu0 0
      %297 = vmatpush1.bf16.xpose.msra.mxu0 0
      %298 = vmatprep.subr.bf16.mxu0 0
      %299 = vmatpush1.bf16.xpose.msra.mxu0 0
      %300 = vmatprep.subr.bf16.mxu0 0
      %301 = vmatpush1.bf16.xpose.msra.mxu0 0
      %302 = vmatprep.subr.bf16.mxu0 0
      %303 = vmatpush1.bf16.xpose.msra.mxu0 0
      %304 = vmatprep.subr.bf16.mxu0 0
      %305 = vmatpush1.bf16.xpose.msra.mxu0 0
      %306 = vmatprep.subr.bf16.mxu0 0
      %307 = vmatpush1.bf16.xpose.msra.mxu0 0
      %308 = vmatprep.subr.bf16.mxu0 0
      %309 = vmatpush1.bf16.xpose.msra.mxu0 0
      %310 = vmatprep.subr.bf16.mxu0 0
      %311 = vmatpush1.bf16.xpose.msra.mxu0 0
      %312 = vmatprep.subr.bf16.mxu0 0
      %313 = vmatpush1.bf16.xpose.msra.mxu0 0
      %314 = vmatprep.subr.bf16.mxu0 0
      %315 = vmatpush1.bf16.xpose.msra.mxu0 0
      %316 = vmatprep.subr.bf16.mxu0 0
      %317 = vmatpush1.bf16.xpose.msra.mxu0 0
      %318 = vmatprep.subr.bf16.mxu0 0
      %319 = vmatpush1.bf16.xpose.msra.mxu0 0
      %320 = vmatprep.subr.bf16.mxu0 0
      %321 = vmatpush1.bf16.xpose.msra.mxu0 0
      %322 = vmatprep.mubr.bf16.mxu0 0
      %323 = vmatmul.mubr.bf16.gmra.mrb[0].mxu0 %v285
      %v324 = vpop.f32.mrb[0].mxu0
      %v325 = vadd.f32 0.0, %v324
      %v326 = vpop.f32.mrb[0].mxu0
      %v327 = vpop.f32.mrb[0].mxu0
      %v328 = vpop.f32.mrb[0].mxu0
      %329 = vdwg.mxu0
      %v330 = vmul.f32 %v325, 0.35355338
      %v331 = vadd.f32 %v330, %v213
      %v332 = vsel %vm161, %v331, -inf
      %333 = vmax.xlane.f32.xlu0 %v332
      %v334 = vpop.xlane.xlu0 %333
      %v335 = vsub.f32 %v331, %v334
      %v336 = vmul.f32 %v335, 1.442695
      %v337 = vpow.pop %v336
      %v338 = vsel %vm161, %v337, 0.0
      %339 = vadd.xlane.f32.xlu0 %v338
      %v340 = vpop.xlane.xlu0 %339
      %v341 = vrcp.pop %v340
      %v342 = vmul.f32 %v337, %v341
      %v343 = vpack.c.bf16 %v342, %v342
      %344 = vrot.lane.b32.xlu0 %v158, 56
      %v345 = vpop.permute.xlu0 %344
      %v347 = vsel %vm161, %v343, 0
      %v350 = vsel %vm233, %v345, 0
      %352 = vmatprep.subr.bf16.mxu0 0
      %353 = vmatpush1.bf16.msra.mxu0 %v350
      %354 = vmatprep.subr.bf16.mxu0 0
      %355 = vmatpush1.bf16.msra.mxu0 0
      %356 = vmatprep.subr.bf16.mxu0 0
      %357 = vmatpush1.bf16.msra.mxu0 0
      %358 = vmatprep.subr.bf16.mxu0 0
      %359 = vmatpush1.bf16.msra.mxu0 0
      %360 = vmatprep.subr.bf16.mxu0 0
      %361 = vmatpush1.bf16.msra.mxu0 0
      %362 = vmatprep.subr.bf16.mxu0 0
      %363 = vmatpush1.bf16.msra.mxu0 0
      %364 = vmatprep.subr.bf16.mxu0 0
      %365 = vmatpush1.bf16.msra.mxu0 0
      %366 = vmatprep.subr.bf16.mxu0 0
      %367 = vmatpush1.bf16.msra.mxu0 0
      %368 = vmatprep.subr.bf16.mxu0 0
      %369 = vmatpush1.bf16.msra.mxu0 0
      %370 = vmatprep.subr.bf16.mxu0 0
      %371 = vmatpush1.bf16.msra.mxu0 0
      %372 = vmatprep.subr.bf16.mxu0 0
      %373 = vmatpush1.bf16.msra.mxu0 0
      %374 = vmatprep.subr.bf16.mxu0 0
      %375 = vmatpush1.bf16.msra.mxu0 0
      %376 = vmatprep.subr.bf16.mxu0 0
      %377 = vmatpush1.bf16.msra.mxu0 0
      %378 = vmatprep.subr.bf16.mxu0 0
      %379 = vmatpush1.bf16.msra.mxu0 0
      %380 = vmatprep.subr.bf16.mxu0 0
      %381 = vmatpush1.bf16.msra.mxu0 0
      %382 = vmatprep.subr.bf16.mxu0 0
      %383 = vmatpush1.bf16.msra.mxu0 0
      %384 = vmatprep.mubr.bf16.mxu0 0
      %385 = vmatmul.mubr.bf16.gmra.mrb[0].mxu0 %v347
      %v386 = vpop.f32.mrb[0].mxu0
      %v387 = vadd.f32 0.0, %v386
      %v388 = vpop.f32.mrb[0].mxu0
      %v389 = vpop.f32.mrb[0].mxu0
      %v390 = vpop.f32.mrb[0].mxu0
      %391 = vdwg.mxu0
      %v392 = vpack.c.bf16 %v387, %v387
      %v394 = vunpack.c.l.b16 %v392
      %v395 = vpack.c.b16 %v394, %v394
      %396 = vrot.lane.b32.xlu0 %v395, 8
      %v397 = vpop.permute.xlu0 %396
      %vm399 = vcmask 126016
      %400 = vst.msk [vmem:[%s152] sm:$0xf] %vm399, %v397
      %401 = vrot.lane.b32.xlu0 %v158, 112
      %v402 = vpop.permute.xlu0 %401
      %403 = vrot.lane.b32.xlu0 %v158, 80
      %v404 = vpop.permute.xlu0 %403
      %v406 = vsel %vm161, %v402, 0
      %v409 = vsel %vm161, %v404, 0
      %411 = vmatprep.subr.bf16.mxu0 0
      %412 = vmatpush1.bf16.xpose.msra.mxu0 %v409
      %413 = vmatprep.subr.bf16.mxu0 0
      %414 = vmatpush1.bf16.xpose.msra.mxu0 0
      %415 = vmatprep.subr.bf16.mxu0 0
      %416 = vmatpush1.bf16.xpose.msra.mxu0 0
      %417 = vmatprep.subr.bf16.mxu0 0
      %418 = vmatpush1.bf16.xpose.msra.mxu0 0
      %419 = vmatprep.subr.bf16.mxu0 0
      %420 = vmatpush1.bf16.xpose.msra.mxu0 0
      %421 = vmatprep.subr.bf16.mxu0 0
      %422 = vmatpush1.bf16.xpose.msra.mxu0 0
      %423 = vmatprep.subr.bf16.mxu0 0
      %424 = vmatpush1.bf16.xpose.msra.mxu0 0
      %425 = vmatprep.subr.bf16.mxu0 0
      %426 = vmatpush1.bf16.xpose.msra.mxu0 0
      %427 = vmatprep.subr.bf16.mxu0 0
      %428 = vmatpush1.bf16.xpose.msra.mxu0 0
      %429 = vmatprep.subr.bf16.mxu0 0
      %430 = vmatpush1.bf16.xpose.msra.mxu0 0
      %431 = vmatprep.subr.bf16.mxu0 0
      %432 = vmatpush1.bf16.xpose.msra.mxu0 0
      %433 = vmatprep.subr.bf16.mxu0 0
      %434 = vmatpush1.bf16.xpose.msra.mxu0 0
      %435 = vmatprep.subr.bf16.mxu0 0
      %436 = vmatpush1.bf16.xpose.msra.mxu0 0
      %437 = vmatprep.subr.bf16.mxu0 0
      %438 = vmatpush1.bf16.xpose.msra.mxu0 0
      %439 = vmatprep.subr.bf16.mxu0 0
      %440 = vmatpush1.bf16.xpose.msra.mxu0 0
      %441 = vmatprep.subr.bf16.mxu0 0
      %442 = vmatpush1.bf16.xpose.msra.mxu0 0
      %443 = vmatprep.mubr.bf16.mxu0 0
      %444 = vmatmul.mubr.bf16.gmra.mrb[0].mxu0 %v406
      %v445 = vpop.f32.mrb[0].mxu0
      %v446 = vadd.f32 0.0, %v445
      %v447 = vpop.f32.mrb[0].mxu0
      %v448 = vpop.f32.mrb[0].mxu0
      %v449 = vpop.f32.mrb[0].mxu0
      %450 = vdwg.mxu0
      %v451 = vmul.f32 %v446, 0.35355338
      %v452 = vadd.f32 %v451, %v213
      %v453 = vsel %vm161, %v452, -inf
      %454 = vmax.xlane.f32.xlu0 %v453
      %v455 = vpop.xlane.xlu0 %454
      %v456 = vsub.f32 %v452, %v455
      %v457 = vmul.f32 %v456, 1.442695
      %v458 = vpow.pop %v457
      %v459 = vsel %vm161, %v458, 0.0
      %460 = vadd.xlane.f32.xlu0 %v459
      %v461 = vpop.xlane.xlu0 %460
      %v462 = vrcp.pop %v461
      %v463 = vmul.f32 %v458, %v462
      %v464 = vpack.c.bf16 %v463, %v463
      %465 = vrot.lane.b32.xlu0 %v158, 48
      %v466 = vpop.permute.xlu0 %465
      %v468 = vsel %vm161, %v464, 0
      %v471 = vsel %vm233, %v466, 0
      %473 = vmatprep.subr.bf16.mxu0 0
      %474 = vmatpush1.bf16.msra.mxu0 %v471
      %475 = vmatprep.subr.bf16.mxu0 0
      %476 = vmatpush1.bf16.msra.mxu0 0
      %477 = vmatprep.subr.bf16.mxu0 0
      %478 = vmatpush1.bf16.msra.mxu0 0
      %479 = vmatprep.subr.bf16.mxu0 0
      %480 = vmatpush1.bf16.msra.mxu0 0
      %481 = vmatprep.subr.bf16.mxu0 0
      %482 = vmatpush1.bf16.msra.mxu0 0
      %483 = vmatprep.subr.bf16.mxu0 0
      %484 = vmatpush1.bf16.msra.mxu0 0
      %485 = vmatprep.subr.bf16.mxu0 0
      %486 = vmatpush1.bf16.msra.mxu0 0
      %487 = vmatprep.subr.bf16.mxu0 0
      %488 = vmatpush1.bf16.msra.mxu0 0
      %489 = vmatprep.subr.bf16.mxu0 0
      %490 = vmatpush1.bf16.msra.mxu0 0
      %491 = vmatprep.subr.bf16.mxu0 0
      %492 = vmatpush1.bf16.msra.mxu0 0
      %493 = vmatprep.subr.bf16.mxu0 0
      %494 = vmatpush1.bf16.msra.mxu0 0
      %495 = vmatprep.subr.bf16.mxu0 0
      %496 = vmatpush1.bf16.msra.mxu0 0
      %497 = vmatprep.subr.bf16.mxu0 0
      %498 = vmatpush1.bf16.msra.mxu0 0
      %499 = vmatprep.subr.bf16.mxu0 0
      %500 = vmatpush1.bf16.msra.mxu0 0
      %501 = vmatprep.subr.bf16.mxu0 0
      %502 = vmatpush1.bf16.msra.mxu0 0
      %503 = vmatprep.subr.bf16.mxu0 0
      %504 = vmatpush1.bf16.msra.mxu0 0
      %505 = vmatprep.mubr.bf16.mxu0 0
      %506 = vmatmul.mubr.bf16.gmra.mrb[0].mxu0 %v468
      %v507 = vpop.f32.mrb[0].mxu0
      %v508 = vadd.f32 0.0, %v507
      %v509 = vpop.f32.mrb[0].mxu0
      %v510 = vpop.f32.mrb[0].mxu0
      %v511 = vpop.f32.mrb[0].mxu0
      %512 = vdwg.mxu0
      %v513 = vpack.c.bf16 %v508, %v508
      %v515 = vunpack.c.l.b16 %v513
      %v516 = vpack.c.b16 %v515, %v515
      %517 = vrot.lane.b32.xlu0 %v516, 16
      %v518 = vpop.permute.xlu0 %517
      %vm520 = vcmask 191616
      %521 = vst.msk [vmem:[%s152] sm:$0xf] %vm520, %v518
      %522 = vrot.lane.b32.xlu0 %v158, 104
      %v523 = vpop.permute.xlu0 %522
      %524 = vrot.lane.b32.xlu0 %v158, 72
      %v525 = vpop.permute.xlu0 %524
      %v527 = vsel %vm161, %v523, 0
      %v530 = vsel %vm161, %v525, 0
      %532 = vmatprep.subr.bf16.mxu0 0
      %533 = vmatpush1.bf16.xpose.msra.mxu0 %v530
      %534 = vmatprep.subr.bf16.mxu0 0
      %535 = vmatpush1.bf16.xpose.msra.mxu0 0
      %536 = vmatprep.subr.bf16.mxu0 0
      %537 = vmatpush1.bf16.xpose.msra.mxu0 0
      %538 = vmatprep.subr.bf16.mxu0 0
      %539 = vmatpush1.bf16.xpose.msra.mxu0 0
      %540 = vmatprep.subr.bf16.mxu0 0
      %541 = vmatpush1.bf16.xpose.msra.mxu0 0
      %542 = vmatprep.subr.bf16.mxu0 0
      %543 = vmatpush1.bf16.xpose.msra.mxu0 0
      %544 = vmatprep.subr.bf16.mxu0 0
      %545 = vmatpush1.bf16.xpose.msra.mxu0 0
      %546 = vmatprep.subr.bf16.mxu0 0
      %547 = vmatpush1.bf16.xpose.msra.mxu0 0
      %548 = vmatprep.subr.bf16.mxu0 0
      %549 = vmatpush1.bf16.xpose.msra.mxu0 0
      %550 = vmatprep.subr.bf16.mxu0 0
      %551 = vmatpush1.bf16.xpose.msra.mxu0 0
      %552 = vmatprep.subr.bf16.mxu0 0
      %553 = vmatpush1.bf16.xpose.msra.mxu0 0
      %554 = vmatprep.subr.bf16.mxu0 0
      %555 = vmatpush1.bf16.xpose.msra.mxu0 0
      %556 = vmatprep.subr.bf16.mxu0 0
      %557 = vmatpush1.bf16.xpose.msra.mxu0 0
      %558 = vmatprep.subr.bf16.mxu0 0
      %559 = vmatpush1.bf16.xpose.msra.mxu0 0
      %560 = vmatprep.subr.bf16.mxu0 0
      %561 = vmatpush1.bf16.xpose.msra.mxu0 0
      %562 = vmatprep.subr.bf16.mxu0 0
      %563 = vmatpush1.bf16.xpose.msra.mxu0 0
      %564 = vmatprep.mubr.bf16.mxu0 0
      %565 = vmatmul.mubr.bf16.gmra.mrb[0].mxu0 %v527
      %v566 = vpop.f32.mrb[0].mxu0
      %v567 = vadd.f32 0.0, %v566
      %v568 = vpop.f32.mrb[0].mxu0
      %v569 = vpop.f32.mrb[0].mxu0
      %v570 = vpop.f32.mrb[0].mxu0
      %571 = vdwg.mxu0
      %v572 = vmul.f32 %v567, 0.35355338
      %v573 = vadd.f32 %v572, %v213
      %v574 = vsel %vm161, %v573, -inf
      %575 = vmax.xlane.f32.xlu0 %v574
      %v576 = vpop.xlane.xlu0 %575
      %v577 = vsub.f32 %v573, %v576
      %v578 = vmul.f32 %v577, 1.442695
      %v579 = vpow.pop %v578
      %v580 = vsel %vm161, %v579, 0.0
      %581 = vadd.xlane.f32.xlu0 %v580
      %v582 = vpop.xlane.xlu0 %581
      %v583 = vrcp.pop %v582
      %v584 = vmul.f32 %v579, %v583
      %v585 = vpack.c.bf16 %v584, %v584
      %586 = vrot.lane.b32.xlu0 %v158, 40
      %v587 = vpop.permute.xlu0 %586
      %v589 = vsel %vm161, %v585, 0
      %v592 = vsel %vm233, %v587, 0
      %594 = vmatprep.subr.bf16.mxu0 0
      %595 = vmatpush1.bf16.msra.mxu0 %v592
      %596 = vmatprep.subr.bf16.mxu0 0
      %597 = vmatpush1.bf16.msra.mxu0 0
      %598 = vmatprep.subr.bf16.mxu0 0
      %599 = vmatpush1.bf16.msra.mxu0 0
      %600 = vmatprep.subr.bf16.mxu0 0
      %601 = vmatpush1.bf16.msra.mxu0 0
      %602 = vmatprep.subr.bf16.mxu0 0
      %603 = vmatpush1.bf16.msra.mxu0 0
      %604 = vmatprep.subr.bf16.mxu0 0
      %605 = vmatpush1.bf16.msra.mxu0 0
      %606 = vmatprep.subr.bf16.mxu0 0
      %607 = vmatpush1.bf16.msra.mxu0 0
      %608 = vmatprep.subr.bf16.mxu0 0
      %609 = vmatpush1.bf16.msra.mxu0 0
      %610 = vmatprep.subr.bf16.mxu0 0
      %611 = vmatpush1.bf16.msra.mxu0 0
      %612 = vmatprep.subr.bf16.mxu0 0
      %613 = vmatpush1.bf16.msra.mxu0 0
      %614 = vmatprep.subr.bf16.mxu0 0
      %615 = vmatpush1.bf16.msra.mxu0 0
      %616 = vmatprep.subr.bf16.mxu0 0
      %617 = vmatpush1.bf16.msra.mxu0 0
      %618 = vmatprep.subr.bf16.mxu0 0
      %619 = vmatpush1.bf16.msra.mxu0 0
      %620 = vmatprep.subr.bf16.mxu0 0
      %621 = vmatpush1.bf16.msra.mxu0 0
      %622 = vmatprep.subr.bf16.mxu0 0
      %623 = vmatpush1.bf16.msra.mxu0 0
      %624 = vmatprep.subr.bf16.mxu0 0
      %625 = vmatpush1.bf16.msra.mxu0 0
      %626 = vmatprep.mubr.bf16.mxu0 0
      %627 = vmatmul.mubr.bf16.gmra.mrb[0].mxu0 %v589
      %v628 = vpop.f32.mrb[0].mxu0
      %v629 = vadd.f32 0.0, %v628
      %v630 = vpop.f32.mrb[0].mxu0
      %v631 = vpop.f32.mrb[0].mxu0
      %v632 = vpop.f32.mrb[0].mxu0
      %633 = vdwg.mxu0
      %v634 = vpack.c.bf16 %v629, %v629
      %v636 = vunpack.c.l.b16 %v634
      %v637 = vpack.c.b16 %v636, %v636
      %638 = vrot.lane.b32.xlu0 %v637, 24
      %v639 = vpop.permute.xlu0 %638
      %vm641 = vcmask 257216
      %642 = vst.msk [vmem:[%s152] sm:$0xf] %vm641, %v639
      %p643 = scmp.lt.s32.totalorder %s13, 1
      %s644 = scalar_select %p643, %s13, 1
      %s645 = smul.addr %s644, 4
      %s646 = scalar_lea.vmem %s2, %s645
      // Predicated region
      $region29: #{_lambda_.14} parent=27 // pred_check
        %p647 = pneg %p83
      $region30: #{_lambda_.14} parent=27 // pred_check_branch
        %649 = sbr.rel (%p647) target = $region32
      $region31: #{_lambda_.14} parent=27 // pred_region
        _
      $region32: #{_lambda_.14} parent=27 // pred_fallthru
        _
    $region28: #{_lambda_.14} parent=5 // pred_fallthru
      _
    %p650 = scmp.le.s32.totalorder 2, %s8
    // Predicated region
    $region33: #{_lambda_.14} parent=5 // pred_check
      %p651 = pneg %p650
    $region34: #{_lambda_.14} parent=5 // pred_check_branch
      %653 = sbr.rel (%p651) target = $region36
    $region35: #{_lambda_.14} parent=5 // pred_region
      %s654 = ssub.s32 %s8, 2
      // Predicated region
      $region37: #{_lambda_.14} parent=35 // pred_check
        %p655 = pneg %p89
      $region38: #{_lambda_.14} parent=35 // pred_check_branch
        %657 = sbr.rel (%p655) target = $region40
      $region39: #{_lambda_.14} parent=35 // pred_region
        %p658 = scmp.lt.s32.totalorder %s14, 1
        %s659 = scalar_select %p658, %s14, 1
        %s660 = smul.addr %s659, 4
        %s661 = scalar_lea.vmem %s2, %s660
      $region40: #{_lambda_.14} parent=35 // pred_fallthru
        _
    $region36: #{_lambda_.14} parent=5 // pred_fallthru
      _
  $region6: #{_lambda_.14} parent=0 // loop_footer
    %s12 = sadd.s32 1, %s8
  $region7: #{_lambda_.14} parent=0 // loop_footer_branch
    %7 = sbr.rel target = $region3
  $region8: #{_lambda_.14} parent=0 // loop_exit
    _

// kernel: _lambda_.20
$region0: #{_lambda_.20}
  #allocation0 [shape = 'u32[]', space=smem, size = 0x4, offset = 0x4, fixed_abs, tag = 'smem constant byte address 0x4 - core index']
  #allocation1 [shape = 'u32[144,128]{1,0:T(1,128)}', space=vmem, size = 0x12000, scoped, tag = 'internal scratch']
  #allocation2 [shape = 'f32[16,32]{1,0:T(8,128)}', space=vmem, size = 0x2000, scoped, tag = 'scratch operand']
  %s0 = inlined_call_operand.vmem [shape: bf16[16,32], index: 0, kind: input, shape index: {}]
  %s1 = inlined_call_operand.vmem [shape: bf16[32,32], index: 1, kind: input, shape index: {}]
  %s2 = inlined_call_operand.vmem [shape: f32[1,32], index: 2, kind: input, shape index: {}]
  %s3 = inlined_call_operand.vmem [shape: bf16[16,32], index: 3, kind: output, shape index: {}]
  %s4 = sld [smem:[#allocation0]]
  $region30: #{_lambda_.20} parent=0
    _
  %s6 = ssub.s32 1, %s4
  %s7 = scalar_select 0, %s6, %s4
  // Predicated region
  $region2: #{_lambda_.20} parent=0 // pred_check
    _
  $region3: #{_lambda_.20} parent=0 // pred_check_branch
    %9 = sbr.rel (0) target = $region5
  $region4: #{_lambda_.20} parent=0 // pred_region
    _
  $region5: #{_lambda_.20} parent=0 // pred_fallthru
    _
  // Predicated region
  $region6: #{_lambda_.20} parent=0 // pred_check
    _
  $region7: #{_lambda_.20} parent=0 // pred_check_branch
    %11 = sbr.rel (0) target = $region9
  $region8: #{_lambda_.20} parent=0 // pred_region
    _
  $region9: #{_lambda_.20} parent=0 // pred_fallthru
    _
  // Predicated region
  $region10: #{_lambda_.20} parent=0 // pred_check
    _
  $region11: #{_lambda_.20} parent=0 // pred_check_branch
    %13 = sbr.rel (0) target = $region13
  $region12: #{_lambda_.20} parent=0 // pred_region
    _
  $region13: #{_lambda_.20} parent=0 // pred_fallthru
    _
  %p15 = scmp.eq.s32.totalorder 0, 0
  // Predicated region
  $region14: #{_lambda_.20} parent=0 // pred_check
    %p16 = pneg %p15
  $region15: #{_lambda_.20} parent=0 // pred_check_branch
    %18 = sbr.rel (%p16) target = $region17
  $region16: #{_lambda_.20} parent=0 // pred_region
    %vm19 = vcmask 261120
    %20 = vst.msk [vmem:[#allocation2] sm:$0xff] %vm19, 0.0
    %21 = vst.msk [vmem:[#allocation2 + $0x8] sm:$0xff] %vm19, 0.0
  $region17: #{_lambda_.20} parent=0 // pred_fallthru
    _
  %v22 = vld [vmem:[#allocation2] sm:$0xff]
  %v23 = vld [vmem:[#allocation2 + $0x8] sm:$0xff]
  %v24 = vld [vmem:[%s0] sm:$0xf]
  %v25 = vld [vmem:[%s0 + $0x4] sm:$0xf]
  %v26 = vld [vmem:[%s1] sm:$0xf]
  %v27 = vld [vmem:[%s1 + $0x4] sm:$0xf]
  %v28 = vld [vmem:[%s1 + $0x8] sm:$0xf]
  %v29 = vld [vmem:[%s1 + $0xc] sm:$0xf]
  %v32 = vunpack.c.l.b16 %v24
  %v33 = vunpack.c.l.b16 %v25
  %v34 = vpack.c.b16 %v33, %v32
  %v39 = vunpack.c.l.b16 %v26
  %v40 = vunpack.c.l.b16 %v27
  %v41 = vunpack.c.l.b16 %v28
  %v42 = vunpack.c.l.b16 %v29
  %v43 = vpack.c.b16 %v40, %v39
  %v44 = vpack.c.b16 %v42, %v41
  %vm47 = vcmask 261120
  %v49 = vsel %vm47, %v34, 0
  %51 = vmatprep.subr.bf16.mxu0 0
  %52 = vmatpush1.bf16.msra.mxu0 %v43
  %53 = vmatprep.subr.bf16.mxu0 0
  %54 = vmatpush1.bf16.msra.mxu0 %v44
  %55 = vmatprep.subr.bf16.mxu0 0
  %56 = vmatpush1.bf16.msra.mxu0 0
  %57 = vmatprep.subr.bf16.mxu0 0
  %58 = vmatpush1.bf16.msra.mxu0 0
  %59 = vmatprep.subr.bf16.mxu0 0
  %60 = vmatpush1.bf16.msra.mxu0 0
  %61 = vmatprep.subr.bf16.mxu0 0
  %62 = vmatpush1.bf16.msra.mxu0 0
  %63 = vmatprep.subr.bf16.mxu0 0
  %64 = vmatpush1.bf16.msra.mxu0 0
  %65 = vmatprep.subr.bf16.mxu0 0
  %66 = vmatpush1.bf16.msra.mxu0 0
  %67 = vmatprep.subr.bf16.mxu0 0
  %68 = vmatpush1.bf16.msra.mxu0 0
  %69 = vmatprep.subr.bf16.mxu0 0
  %70 = vmatpush1.bf16.msra.mxu0 0
  %71 = vmatprep.subr.bf16.mxu0 0
  %72 = vmatpush1.bf16.msra.mxu0 0
  %73 = vmatprep.subr.bf16.mxu0 0
  %74 = vmatpush1.bf16.msra.mxu0 0
  %75 = vmatprep.subr.bf16.mxu0 0
  %76 = vmatpush1.bf16.msra.mxu0 0
  %77 = vmatprep.subr.bf16.mxu0 0
  %78 = vmatpush1.bf16.msra.mxu0 0
  %79 = vmatprep.subr.bf16.mxu0 0
  %80 = vmatpush1.bf16.msra.mxu0 0
  %81 = vmatprep.subr.bf16.mxu0 0
  %82 = vmatpush1.bf16.msra.mxu0 0
  %83 = vmatprep.mubr.bf16.mxu0 0
  %84 = vmatmul.mubr.bf16.gmra.mrb[0].mxu0 %v49
  %v85 = vpop.f32.mrb[0].mxu0
  %v86 = vadd.f32 0.0, %v85
  %v87 = vpop.f32.mrb[0].mxu0
  %v88 = vpop.f32.mrb[0].mxu0
  %v89 = vadd.f32 0.0, %v88
  %v90 = vpop.f32.mrb[0].mxu0
  %91 = vdwg.mxu0
  %v92 = vadd.f32 %v22, %v86
  %v93 = vadd.f32 %v23, %v89
  %94 = vst.msk [vmem:[#allocation2] sm:$0xff] %vm47, %v92
  %95 = vst.msk [vmem:[#allocation2 + $0x8] sm:$0xff] %vm47, %v93
  // Predicated region
  $region18: #{_lambda_.20} parent=0 // pred_check
    %p96 = pneg %p15
  $region19: #{_lambda_.20} parent=0 // pred_check_branch
    %98 = sbr.rel (%p96) target = $region21
  $region20: #{_lambda_.20} parent=0 // pred_region
    %v99 = vld [vmem:[#allocation2] sm:$0xff]
    %v100 = vld [vmem:[#allocation2 + $0x8] sm:$0xff]
    %v101 = vld [vmem:[%s2] sm:$0x1]
    %v103 = vlaneseq
    %v104 = vshrl.u32 %v103, 7
    %v105 = vsub.s32 0, %v104
    %v106 = vrot.slane %v101, %v105
    %v108 = vadd.f32 %v99, %v106
    %v109 = vadd.f32 %v100, %v106
    %v110 = vpack.c.bf16 %v109, %v108
    %v112 = vunpack.c.l.b16 %v110
    %v113 = vunpack.c.h.b16 %v110
    %v114 = vpack.c.b16 %v112, %v112
    %v115 = vpack.c.b16 %v113, %v113
    %vm118 = vcmask 257024
    %119 = vst.msk [vmem:[%s3] sm:$0xf] %vm118, %v114
    %120 = vst.msk [vmem:[%s3 + $0x4] sm:$0xf] %vm118, %v115
  $region21: #{_lambda_.20} parent=0 // pred_fallthru
    _
  // Predicated region
  $region22: #{_lambda_.20} parent=0 // pred_check
    _
  $region23: #{_lambda_.20} parent=0 // pred_check_branch
    %122 = sbr.rel (0) target = $region25
  $region24: #{_lambda_.20} parent=0 // pred_region
    _
  $region25: #{_lambda_.20} parent=0 // pred_fallthru
    _
  // Predicated region
  $region26: #{_lambda_.20} parent=0 // pred_check
    _
  $region27: #{_lambda_.20} parent=0 // pred_check_branch
    %124 = sbr.rel (0) target = $region29
  $region28: #{_lambda_.20} parent=0 // pred_region
    _
  $region29: #{_lambda_.20} parent=0 // pred_fallthru
    _

// kernel: _lambda_.21
$region0: #{_lambda_.21}
  #allocation0 [shape = 'u32[]', space=smem, size = 0x4, offset = 0x4, fixed_abs, tag = 'smem constant byte address 0x4 - core index']
  #allocation1 [shape = 'u32[144,128]{1,0:T(1,128)}', space=vmem, size = 0x12000, scoped, tag = 'internal scratch']
  #allocation2 [shape = 'f32[16,64]{1,0:T(8,128)}', space=vmem, size = 0x2000, scoped, tag = 'scratch operand']
  %s0 = inlined_call_operand.vmem [shape: bf16[16,32], index: 0, kind: input, shape index: {}]
  %s1 = inlined_call_operand.vmem [shape: bf16[32,64], index: 1, kind: input, shape index: {}]
  %s2 = inlined_call_operand.vmem [shape: f32[1,64], index: 2, kind: input, shape index: {}]
  %s3 = inlined_call_operand.vmem [shape: bf16[16,64], index: 3, kind: output, shape index: {}]
  %s4 = sld [smem:[#allocation0]]
  $region30: #{_lambda_.21} parent=0
    _
  %s6 = ssub.s32 1, %s4
  %s7 = scalar_select 0, %s6, %s4
  // Predicated region
  $region2: #{_lambda_.21} parent=0 // pred_check
    _
  $region3: #{_lambda_.21} parent=0 // pred_check_branch
    %9 = sbr.rel (0) target = $region5
  $region4: #{_lambda_.21} parent=0 // pred_region
    _
  $region5: #{_lambda_.21} parent=0 // pred_fallthru
    _
  // Predicated region
  $region6: #{_lambda_.21} parent=0 // pred_check
    _
  $region7: #{_lambda_.21} parent=0 // pred_check_branch
    %11 = sbr.rel (0) target = $region9
  $region8: #{_lambda_.21} parent=0 // pred_region
    _
  $region9: #{_lambda_.21} parent=0 // pred_fallthru
    _
  // Predicated region
  $region10: #{_lambda_.21} parent=0 // pred_check
    _
  $region11: #{_lambda_.21} parent=0 // pred_check_branch
    %13 = sbr.rel (0) target = $region13
  $region12: #{_lambda_.21} parent=0 // pred_region
    _
  $region13: #{_lambda_.21} parent=0 // pred_fallthru
    _
  %p15 = scmp.eq.s32.totalorder 0, 0
  // Predicated region
  $region14: #{_lambda_.21} parent=0 // pred_check
    %p16 = pneg %p15
  $region15: #{_lambda_.21} parent=0 // pred_check_branch
    %18 = sbr.rel (%p16) target = $region17
  $region16: #{_lambda_.21} parent=0 // pred_region
    %vm19 = vcmask 523264
    %20 = vst.msk [vmem:[#allocation2] sm:$0xff] %vm19, 0.0
    %21 = vst.msk [vmem:[#allocation2 + $0x8] sm:$0xff] %vm19, 0.0
  $region17: #{_lambda_.21} parent=0 // pred_fallthru
    _
  %v22 = vld [vmem:[#allocation2] sm:$0xff]
  %v23 = vld [vmem:[#allocation2 + $0x8] sm:$0xff]
  %v24 = vld [vmem:[%s0] sm:$0xf]
  %v25 = vld [vmem:[%s0 + $0x4] sm:$0xf]
  %v26 = vld [vmem:[%s1] sm:$0xf]
  %v27 = vld [vmem:[%s1 + $0x4] sm:$0xf]
  %v28 = vld [vmem:[%s1 + $0x8] sm:$0xf]
  %v29 = vld [vmem:[%s1 + $0xc] sm:$0xf]
  %v32 = vunpack.c.l.b16 %v24
  %v33 = vunpack.c.l.b16 %v25
  %v34 = vpack.c.b16 %v33, %v32
  %v39 = vunpack.c.l.b16 %v26
  %v40 = vunpack.c.l.b16 %v27
  %v41 = vunpack.c.l.b16 %v28
  %v42 = vunpack.c.l.b16 %v29
  %v43 = vpack.c.b16 %v40, %v39
  %v44 = vpack.c.b16 %v42, %v41
  %vm47 = vcmask 261120
  %v49 = vsel %vm47, %v34, 0
  %51 = vmatprep.subr.bf16.mxu0 0
  %52 = vmatpush1.bf16.msra.mxu0 %v43
  %53 = vmatprep.subr.bf16.mxu0 0
  %54 = vmatpush1.bf16.msra.mxu0 %v44
  %55 = vmatprep.subr.bf16.mxu0 0
  %56 = vmatpush1.bf16.msra.mxu0 0
  %57 = vmatprep.subr.bf16.mxu0 0
  %58 = vmatpush1.bf16.msra.mxu0 0
  %59 = vmatprep.subr.bf16.mxu0 0
  %60 = vmatpush1.bf16.msra.mxu0 0
  %61 = vmatprep.subr.bf16.mxu0 0
  %62 = vmatpush1.bf16.msra.mxu0 0
  %63 = vmatprep.subr.bf16.mxu0 0
  %64 = vmatpush1.bf16.msra.mxu0 0
  %65 = vmatprep.subr.bf16.mxu0 0
  %66 = vmatpush1.bf16.msra.mxu0 0
  %67 = vmatprep.subr.bf16.mxu0 0
  %68 = vmatpush1.bf16.msra.mxu0 0
  %69 = vmatprep.subr.bf16.mxu0 0
  %70 = vmatpush1.bf16.msra.mxu0 0
  %71 = vmatprep.subr.bf16.mxu0 0
  %72 = vmatpush1.bf16.msra.mxu0 0
  %73 = vmatprep.subr.bf16.mxu0 0
  %74 = vmatpush1.bf16.msra.mxu0 0
  %75 = vmatprep.subr.bf16.mxu0 0
  %76 = vmatpush1.bf16.msra.mxu0 0
  %77 = vmatprep.subr.bf16.mxu0 0
  %78 = vmatpush1.bf16.msra.mxu0 0
  %79 = vmatprep.subr.bf16.mxu0 0
  %80 = vmatpush1.bf16.msra.mxu0 0
  %81 = vmatprep.subr.bf16.mxu0 0
  %82 = vmatpush1.bf16.msra.mxu0 0
  %83 = vmatprep.mubr.bf16.mxu0 0
  %84 = vmatmul.mubr.bf16.gmra.mrb[0].mxu0 %v49
  %v85 = vpop.f32.mrb[0].mxu0
  %v86 = vadd.f32 0.0, %v85
  %v87 = vpop.f32.mrb[0].mxu0
  %v88 = vpop.f32.mrb[0].mxu0
  %v89 = vadd.f32 0.0, %v88
  %v90 = vpop.f32.mrb[0].mxu0
  %91 = vdwg.mxu0
  %v92 = vadd.f32 %v22, %v86
  %v93 = vadd.f32 %v23, %v89
  %vm94 = vcmask 523264
  %95 = vst.msk [vmem:[#allocation2] sm:$0xff] %vm94, %v92
  %96 = vst.msk [vmem:[#allocation2 + $0x8] sm:$0xff] %vm94, %v93
  // Predicated region
  $region18: #{_lambda_.21} parent=0 // pred_check
    %p97 = pneg %p15
  $region19: #{_lambda_.21} parent=0 // pred_check_branch
    %99 = sbr.rel (%p97) target = $region21
  $region20: #{_lambda_.21} parent=0 // pred_region
    %v100 = vld [vmem:[#allocation2] sm:$0xff]
    %v101 = vld [vmem:[#allocation2 + $0x8] sm:$0xff]
    %v102 = vld [vmem:[%s2] sm:$0x1]
    %v104 = vlaneseq
    %v105 = vshrl.u32 %v104, 7
    %v106 = vsub.s32 0, %v105
    %v107 = vrot.slane %v102, %v106
    %v109 = vadd.f32 %v100, %v107
    %v110 = vadd.f32 %v101, %v107
    %v111 = vpack.c.bf16 %v110, %v109
    %v113 = vunpack.c.l.b16 %v111
    %v114 = vunpack.c.h.b16 %v111
    %v115 = vpack.c.b16 %v113, %v113
    %v116 = vpack.c.b16 %v114, %v114
    %vm119 = vcmask 519168
    %120 = vst.msk [vmem:[%s3] sm:$0xf] %vm119, %v115
    %121 = vst.msk [vmem:[%s3 + $0x4] sm:$0xf] %vm119, %v116
  $region21: #{_lambda_.21} parent=0 // pred_fallthru
    _
  // Predicated region
  $region22: #{_lambda_.21} parent=0 // pred_check
    _
  $region23: #{_lambda_.21} parent=0 // pred_check_branch
    %123 = sbr.rel (0) target = $region25
  $region24: #{_lambda_.21} parent=0 // pred_region
    _
  $region25: #{_lambda_.21} parent=0 // pred_fallthru
    _
  // Predicated region
  $region26: #{_lambda_.21} parent=0 // pred_check
    _
  $region27: #{_lambda_.21} parent=0 // pred_check_branch
    %125 = sbr.rel (0) target = $region29
  $region28: #{_lambda_.21} parent=0 // pred_region
    _
  $region29: #{_lambda_.21} parent=0 // pred_fallthru
    _

// kernel: _lambda_.18
$region0: #{_lambda_.18}
  #allocation0 [shape = 'u32[]', space=smem, size = 0x4, offset = 0x4, fixed_abs, tag = 'smem constant byte address 0x4 - core index']
  #allocation1 [shape = 'u32[144,128]{1,0:T(1,128)}', space=vmem, size = 0x12000, scoped, tag = 'internal scratch']
  %s0 = inlined_call_operand.vmem [shape: bf16[2,8,96], index: 0, kind: input, shape index: {}]
  %s1 = inlined_call_operand.vmem [shape: f32[2,1,8], index: 1, kind: input, shape index: {}]
  %s2 = inlined_call_operand.vmem [shape: bf16[2,8,32], index: 2, kind: output, shape index: {}]
  %s3 = sld [smem:[#allocation0]]
  $region41: #{_lambda_.18} parent=0
    _
  %s5 = ssub.s32 1, %s3
  %s6 = scalar_select 0, %s5, %s3
  loop: start=0, step=1, limit=4
  $region2: #{_lambda_.18} parent=0 // loop_pre_header
    _
  $region3: #{_lambda_.18} parent=0 // loop_header
    %s8 = sphi 0, %s12
    %p9 = scmp.ge.s32.totalorder %s8, 4
    %s18 = sphi 0, %s20
    %s21 = sphi 0, %s18
    %s22 = sphi 0, %s21
    %s38 = sphi 0, %s22
    %s44 = sphi 0, %s46
    %s47 = sphi 0, %s44
    %s48 = sphi 0, %s47
    %s64 = sphi 0, %s48
    %s70 = sphi 0, %s72
    %s73 = sphi 0, %s70
    %s74 = sphi 0, %s73
    %s90 = sphi 0, %s74
  $region4: #{_lambda_.18} parent=0 // loop_header_branch
    %11 = sbr.rel (%p9) target = $region8
  $region5: #{_lambda_.18} parent=0 // loop_body
    %s13 = ssub.s32 %s8, 1
    %s14 = ssub.s32 %s8, 2
    %s15 = sadd.s32 %s8, 1
    %s16 = ssub.s32 %s8, %s15
    %p17 = scmp.eq.s32.totalorder %s16, 0
    %s19 = sadd.s32 %s18, 1
    %s20 = scalar_select %p17, %s18, %s19
    %p23 = pneg %p17
    %p24 = scmp.eq.s32.totalorder %s8, 1
    %p25 = por %p23, %p24
    %p26 = scmp.ne.s32.totalorder %s18, %s21
    %p27 = scmp.eq.s32.totalorder %s8, 0
    %p28 = por %p26, %p27
    %p29 = scmp.ne.s32.totalorder %s18, %s21
    %p30 = scmp.eq.s32.totalorder %s13, 1
    %p31 = por %p29, %p30
    %p32 = scmp.ne.s32.totalorder %s21, %s22
    %p33 = scmp.eq.s32.totalorder %s13, 0
    %p34 = por %p32, %p33
    %p35 = scmp.ne.s32.totalorder %s21, %s22
    %p36 = scmp.eq.s32.totalorder %s14, 1
    %p37 = por %p35, %p36
    %p39 = scmp.ne.s32.totalorder %s22, %s38
    %p40 = scmp.eq.s32.totalorder %s14, 0
    %p41 = por %p39, %p40
    %s42 = ssub.s32 %s8, %s15
    %p43 = scmp.eq.s32.totalorder %s42, 0
    %s45 = sadd.s32 %s44, 1
    %s46 = scalar_select %p43, %s44, %s45
    %p49 = pneg %p43
    %p50 = scmp.eq.s32.totalorder %s8, 1
    %p51 = por %p49, %p50
    %p52 = scmp.ne.s32.totalorder %s44, %s47
    %p53 = scmp.eq.s32.totalorder %s8, 0
    %p54 = por %p52, %p53
    %p55 = scmp.ne.s32.totalorder %s44, %s47
    %p56 = scmp.eq.s32.totalorder %s13, 1
    %p57 = por %p55, %p56
    %p58 = scmp.ne.s32.totalorder %s47, %s48
    %p59 = scmp.eq.s32.totalorder %s13, 0
    %p60 = por %p58, %p59
    %p61 = scmp.ne.s32.totalorder %s47, %s48
    %p62 = scmp.eq.s32.totalorder %s14, 1
    %p63 = por %p61, %p62
    %p65 = scmp.ne.s32.totalorder %s48, %s64
    %p66 = scmp.eq.s32.totalorder %s14, 0
    %p67 = por %p65, %p66
    %s68 = ssub.s32 %s8, %s15
    %p69 = scmp.eq.s32.totalorder %s68, 0
    %s71 = sadd.s32 %s70, 1
    %s72 = scalar_select %p69, %s70, %s71
    %p75 = pneg %p69
    %p76 = scmp.eq.s32.totalorder %s8, 1
    %p77 = por %p75, %p76
    %p78 = scmp.ne.s32.totalorder %s70, %s73
    %p79 = scmp.eq.s32.totalorder %s8, 0
    %p80 = por %p78, %p79
    %p81 = scmp.ne.s32.totalorder %s70, %s73
    %p82 = scmp.eq.s32.totalorder %s13, 1
    %p83 = por %p81, %p82
    %p84 = scmp.ne.s32.totalorder %s73, %s74
    %p85 = scmp.eq.s32.totalorder %s13, 0
    %p86 = por %p84, %p85
    %p87 = scmp.ne.s32.totalorder %s73, %s74
    %p88 = scmp.eq.s32.totalorder %s14, 1
    %p89 = por %p87, %p88
    %p91 = scmp.ne.s32.totalorder %s74, %s90
    %p92 = scmp.eq.s32.totalorder %s14, 0
    %p93 = por %p91, %p92
    %p94 = scmp.le.s32.totalorder 1, %s8
    %p95 = scmp.lt.s32.totalorder %s8, 3
    %p96 = pnand %p94, %p95
    %p97 = pneg %p96
    // Predicated region
    $region9: #{_lambda_.18} parent=5 // pred_check
      _
    $region10: #{_lambda_.18} parent=5 // pred_check_branch
      %99 = sbr.rel (%p96) target = $region12
    $region11: #{_lambda_.18} parent=5 // pred_region
      %s100 = ssub.s32 %s8, 1
    $region12: #{_lambda_.18} parent=5 // pred_fallthru
      _
    %p101 = scmp.lt.s32.totalorder %s8, 2
    // Predicated region
    $region13: #{_lambda_.18} parent=5 // pred_check
      %p102 = pneg %p101
    $region14: #{_lambda_.18} parent=5 // pred_check_branch
      %104 = sbr.rel (%p102) target = $region16
    $region15: #{_lambda_.18} parent=5 // pred_region
      // Predicated region
      $region17: #{_lambda_.18} parent=15 // pred_check
        %p105 = pneg %p28
      $region18: #{_lambda_.18} parent=15 // pred_check_branch
        %107 = sbr.rel (%p105) target = $region20
      $region19: #{_lambda_.18} parent=15 // pred_region
        %p108 = scmp.lt.s32.totalorder %s8, 1
        %s109 = scalar_select %p108, %s8, 1
        %s110 = smul.addr %s109, 4
        %s111 = scalar_lea.vmem %s0, %s110
      $region20: #{_lambda_.18} parent=15 // pred_fallthru
        _
      // Predicated region
      $region21: #{_lambda_.18} parent=15 // pred_check
        %p112 = pneg %p54
      $region22: #{_lambda_.18} parent=15 // pred_check_branch
        %114 = sbr.rel (%p112) target = $region24
      $region23: #{_lambda_.18} parent=15 // pred_region
        %p115 = scmp.lt.s32.totalorder %s8, 1
        %s116 = scalar_select %p115, %s8, 1
        %s117 = scalar_lea.vmem %s1, %s116
      $region24: #{_lambda_.18} parent=15 // pred_fallthru
        _
    $region16: #{_lambda_.18} parent=5 // pred_fallthru
      _
    %p118 = scmp.le.s32.totalorder 1, %s8
    %p119 = scmp.lt.s32.totalorder %s8, 3
    %p120 = pnand %p118, %p119
    %p121 = pneg %p120
    // Predicated region
    $region25: #{_lambda_.18} parent=5 // pred_check
      _
    $region26: #{_lambda_.18} parent=5 // pred_check_branch
      %123 = sbr.rel (%p120) target = $region28
    $region27: #{_lambda_.18} parent=5 // pred_region
      %s124 = ssub.s32 %s8, 1
      %p125 = scmp.lt.s32.totalorder %s13, 1
      %s126 = scalar_select %p125, %s13, 1
      %s127 = smul.addr %s126, 4
      %s128 = scalar_lea.vmem %s0, %s127
      %p129 = pneg %p34
      %p130 = pneg %p31
      %p131 = scmp.lt.s32.totalorder %s13, 1
      %s132 = scalar_select %p131, %s13, 1
      %s133 = scalar_lea.vmem %s1, %s132
      %p134 = pneg %p60
      %p135 = pneg %p57
      %p136 = pneg %p86
      %p137 = pneg %p83
      %p138 = scmp.lt.s32.totalorder %s13, 1
      %s139 = scalar_select %p138, %s13, 1
      %s140 = smul.addr %s139, 4
      %s141 = scalar_lea.vmem %s2, %s140
      %p142 = scmp.lt.s32.totalorder %s13, 1
      %s143 = scalar_select %p142, %s13, 1
      %s144 = smul.addr %s143, 4
      %s145 = scalar_lea.vmem %s0, %s144
      %p146 = scmp.lt.s32.totalorder %s13, 1
      %s147 = scalar_select %p146, %s13, 1
      %s148 = scalar_lea.vmem %s1, %s147
      %p149 = scmp.lt.s32.totalorder %s13, 1
      %s150 = scalar_select %p149, %s13, 1
      %s151 = smul.addr %s150, 4
      %s152 = scalar_lea.vmem %s2, %s151
      %v154 = vld [vmem:[%s145] sm:$0xf]
      %v155 = vld [vmem:[%s148] sm:$0x1]
      %v156 = vlaneseq
      %v157 = vshrl.u32 %v156, 7
      %v158 = vlaneseq
      %v159 = vand.u32 %v158, 127
      %vm160 = vcmp.le.s32.totalorder %v159, %v157
      %v161 = vsel %vm160, 0.0, -1e+09
      %v163 = vlaneseq
      %v164 = vshrl.u32 %v163, 7
      %v165 = vsub.s32 0, %v164
      %v166 = vrot.slane %v155, %v165
      %v168 = vadd.f32 %v166, %v161
      %v170 = vunpack.c.l.b16 %v154
      %v171 = vpack.c.b16 %v170, %v170
      %172 = vrot.lane.b32.xlu0 %v171, 96
      %v173 = vpop.permute.xlu0 %172
      %vm174 = vcmask 64512
      %v176 = vsel %vm174, %v154, 0
      %v179 = vsel %vm174, %v173, 0
      %181 = vmatprep.subr.bf16.mxu0 0
      %182 = vmatpush1.bf16.xpose.msra.mxu0 %v179
      %183 = vmatprep.subr.bf16.mxu0 0
      %184 = vmatpush1.bf16.xpose.msra.mxu0 0
      %185 = vmatprep.subr.bf16.mxu0 0
      %186 = vmatpush1.bf16.xpose.msra.mxu0 0
      %187 = vmatprep.subr.bf16.mxu0 0
      %188 = vmatpush1.bf16.xpose.msra.mxu0 0
      %189 = vmatprep.subr.bf16.mxu0 0
      %190 = vmatpush1.bf16.xpose.msra.mxu0 0
      %191 = vmatprep.subr.bf16.mxu0 0
      %192 = vmatpush1.bf16.xpose.msra.mxu0 0
      %193 = vmatprep.subr.bf16.mxu0 0
      %194 = vmatpush1.bf16.xpose.msra.mxu0 0
      %195 = vmatprep.subr.bf16.mxu0 0
      %196 = vmatpush1.bf16.xpose.msra.mxu0 0
      %197 = vmatprep.subr.bf16.mxu0 0
      %198 = vmatpush1.bf16.xpose.msra.mxu0 0
      %199 = vmatprep.subr.bf16.mxu0 0
      %200 = vmatpush1.bf16.xpose.msra.mxu0 0
      %201 = vmatprep.subr.bf16.mxu0 0
      %202 = vmatpush1.bf16.xpose.msra.mxu0 0
      %203 = vmatprep.subr.bf16.mxu0 0
      %204 = vmatpush1.bf16.xpose.msra.mxu0 0
      %205 = vmatprep.subr.bf16.mxu0 0
      %206 = vmatpush1.bf16.xpose.msra.mxu0 0
      %207 = vmatprep.subr.bf16.mxu0 0
      %208 = vmatpush1.bf16.xpose.msra.mxu0 0
      %209 = vmatprep.subr.bf16.mxu0 0
      %210 = vmatpush1.bf16.xpose.msra.mxu0 0
      %211 = vmatprep.subr.bf16.mxu0 0
      %212 = vmatpush1.bf16.xpose.msra.mxu0 0
      %213 = vmatprep.mubr.bf16.mxu0 0
      %214 = vmatmul.mubr.bf16.gmra.mrb[0].mxu0 %v176
      %v215 = vpop.f32.mrb[0].mxu0
      %v216 = vadd.f32 0.0, %v215
      %v217 = vpop.f32.mrb[0].mxu0
      %v218 = vpop.f32.mrb[0].mxu0
      %v219 = vpop.f32.mrb[0].mxu0
      %220 = vdwg.mxu0
      %v221 = vmul.f32 %v216, 0.35355338
      %v222 = vadd.f32 %v221, %v168
      %v223 = vsel %vm174, %v222, -inf
      %224 = vmax.xlane.f32.xlu0 %v223
      %v225 = vpop.xlane.xlu0 %224
      %v226 = vsub.f32 %v222, %v225
      %v227 = vmul.f32 %v226, 1.442695
      %v228 = vpow.pop %v227
      %v229 = vsel %vm174, %v228, 0.0
      %230 = vadd.xlane.f32.xlu0 %v229
      %v231 = vpop.xlane.xlu0 %230
      %v232 = vrcp.pop %v231
      %v233 = vmul.f32 %v228, %v232
      %v234 = vpack.c.bf16 %v233, %v233
      %235 = vrot.lane.b32.xlu0 %v171, 64
      %v236 = vpop.permute.xlu0 %235
      %v238 = vsel %vm174, %v234, 0
      %vm240 = vcmask 1043456
      %v242 = vsel %vm240, %v236, 0
      %244 = vmatprep.subr.bf16.mxu0 0
      %245 = vmatpush1.bf16.msra.mxu0 %v242
      %246 = vmatprep.subr.bf16.mxu0 0
      %247 = vmatpush1.bf16.msra.mxu0 0
      %248 = vmatprep.subr.bf16.mxu0 0
      %249 = vmatpush1.bf16.msra.mxu0 0
      %250 = vmatprep.subr.bf16.mxu0 0
      %251 = vmatpush1.bf16.msra.mxu0 0
      %252 = vmatprep.subr.bf16.mxu0 0
      %253 = vmatpush1.bf16.msra.mxu0 0
      %254 = vmatprep.subr.bf16.mxu0 0
      %255 = vmatpush1.bf16.msra.mxu0 0
      %256 = vmatprep.subr.bf16.mxu0 0
      %257 = vmatpush1.bf16.msra.mxu0 0
      %258 = vmatprep.subr.bf16.mxu0 0
      %259 = vmatpush1.bf16.msra.mxu0 0
      %260 = vmatprep.subr.bf16.mxu0 0
      %261 = vmatpush1.bf16.msra.mxu0 0
      %262 = vmatprep.subr.bf16.mxu0 0
      %263 = vmatpush1.bf16.msra.mxu0 0
      %264 = vmatprep.subr.bf16.mxu0 0
      %265 = vmatpush1.bf16.msra.mxu0 0
      %266 = vmatprep.subr.bf16.mxu0 0
      %267 = vmatpush1.bf16.msra.mxu0 0
      %268 = vmatprep.subr.bf16.mxu0 0
      %269 = vmatpush1.bf16.msra.mxu0 0
      %270 = vmatprep.subr.bf16.mxu0 0
      %271 = vmatpush1.bf16.msra.mxu0 0
      %272 = vmatprep.subr.bf16.mxu0 0
      %273 = vmatpush1.bf16.msra.mxu0 0
      %274 = vmatprep.subr.bf16.mxu0 0
      %275 = vmatpush1.bf16.msra.mxu0 0
      %276 = vmatprep.mubr.bf16.mxu0 0
      %277 = vmatmul.mubr.bf16.gmra.mrb[0].mxu0 %v238
      %v278 = vpop.f32.mrb[0].mxu0
      %v279 = vadd.f32 0.0, %v278
      %v280 = vpop.f32.mrb[0].mxu0
      %v281 = vpop.f32.mrb[0].mxu0
      %v282 = vpop.f32.mrb[0].mxu0
      %283 = vdwg.mxu0
      %v284 = vpack.c.bf16 %v279, %v279
      %vm285 = vcmask 60416
      %286 = vst.msk [vmem:[%s152] sm:$0xf] %vm285, %v284
      %287 = vrot.lane.b32.xlu0 %v171, 120
      %v288 = vpop.permute.xlu0 %287
      %289 = vrot.lane.b32.xlu0 %v171, 88
      %v290 = vpop.permute.xlu0 %289
      %v292 = vsel %vm174, %v288, 0
      %v295 = vsel %vm174, %v290, 0
      %297 = vmatprep.subr.bf16.mxu0 0
      %298 = vmatpush1.bf16.xpose.msra.mxu0 %v295
      %299 = vmatprep.subr.bf16.mxu0 0
      %300 = vmatpush1.bf16.xpose.msra.mxu0 0
      %301 = vmatprep.subr.bf16.mxu0 0
      %302 = vmatpush1.bf16.xpose.msra.mxu0 0
      %303 = vmatprep.subr.bf16.mxu0 0
      %304 = vmatpush1.bf16.xpose.msra.mxu0 0
      %305 = vmatprep.subr.bf16.mxu0 0
      %306 = vmatpush1.bf16.xpose.msra.mxu0 0
      %307 = vmatprep.subr.bf16.mxu0 0
      %308 = vmatpush1.bf16.xpose.msra.mxu0 0
      %309 = vmatprep.subr.bf16.mxu0 0
      %310 = vmatpush1.bf16.xpose.msra.mxu0 0
      %311 = vmatprep.subr.bf16.mxu0 0
      %312 = vmatpush1.bf16.xpose.msra.mxu0 0
      %313 = vmatprep.subr.bf16.mxu0 0
      %314 = vmatpush1.bf16.xpose.msra.mxu0 0
      %315 = vmatprep.subr.bf16.mxu0 0
      %316 = vmatpush1.bf16.xpose.msra.mxu0 0
      %317 = vmatprep.subr.bf16.mxu0 0
      %318 = vmatpush1.bf16.xpose.msra.mxu0 0
      %319 = vmatprep.subr.bf16.mxu0 0
      %320 = vmatpush1.bf16.xpose.msra.mxu0 0
      %321 = vmatprep.subr.bf16.mxu0 0
      %322 = vmatpush1.bf16.xpose.msra.mxu0 0
      %323 = vmatprep.subr.bf16.mxu0 0
      %324 = vmatpush1.bf16.xpose.msra.mxu0 0
      %325 = vmatprep.subr.bf16.mxu0 0
      %326 = vmatpush1.bf16.xpose.msra.mxu0 0
      %327 = vmatprep.subr.bf16.mxu0 0
      %328 = vmatpush1.bf16.xpose.msra.mxu0 0
      %329 = vmatprep.mubr.bf16.mxu0 0
      %330 = vmatmul.mubr.bf16.gmra.mrb[0].mxu0 %v292
      %v331 = vpop.f32.mrb[0].mxu0
      %v332 = vadd.f32 0.0, %v331
      %v333 = vpop.f32.mrb[0].mxu0
      %v334 = vpop.f32.mrb[0].mxu0
      %v335 = vpop.f32.mrb[0].mxu0
      %336 = vdwg.mxu0
      %v337 = vmul.f32 %v332, 0.35355338
      %v338 = vadd.f32 %v337, %v168
      %v339 = vsel %vm174, %v338, -inf
      %340 = vmax.xlane.f32.xlu0 %v339
      %v341 = vpop.xlane.xlu0 %340
      %v342 = vsub.f32 %v338, %v341
      %v343 = vmul.f32 %v342, 1.442695
      %v344 = vpow.pop %v343
      %v345 = vsel %vm174, %v344, 0.0
      %346 = vadd.xlane.f32.xlu0 %v345
      %v347 = vpop.xlane.xlu0 %346
      %v348 = vrcp.pop %v347
      %v349 = vmul.f32 %v344, %v348
      %v350 = vpack.c.bf16 %v349, %v349
      %351 = vrot.lane.b32.xlu0 %v171, 56
      %v352 = vpop.permute.xlu0 %351
      %v354 = vsel %vm174, %v350, 0
      %v357 = vsel %vm240, %v352, 0
      %359 = vmatprep.subr.bf16.mxu0 0
      %360 = vmatpush1.bf16.msra.mxu0 %v357
      %361 = vmatprep.subr.bf16.mxu0 0
      %362 = vmatpush1.bf16.msra.mxu0 0
      %363 = vmatprep.subr.bf16.mxu0 0
      %364 = vmatpush1.bf16.msra.mxu0 0
      %365 = vmatprep.subr.bf16.mxu0 0
      %366 = vmatpush1.bf16.msra.mxu0 0
      %367 = vmatprep.subr.bf16.mxu0 0
      %368 = vmatpush1.bf16.msra.mxu0 0
      %369 = vmatprep.subr.bf16.mxu0 0
      %370 = vmatpush1.bf16.msra.mxu0 0
      %371 = vmatprep.subr.bf16.mxu0 0
      %372 = vmatpush1.bf16.msra.mxu0 0
      %373 = vmatprep.subr.bf16.mxu0 0
      %374 = vmatpush1.bf16.msra.mxu0 0
      %375 = vmatprep.subr.bf16.mxu0 0
      %376 = vmatpush1.bf16.msra.mxu0 0
      %377 = vmatprep.subr.bf16.mxu0 0
      %378 = vmatpush1.bf16.msra.mxu0 0
      %379 = vmatprep.subr.bf16.mxu0 0
      %380 = vmatpush1.bf16.msra.mxu0 0
      %381 = vmatprep.subr.bf16.mxu0 0
      %382 = vmatpush1.bf16.msra.mxu0 0
      %383 = vmatprep.subr.bf16.mxu0 0
      %384 = vmatpush1.bf16.msra.mxu0 0
      %385 = vmatprep.subr.bf16.mxu0 0
      %386 = vmatpush1.bf16.msra.mxu0 0
      %387 = vmatprep.subr.bf16.mxu0 0
      %388 = vmatpush1.bf16.msra.mxu0 0
      %389 = vmatprep.subr.bf16.mxu0 0
      %390 = vmatpush1.bf16.msra.mxu0 0
      %391 = vmatprep.mubr.bf16.mxu0 0
      %392 = vmatmul.mubr.bf16.gmra.mrb[0].mxu0 %v354
      %v393 = vpop.f32.mrb[0].mxu0
      %v394 = vadd.f32 0.0, %v393
      %v395 = vpop.f32.mrb[0].mxu0
      %v396 = vpop.f32.mrb[0].mxu0
      %v397 = vpop.f32.mrb[0].mxu0
      %398 = vdwg.mxu0
      %v399 = vpack.c.bf16 %v394, %v394
      %v401 = vunpack.c.l.b16 %v399
      %v402 = vpack.c.b16 %v401, %v401
      %403 = vrot.lane.b32.xlu0 %v402, 8
      %v404 = vpop.permute.xlu0 %403
      %vm406 = vcmask 126016
      %407 = vst.msk [vmem:[%s152] sm:$0xf] %vm406, %v404
      %408 = vrot.lane.b32.xlu0 %v171, 112
      %v409 = vpop.permute.xlu0 %408
      %410 = vrot.lane.b32.xlu0 %v171, 80
      %v411 = vpop.permute.xlu0 %410
      %v413 = vsel %vm174, %v409, 0
      %v416 = vsel %vm174, %v411, 0
      %418 = vmatprep.subr.bf16.mxu0 0
      %419 = vmatpush1.bf16.xpose.msra.mxu0 %v416
      %420 = vmatprep.subr.bf16.mxu0 0
      %421 = vmatpush1.bf16.xpose.msra.mxu0 0
      %422 = vmatprep.subr.bf16.mxu0 0
      %423 = vmatpush1.bf16.xpose.msra.mxu0 0
      %424 = vmatprep.subr.bf16.mxu0 0
      %425 = vmatpush1.bf16.xpose.msra.mxu0 0
      %426 = vmatprep.subr.bf16.mxu0 0
      %427 = vmatpush1.bf16.xpose.msra.mxu0 0
      %428 = vmatprep.subr.bf16.mxu0 0
      %429 = vmatpush1.bf16.xpose.msra.mxu0 0
      %430 = vmatprep.subr.bf16.mxu0 0
      %431 = vmatpush1.bf16.xpose.msra.mxu0 0
      %432 = vmatprep.subr.bf16.mxu0 0
      %433 = vmatpush1.bf16.xpose.msra.mxu0 0
      %434 = vmatprep.subr.bf16.mxu0 0
      %435 = vmatpush1.bf16.xpose.msra.mxu0 0
      %436 = vmatprep.subr.bf16.mxu0 0
      %437 = vmatpush1.bf16.xpose.msra.mxu0 0
      %438 = vmatprep.subr.bf16.mxu0 0
      %439 = vmatpush1.bf16.xpose.msra.mxu0 0
      %440 = vmatprep.subr.bf16.mxu0 0
      %441 = vmatpush1.bf16.xpose.msra.mxu0 0
      %442 = vmatprep.subr.bf16.mxu0 0
      %443 = vmatpush1.bf16.xpose.msra.mxu0 0
      %444 = vmatprep.subr.bf16.mxu0 0
      %445 = vmatpush1.bf16.xpose.msra.mxu0 0
      %446 = vmatprep.subr.bf16.mxu0 0
      %447 = vmatpush1.bf16.xpose.msra.mxu0 0
      %448 = vmatprep.subr.bf16.mxu0 0
      %449 = vmatpush1.bf16.xpose.msra.mxu0 0
      %450 = vmatprep.mubr.bf16.mxu0 0
      %451 = vmatmul.mubr.bf16.gmra.mrb[0].mxu0 %v413
      %v452 = vpop.f32.mrb[0].mxu0
      %v453 = vadd.f32 0.0, %v452
      %v454 = vpop.f32.mrb[0].mxu0
      %v455 = vpop.f32.mrb[0].mxu0
      %v456 = vpop.f32.mrb[0].mxu0
      %457 = vdwg.mxu0
      %v458 = vmul.f32 %v453, 0.35355338
      %v459 = vadd.f32 %v458, %v168
      %v460 = vsel %vm174, %v459, -inf
      %461 = vmax.xlane.f32.xlu0 %v460
      %v462 = vpop.xlane.xlu0 %461
      %v463 = vsub.f32 %v459, %v462
      %v464 = vmul.f32 %v463, 1.442695
      %v465 = vpow.pop %v464
      %v466 = vsel %vm174, %v465, 0.0
      %467 = vadd.xlane.f32.xlu0 %v466
      %v468 = vpop.xlane.xlu0 %467
      %v469 = vrcp.pop %v468
      %v470 = vmul.f32 %v465, %v469
      %v471 = vpack.c.bf16 %v470, %v470
      %472 = vrot.lane.b32.xlu0 %v171, 48
      %v473 = vpop.permute.xlu0 %472
      %v475 = vsel %vm174, %v471, 0
      %v478 = vsel %vm240, %v473, 0
      %480 = vmatprep.subr.bf16.mxu0 0
      %481 = vmatpush1.bf16.msra.mxu0 %v478
      %482 = vmatprep.subr.bf16.mxu0 0
      %483 = vmatpush1.bf16.msra.mxu0 0
      %484 = vmatprep.subr.bf16.mxu0 0
      %485 = vmatpush1.bf16.msra.mxu0 0
      %486 = vmatprep.subr.bf16.mxu0 0
      %487 = vmatpush1.bf16.msra.mxu0 0
      %488 = vmatprep.subr.bf16.mxu0 0
      %489 = vmatpush1.bf16.msra.mxu0 0
      %490 = vmatprep.subr.bf16.mxu0 0
      %491 = vmatpush1.bf16.msra.mxu0 0
      %492 = vmatprep.subr.bf16.mxu0 0
      %493 = vmatpush1.bf16.msra.mxu0 0
      %494 = vmatprep.subr.bf16.mxu0 0
      %495 = vmatpush1.bf16.msra.mxu0 0
      %496 = vmatprep.subr.bf16.mxu0 0
      %497 = vmatpush1.bf16.msra.mxu0 0
      %498 = vmatprep.subr.bf16.mxu0 0
      %499 = vmatpush1.bf16.msra.mxu0 0
      %500 = vmatprep.subr.bf16.mxu0 0
      %501 = vmatpush1.bf16.msra.mxu0 0
      %502 = vmatprep.subr.bf16.mxu0 0
      %503 = vmatpush1.bf16.msra.mxu0 0
      %504 = vmatprep.subr.bf16.mxu0 0
      %505 = vmatpush1.bf16.msra.mxu0 0
      %506 = vmatprep.subr.bf16.mxu0 0
      %507 = vmatpush1.bf16.msra.mxu0 0
      %508 = vmatprep.subr.bf16.mxu0 0
      %509 = vmatpush1.bf16.msra.mxu0 0
      %510 = vmatprep.subr.bf16.mxu0 0
      %511 = vmatpush1.bf16.msra.mxu0 0
      %512 = vmatprep.mubr.bf16.mxu0 0
      %513 = vmatmul.mubr.bf16.gmra.mrb[0].mxu0 %v475
      %v514 = vpop.f32.mrb[0].mxu0
      %v515 = vadd.f32 0.0, %v514
      %v516 = vpop.f32.mrb[0].mxu0
      %v517 = vpop.f32.mrb[0].mxu0
      %v518 = vpop.f32.mrb[0].mxu0
      %519 = vdwg.mxu0
      %v520 = vpack.c.bf16 %v515, %v515
      %v522 = vunpack.c.l.b16 %v520
      %v523 = vpack.c.b16 %v522, %v522
      %524 = vrot.lane.b32.xlu0 %v523, 16
      %v525 = vpop.permute.xlu0 %524
      %vm527 = vcmask 191616
      %528 = vst.msk [vmem:[%s152] sm:$0xf] %vm527, %v525
      %529 = vrot.lane.b32.xlu0 %v171, 104
      %v530 = vpop.permute.xlu0 %529
      %531 = vrot.lane.b32.xlu0 %v171, 72
      %v532 = vpop.permute.xlu0 %531
      %v534 = vsel %vm174, %v530, 0
      %v537 = vsel %vm174, %v532, 0
      %539 = vmatprep.subr.bf16.mxu0 0
      %540 = vmatpush1.bf16.xpose.msra.mxu0 %v537
      %541 = vmatprep.subr.bf16.mxu0 0
      %542 = vmatpush1.bf16.xpose.msra.mxu0 0
      %543 = vmatprep.subr.bf16.mxu0 0
      %544 = vmatpush1.bf16.xpose.msra.mxu0 0
      %545 = vmatprep.subr.bf16.mxu0 0
      %546 = vmatpush1.bf16.xpose.msra.mxu0 0
      %547 = vmatprep.subr.bf16.mxu0 0
      %548 = vmatpush1.bf16.xpose.msra.mxu0 0
      %549 = vmatprep.subr.bf16.mxu0 0
      %550 = vmatpush1.bf16.xpose.msra.mxu0 0
      %551 = vmatprep.subr.bf16.mxu0 0
      %552 = vmatpush1.bf16.xpose.msra.mxu0 0
      %553 = vmatprep.subr.bf16.mxu0 0
      %554 = vmatpush1.bf16.xpose.msra.mxu0 0
      %555 = vmatprep.subr.bf16.mxu0 0
      %556 = vmatpush1.bf16.xpose.msra.mxu0 0
      %557 = vmatprep.subr.bf16.mxu0 0
      %558 = vmatpush1.bf16.xpose.msra.mxu0 0
      %559 = vmatprep.subr.bf16.mxu0 0
      %560 = vmatpush1.bf16.xpose.msra.mxu0 0
      %561 = vmatprep.subr.bf16.mxu0 0
      %562 = vmatpush1.bf16.xpose.msra.mxu0 0
      %563 = vmatprep.subr.bf16.mxu0 0
      %564 = vmatpush1.bf16.xpose.msra.mxu0 0
      %565 = vmatprep.subr.bf16.mxu0 0
      %566 = vmatpush1.bf16.xpose.msra.mxu0 0
      %567 = vmatprep.subr.bf16.mxu0 0
      %568 = vmatpush1.bf16.xpose.msra.mxu0 0
      %569 = vmatprep.subr.bf16.mxu0 0
      %570 = vmatpush1.bf16.xpose.msra.mxu0 0
      %571 = vmatprep.mubr.bf16.mxu0 0
      %572 = vmatmul.mubr.bf16.gmra.mrb[0].mxu0 %v534
      %v573 = vpop.f32.mrb[0].mxu0
      %v574 = vadd.f32 0.0, %v573
      %v575 = vpop.f32.mrb[0].mxu0
      %v576 = vpop.f32.mrb[0].mxu0
      %v577 = vpop.f32.mrb[0].mxu0
      %578 = vdwg.mxu0
      %v579 = vmul.f32 %v574, 0.35355338
      %v580 = vadd.f32 %v579, %v168
      %v581 = vsel %vm174, %v580, -inf
      %582 = vmax.xlane.f32.xlu0 %v581
      %v583 = vpop.xlane.xlu0 %582
      %v584 = vsub.f32 %v580, %v583
      %v585 = vmul.f32 %v584, 1.442695
      %v586 = vpow.pop %v585
      %v587 = vsel %vm174, %v586, 0.0
      %588 = vadd.xlane.f32.xlu0 %v587
      %v589 = vpop.xlane.xlu0 %588
      %v590 = vrcp.pop %v589
      %v591 = vmul.f32 %v586, %v590
      %v592 = vpack.c.bf16 %v591, %v591
      %593 = vrot.lane.b32.xlu0 %v171, 40
      %v594 = vpop.permute.xlu0 %593
      %v596 = vsel %vm174, %v592, 0
      %v599 = vsel %vm240, %v594, 0
      %601 = vmatprep.subr.bf16.mxu0 0
      %602 = vmatpush1.bf16.msra.mxu0 %v599
      %603 = vmatprep.subr.bf16.mxu0 0
      %604 = vmatpush1.bf16.msra.mxu0 0
      %605 = vmatprep.subr.bf16.mxu0 0
      %606 = vmatpush1.bf16.msra.mxu0 0
      %607 = vmatprep.subr.bf16.mxu0 0
      %608 = vmatpush1.bf16.msra.mxu0 0
      %609 = vmatprep.subr.bf16.mxu0 0
      %610 = vmatpush1.bf16.msra.mxu0 0
      %611 = vmatprep.subr.bf16.mxu0 0
      %612 = vmatpush1.bf16.msra.mxu0 0
      %613 = vmatprep.subr.bf16.mxu0 0
      %614 = vmatpush1.bf16.msra.mxu0 0
      %615 = vmatprep.subr.bf16.mxu0 0
      %616 = vmatpush1.bf16.msra.mxu0 0
      %617 = vmatprep.subr.bf16.mxu0 0
      %618 = vmatpush1.bf16.msra.mxu0 0
      %619 = vmatprep.subr.bf16.mxu0 0
      %620 = vmatpush1.bf16.msra.mxu0 0
      %621 = vmatprep.subr.bf16.mxu0 0
      %622 = vmatpush1.bf16.msra.mxu0 0
      %623 = vmatprep.subr.bf16.mxu0 0
      %624 = vmatpush1.bf16.msra.mxu0 0
      %625 = vmatprep.subr.bf16.mxu0 0
      %626 = vmatpush1.bf16.msra.mxu0 0
      %627 = vmatprep.subr.bf16.mxu0 0
      %628 = vmatpush1.bf16.msra.mxu0 0
      %629 = vmatprep.subr.bf16.mxu0 0
      %630 = vmatpush1.bf16.msra.mxu0 0
      %631 = vmatprep.subr.bf16.mxu0 0
      %632 = vmatpush1.bf16.msra.mxu0 0
      %633 = vmatprep.mubr.bf16.mxu0 0
      %634 = vmatmul.mubr.bf16.gmra.mrb[0].mxu0 %v596
      %v635 = vpop.f32.mrb[0].mxu0
      %v636 = vadd.f32 0.0, %v635
      %v637 = vpop.f32.mrb[0].mxu0
      %v638 = vpop.f32.mrb[0].mxu0
      %v639 = vpop.f32.mrb[0].mxu0
      %640 = vdwg.mxu0
      %v641 = vpack.c.bf16 %v636, %v636
      %v643 = vunpack.c.l.b16 %v641
      %v644 = vpack.c.b16 %v643, %v643
      %645 = vrot.lane.b32.xlu0 %v644, 24
      %v646 = vpop.permute.xlu0 %645
      %vm648 = vcmask 257216
      %649 = vst.msk [vmem:[%s152] sm:$0xf] %vm648, %v646
      %p650 = scmp.lt.s32.totalorder %s13, 1
      %s651 = scalar_select %p650, %s13, 1
      %s652 = smul.addr %s651, 4
      %s653 = scalar_lea.vmem %s2, %s652
      // Predicated region
      $region29: #{_lambda_.18} parent=27 // pred_check
        %p654 = pneg %p83
      $region30: #{_lambda_.18} parent=27 // pred_check_branch
        %656 = sbr.rel (%p654) target = $region32
      $region31: #{_lambda_.18} parent=27 // pred_region
        _
      $region32: #{_lambda_.18} parent=27 // pred_fallthru
        _
    $region28: #{_lambda_.18} parent=5 // pred_fallthru
      _
    %p657 = scmp.le.s32.totalorder 2, %s8
    // Predicated region
    $region33: #{_lambda_.18} parent=5 // pred_check
      %p658 = pneg %p657
    $region34: #{_lambda_.18} parent=5 // pred_check_branch
      %660 = sbr.rel (%p658) target = $region36
    $region35: #{_lambda_.18} parent=5 // pred_region
      %s661 = ssub.s32 %s8, 2
      // Predicated region
      $region37: #{_lambda_.18} parent=35 // pred_check
        %p662 = pneg %p89
      $region38: #{_lambda_.18} parent=35 // pred_check_branch
        %664 = sbr.rel (%p662) target = $region40
      $region39: #{_lambda_.18} parent=35 // pred_region
        %p665 = scmp.lt.s32.totalorder %s14, 1
        %s666 = scalar_select %p665, %s14, 1
        %s667 = smul.addr %s666, 4
        %s668 = scalar_lea.vmem %s2, %s667
      $region40: #{_lambda_.18} parent=35 // pred_fallthru
        _
    $region36: #{_lambda_.18} parent=5 // pred_fallthru
      _
  $region6: #{_lambda_.18} parent=0 // loop_footer
    %s12 = sadd.s32 1, %s8
  $region7: #{_lambda_.18} parent=0 // loop_footer_branch
    %7 = sbr.rel target = $region3
  $region8: #{_lambda_.18} parent=0 // loop_exit
    _

// kernel: _lambda_.22
$region0: #{_lambda_.22}
  #allocation0 [shape = 'u32[]', space=smem, size = 0x4, offset = 0x4, fixed_abs, tag = 'smem constant byte address 0x4 - core index']
  #allocation1 [shape = 'u32[144,128]{1,0:T(1,128)}', space=vmem, size = 0x12000, scoped, tag = 'internal scratch']
  %s0 = inlined_call_operand.vmem [shape: bf16[2,8,32], index: 0, kind: input, shape index: {}]
  %s1 = inlined_call_operand.vmem [shape: bf16[2,8,64], index: 1, kind: input, shape index: {}]
  %s2 = inlined_call_operand.vmem [shape: f32[2,1,8], index: 2, kind: input, shape index: {}]
  %s3 = inlined_call_operand.vmem [shape: bf16[2,8,32], index: 3, kind: output, shape index: {}]
  %s4 = sld [smem:[#allocation0]]
  $region45: #{_lambda_.22} parent=0
    _
  %s6 = ssub.s32 1, %s4
  %s7 = scalar_select 0, %s6, %s4
  loop: start=0, step=1, limit=4
  $region2: #{_lambda_.22} parent=0 // loop_pre_header
    _
  $region3: #{_lambda_.22} parent=0 // loop_header
    %s9 = sphi 0, %s13
    %p10 = scmp.ge.s32.totalorder %s9, 4
    %s19 = sphi 0, %s21
    %s22 = sphi 0, %s19
    %s23 = sphi 0, %s22
    %s39 = sphi 0, %s23
    %s45 = sphi 0, %s47
    %s48 = sphi 0, %s45
    %s49 = sphi 0, %s48
    %s65 = sphi 0, %s49
    %s71 = sphi 0, %s73
    %s74 = sphi 0, %s71
    %s75 = sphi 0, %s74
    %s91 = sphi 0, %s75
    %s97 = sphi 0, %s99
    %s100 = sphi 0, %s97
    %s101 = sphi 0, %s100
    %s117 = sphi 0, %s101
  $region4: #{_lambda_.22} parent=0 // loop_header_branch
    %12 = sbr.rel (%p10) target = $region8
  $region5: #{_lambda_.22} parent=0 // loop_body
    %s14 = ssub.s32 %s9, 1
    %s15 = ssub.s32 %s9, 2
    %s16 = sadd.s32 %s9, 1
    %s17 = ssub.s32 %s9, %s16
    %p18 = scmp.eq.s32.totalorder %s17, 0
    %s20 = sadd.s32 %s19, 1
    %s21 = scalar_select %p18, %s19, %s20
    %p24 = pneg %p18
    %p25 = scmp.eq.s32.totalorder %s9, 1
    %p26 = por %p24, %p25
    %p27 = scmp.ne.s32.totalorder %s19, %s22
    %p28 = scmp.eq.s32.totalorder %s9, 0
    %p29 = por %p27, %p28
    %p30 = scmp.ne.s32.totalorder %s19, %s22
    %p31 = scmp.eq.s32.totalorder %s14, 1
    %p32 = por %p30, %p31
    %p33 = scmp.ne.s32.totalorder %s22, %s23
    %p34 = scmp.eq.s32.totalorder %s14, 0
    %p35 = por %p33, %p34
    %p36 = scmp.ne.s32.totalorder %s22, %s23
    %p37 = scmp.eq.s32.totalorder %s15, 1
    %p38 = por %p36, %p37
    %p40 = scmp.ne.s32.totalorder %s23, %s39
    %p41 = scmp.eq.s32.totalorder %s15, 0
    %p42 = por %p40, %p41
    %s43 = ssub.s32 %s9, %s16
    %p44 = scmp.eq.s32.totalorder %s43, 0
    %s46 = sadd.s32 %s45, 1
    %s47 = scalar_select %p44, %s45, %s46
    %p50 = pneg %p44
    %p51 = scmp.eq.s32.totalorder %s9, 1
    %p52 = por %p50, %p51
    %p53 = scmp.ne.s32.totalorder %s45, %s48
    %p54 = scmp.eq.s32.totalorder %s9, 0
    %p55 = por %p53, %p54
    %p56 = scmp.ne.s32.totalorder %s45, %s48
    %p57 = scmp.eq.s32.totalorder %s14, 1
    %p58 = por %p56, %p57
    %p59 = scmp.ne.s32.totalorder %s48, %s49
    %p60 = scmp.eq.s32.totalorder %s14, 0
    %p61 = por %p59, %p60
    %p62 = scmp.ne.s32.totalorder %s48, %s49
    %p63 = scmp.eq.s32.totalorder %s15, 1
    %p64 = por %p62, %p63
    %p66 = scmp.ne.s32.totalorder %s49, %s65
    %p67 = scmp.eq.s32.totalorder %s15, 0
    %p68 = por %p66, %p67
    %s69 = ssub.s32 %s9, %s16
    %p70 = scmp.eq.s32.totalorder %s69, 0
    %s72 = sadd.s32 %s71, 1
    %s73 = scalar_select %p70, %s71, %s72
    %p76 = pneg %p70
    %p77 = scmp.eq.s32.totalorder %s9, 1
    %p78 = por %p76, %p77
    %p79 = scmp.ne.s32.totalorder %s71, %s74
    %p80 = scmp.eq.s32.totalorder %s9, 0
    %p81 = por %p79, %p80
    %p82 = scmp.ne.s32.totalorder %s71, %s74
    %p83 = scmp.eq.s32.totalorder %s14, 1
    %p84 = por %p82, %p83
    %p85 = scmp.ne.s32.totalorder %s74, %s75
    %p86 = scmp.eq.s32.totalorder %s14, 0
    %p87 = por %p85, %p86
    %p88 = scmp.ne.s32.totalorder %s74, %s75
    %p89 = scmp.eq.s32.totalorder %s15, 1
    %p90 = por %p88, %p89
    %p92 = scmp.ne.s32.totalorder %s75, %s91
    %p93 = scmp.eq.s32.totalorder %s15, 0
    %p94 = por %p92, %p93
    %s95 = ssub.s32 %s9, %s16
    %p96 = scmp.eq.s32.totalorder %s95, 0
    %s98 = sadd.s32 %s97, 1
    %s99 = scalar_select %p96, %s97, %s98
    %p102 = pneg %p96
    %p103 = scmp.eq.s32.totalorder %s9, 1
    %p104 = por %p102, %p103
    %p105 = scmp.ne.s32.totalorder %s97, %s100
    %p106 = scmp.eq.s32.totalorder %s9, 0
    %p107 = por %p105, %p106
    %p108 = scmp.ne.s32.totalorder %s97, %s100
    %p109 = scmp.eq.s32.totalorder %s14, 1
    %p110 = por %p108, %p109
    %p111 = scmp.ne.s32.totalorder %s100, %s101
    %p112 = scmp.eq.s32.totalorder %s14, 0
    %p113 = por %p111, %p112
    %p114 = scmp.ne.s32.totalorder %s100, %s101
    %p115 = scmp.eq.s32.totalorder %s15, 1
    %p116 = por %p114, %p115
    %p118 = scmp.ne.s32.totalorder %s101, %s117
    %p119 = scmp.eq.s32.totalorder %s15, 0
    %p120 = por %p118, %p119
    %p121 = scmp.le.s32.totalorder 1, %s9
    %p122 = scmp.lt.s32.totalorder %s9, 3
    %p123 = pnand %p121, %p122
    %p124 = pneg %p123
    // Predicated region
    $region9: #{_lambda_.22} parent=5 // pred_check
      _
    $region10: #{_lambda_.22} parent=5 // pred_check_branch
      %126 = sbr.rel (%p123) target = $region12
    $region11: #{_lambda_.22} parent=5 // pred_region
      %s127 = ssub.s32 %s9, 1
    $region12: #{_lambda_.22} parent=5 // pred_fallthru
      _
    %p128 = scmp.lt.s32.totalorder %s9, 2
    // Predicated region
    $region13: #{_lambda_.22} parent=5 // pred_check
      %p129 = pneg %p128
    $region14: #{_lambda_.22} parent=5 // pred_check_branch
      %131 = sbr.rel (%p129) target = $region16
    $region15: #{_lambda_.22} parent=5 // pred_region
      // Predicated region
      $region17: #{_lambda_.22} parent=15 // pred_check
        %p132 = pneg %p29
      $region18: #{_lambda_.22} parent=15 // pred_check_branch
        %134 = sbr.rel (%p132) target = $region20
      $region19: #{_lambda_.22} parent=15 // pred_region
        %p135 = scmp.lt.s32.totalorder %s9, 1
        %s136 = scalar_select %p135, %s9, 1
        %s137 = smul.addr %s136, 4
        %s138 = scalar_lea.vmem %s0, %s137
      $region20: #{_lambda_.22} parent=15 // pred_fallthru
        _
      // Predicated region
      $region21: #{_lambda_.22} parent=15 // pred_check
        %p139 = pneg %p55
      $region22: #{_lambda_.22} parent=15 // pred_check_branch
        %141 = sbr.rel (%p139) target = $region24
      $region23: #{_lambda_.22} parent=15 // pred_region
        %p142 = scmp.lt.s32.totalorder %s9, 1
        %s143 = scalar_select %p142, %s9, 1
        %s144 = smul.addr %s143, 4
        %s145 = scalar_lea.vmem %s1, %s144
      $region24: #{_lambda_.22} parent=15 // pred_fallthru
        _
      // Predicated region
      $region25: #{_lambda_.22} parent=15 // pred_check
        %p146 = pneg %p81
      $region26: #{_lambda_.22} parent=15 // pred_check_branch
        %148 = sbr.rel (%p146) target = $region28
      $region27: #{_lambda_.22} parent=15 // pred_region
        %p149 = scmp.lt.s32.totalorder %s9, 1
        %s150 = scalar_select %p149, %s9, 1
        %s151 = scalar_lea.vmem %s2, %s150
      $region28: #{_lambda_.22} parent=15 // pred_fallthru
        _
    $region16: #{_lambda_.22} parent=5 // pred_fallthru
      _
    %p152 = scmp.le.s32.totalorder 1, %s9
    %p153 = scmp.lt.s32.totalorder %s9, 3
    %p154 = pnand %p152, %p153
    %p155 = pneg %p154
    // Predicated region
    $region29: #{_lambda_.22} parent=5 // pred_check
      _
    $region30: #{_lambda_.22} parent=5 // pred_check_branch
      %157 = sbr.rel (%p154) target = $region32
    $region31: #{_lambda_.22} parent=5 // pred_region
      %s158 = ssub.s32 %s9, 1
      %p159 = scmp.lt.s32.totalorder %s14, 1
      %s160 = scalar_select %p159, %s14, 1
      %s161 = smul.addr %s160, 4
      %s162 = scalar_lea.vmem %s0, %s161
      %p163 = pneg %p35
      %p164 = pneg %p32
      %p165 = scmp.lt.s32.totalorder %s14, 1
      %s166 = scalar_select %p165, %s14, 1
      %s167 = smul.addr %s166, 4
      %s168 = scalar_lea.vmem %s1, %s167
      %p169 = pneg %p61
      %p170 = pneg %p58
      %p171 = scmp.lt.s32.totalorder %s14, 1
      %s172 = scalar_select %p171, %s14, 1
      %s173 = scalar_lea.vmem %s2, %s172
      %p174 = pneg %p87
      %p175 = pneg %p84
      %p176 = pneg %p113
      %p177 = pneg %p110
      %p178 = scmp.lt.s32.totalorder %s14, 1
      %s179 = scalar_select %p178, %s14, 1
      %s180 = smul.addr %s179, 4
      %s181 = scalar_lea.vmem %s3, %s180
      %p182 = scmp.lt.s32.totalorder %s14, 1
      %s183 = scalar_select %p182, %s14, 1
      %s184 = smul.addr %s183, 4
      %s185 = scalar_lea.vmem %s0, %s184
      %p186 = scmp.lt.s32.totalorder %s14, 1
      %s187 = scalar_select %p186, %s14, 1
      %s188 = smul.addr %s187, 4
      %s189 = scalar_lea.vmem %s1, %s188
      %p190 = scmp.lt.s32.totalorder %s14, 1
      %s191 = scalar_select %p190, %s14, 1
      %s192 = scalar_lea.vmem %s2, %s191
      %p193 = scmp.lt.s32.totalorder %s14, 1
      %s194 = scalar_select %p193, %s14, 1
      %s195 = smul.addr %s194, 4
      %s196 = scalar_lea.vmem %s3, %s195
      %v198 = vld [vmem:[%s185] sm:$0xf]
      %v199 = vld [vmem:[%s189] sm:$0xf]
      %v200 = vld [vmem:[%s192] sm:$0x1]
      %vm201 = vcmask 64512
      %v203 = vsel %vm201, %v198, 0
      %v206 = vsel %vm201, %v199, 0
      %208 = vmatprep.subr.bf16.mxu0 0
      %209 = vmatpush1.bf16.xpose.msra.mxu0 %v206
      %210 = vmatprep.subr.bf16.mxu0 0
      %211 = vmatpush1.bf16.xpose.msra.mxu0 0
      %212 = vmatprep.subr.bf16.mxu0 0
      %213 = vmatpush1.bf16.xpose.msra.mxu0 0
      %214 = vmatprep.subr.bf16.mxu0 0
      %215 = vmatpush1.bf16.xpose.msra.mxu0 0
      %216 = vmatprep.subr.bf16.mxu0 0
      %217 = vmatpush1.bf16.xpose.msra.mxu0 0
      %218 = vmatprep.subr.bf16.mxu0 0
      %219 = vmatpush1.bf16.xpose.msra.mxu0 0
      %220 = vmatprep.subr.bf16.mxu0 0
      %221 = vmatpush1.bf16.xpose.msra.mxu0 0
      %222 = vmatprep.subr.bf16.mxu0 0
      %223 = vmatpush1.bf16.xpose.msra.mxu0 0
      %224 = vmatprep.subr.bf16.mxu0 0
      %225 = vmatpush1.bf16.xpose.msra.mxu0 0
      %226 = vmatprep.subr.bf16.mxu0 0
      %227 = vmatpush1.bf16.xpose.msra.mxu0 0
      %228 = vmatprep.subr.bf16.mxu0 0
      %229 = vmatpush1.bf16.xpose.msra.mxu0 0
      %230 = vmatprep.subr.bf16.mxu0 0
      %231 = vmatpush1.bf16.xpose.msra.mxu0 0
      %232 = vmatprep.subr.bf16.mxu0 0
      %233 = vmatpush1.bf16.xpose.msra.mxu0 0
      %234 = vmatprep.subr.bf16.mxu0 0
      %235 = vmatpush1.bf16.xpose.msra.mxu0 0
      %236 = vmatprep.subr.bf16.mxu0 0
      %237 = vmatpush1.bf16.xpose.msra.mxu0 0
      %238 = vmatprep.subr.bf16.mxu0 0
      %239 = vmatpush1.bf16.xpose.msra.mxu0 0
      %240 = vmatprep.mubr.bf16.mxu0 0
      %241 = vmatmul.mubr.bf16.gmra.mrb[0].mxu0 %v203
      %v242 = vpop.f32.mrb[0].mxu0
      %v243 = vadd.f32 0.0, %v242
      %v244 = vpop.f32.mrb[0].mxu0
      %v245 = vpop.f32.mrb[0].mxu0
      %v246 = vpop.f32.mrb[0].mxu0
      %247 = vdwg.mxu0
      %v248 = vmul.f32 %v243, 0.35355338
      %v250 = vlaneseq
      %v251 = vshrl.u32 %v250, 7
      %v252 = vsub.s32 0, %v251
      %v253 = vrot.slane %v200, %v252
      %v255 = vadd.f32 %v248, %v253
      %v256 = vsel %vm201, %v255, -inf
      %257 = vmax.xlane.f32.xlu0 %v256
      %v258 = vpop.xlane.xlu0 %257
      %v259 = vsub.f32 %v255, %v258
      %v260 = vmul.f32 %v259, 1.442695
      %v261 = vpow.pop %v260
      %v262 = vsel %vm201, %v261, 0.0
      %263 = vadd.xlane.f32.xlu0 %v262
      %v264 = vpop.xlane.xlu0 %263
      %v265 = vrcp.pop %v264
      %v266 = vmul.f32 %v261, %v265
      %v267 = vpack.c.bf16 %v266, %v266
      %v269 = vunpack.c.l.b16 %v199
      %v270 = vpack.c.b16 %v269, %v269
      %271 = vrot.lane.b32.xlu0 %v270, 96
      %v272 = vpop.permute.xlu0 %271
      %v274 = vsel %vm201, %v267, 0
      %vm276 = vcmask 1043456
      %v278 = vsel %vm276, %v272, 0
      %280 = vmatprep.subr.bf16.mxu0 0
      %281 = vmatpush1.bf16.msra.mxu0 %v278
      %282 = vmatprep.subr.bf16.mxu0 0
      %283 = vmatpush1.bf16.msra.mxu0 0
      %284 = vmatprep.subr.bf16.mxu0 0
      %285 = vmatpush1.bf16.msra.mxu0 0
      %286 = vmatprep.subr.bf16.mxu0 0
      %287 = vmatpush1.bf16.msra.mxu0 0
      %288 = vmatprep.subr.bf16.mxu0 0
      %289 = vmatpush1.bf16.msra.mxu0 0
      %290 = vmatprep.subr.bf16.mxu0 0
      %291 = vmatpush1.bf16.msra.mxu0 0
      %292 = vmatprep.subr.bf16.mxu0 0
      %293 = vmatpush1.bf16.msra.mxu0 0
      %294 = vmatprep.subr.bf16.mxu0 0
      %295 = vmatpush1.bf16.msra.mxu0 0
      %296 = vmatprep.subr.bf16.mxu0 0
      %297 = vmatpush1.bf16.msra.mxu0 0
      %298 = vmatprep.subr.bf16.mxu0 0
      %299 = vmatpush1.bf16.msra.mxu0 0
      %300 = vmatprep.subr.bf16.mxu0 0
      %301 = vmatpush1.bf16.msra.mxu0 0
      %302 = vmatprep.subr.bf16.mxu0 0
      %303 = vmatpush1.bf16.msra.mxu0 0
      %304 = vmatprep.subr.bf16.mxu0 0
      %305 = vmatpush1.bf16.msra.mxu0 0
      %306 = vmatprep.subr.bf16.mxu0 0
      %307 = vmatpush1.bf16.msra.mxu0 0
      %308 = vmatprep.subr.bf16.mxu0 0
      %309 = vmatpush1.bf16.msra.mxu0 0
      %310 = vmatprep.subr.bf16.mxu0 0
      %311 = vmatpush1.bf16.msra.mxu0 0
      %312 = vmatprep.mubr.bf16.mxu0 0
      %313 = vmatmul.mubr.bf16.gmra.mrb[0].mxu0 %v274
      %v314 = vpop.f32.mrb[0].mxu0
      %v315 = vadd.f32 0.0, %v314
      %v316 = vpop.f32.mrb[0].mxu0
      %v317 = vpop.f32.mrb[0].mxu0
      %v318 = vpop.f32.mrb[0].mxu0
      %319 = vdwg.mxu0
      %v320 = vpack.c.bf16 %v315, %v315
      %vm321 = vcmask 60416
      %322 = vst.msk [vmem:[%s196] sm:$0xf] %vm321, %v320
      %v324 = vunpack.c.l.b16 %v198
      %v325 = vpack.c.b16 %v324, %v324
      %326 = vrot.lane.b32.xlu0 %v325, 120
      %v327 = vpop.permute.xlu0 %326
      %328 = vrot.lane.b32.xlu0 %v270, 120
      %v329 = vpop.permute.xlu0 %328
      %v331 = vsel %vm201, %v327, 0
      %v334 = vsel %vm201, %v329, 0
      %336 = vmatprep.subr.bf16.mxu0 0
      %337 = vmatpush1.bf16.xpose.msra.mxu0 %v334
      %338 = vmatprep.subr.bf16.mxu0 0
      %339 = vmatpush1.bf16.xpose.msra.mxu0 0
      %340 = vmatprep.subr.bf16.mxu0 0
      %341 = vmatpush1.bf16.xpose.msra.mxu0 0
      %342 = vmatprep.subr.bf16.mxu0 0
      %343 = vmatpush1.bf16.xpose.msra.mxu0 0
      %344 = vmatprep.subr.bf16.mxu0 0
      %345 = vmatpush1.bf16.xpose.msra.mxu0 0
      %346 = vmatprep.subr.bf16.mxu0 0
      %347 = vmatpush1.bf16.xpose.msra.mxu0 0
      %348 = vmatprep.subr.bf16.mxu0 0
      %349 = vmatpush1.bf16.xpose.msra.mxu0 0
      %350 = vmatprep.subr.bf16.mxu0 0
      %351 = vmatpush1.bf16.xpose.msra.mxu0 0
      %352 = vmatprep.subr.bf16.mxu0 0
      %353 = vmatpush1.bf16.xpose.msra.mxu0 0
      %354 = vmatprep.subr.bf16.mxu0 0
      %355 = vmatpush1.bf16.xpose.msra.mxu0 0
      %356 = vmatprep.subr.bf16.mxu0 0
      %357 = vmatpush1.bf16.xpose.msra.mxu0 0
      %358 = vmatprep.subr.bf16.mxu0 0
      %359 = vmatpush1.bf16.xpose.msra.mxu0 0
      %360 = vmatprep.subr.bf16.mxu0 0
      %361 = vmatpush1.bf16.xpose.msra.mxu0 0
      %362 = vmatprep.subr.bf16.mxu0 0
      %363 = vmatpush1.bf16.xpose.msra.mxu0 0
      %364 = vmatprep.subr.bf16.mxu0 0
      %365 = vmatpush1.bf16.xpose.msra.mxu0 0
      %366 = vmatprep.subr.bf16.mxu0 0
      %367 = vmatpush1.bf16.xpose.msra.mxu0 0
      %368 = vmatprep.mubr.bf16.mxu0 0
      %369 = vmatmul.mubr.bf16.gmra.mrb[0].mxu0 %v331
      %v370 = vpop.f32.mrb[0].mxu0
      %v371 = vadd.f32 0.0, %v370
      %v372 = vpop.f32.mrb[0].mxu0
      %v373 = vpop.f32.mrb[0].mxu0
      %v374 = vpop.f32.mrb[0].mxu0
      %375 = vdwg.mxu0
      %v376 = vmul.f32 %v371, 0.35355338
      %v377 = vadd.f32 %v376, %v253
      %v378 = vsel %vm201, %v377, -inf
      %379 = vmax.xlane.f32.xlu0 %v378
      %v380 = vpop.xlane.xlu0 %379
      %v381 = vsub.f32 %v377, %v380
      %v382 = vmul.f32 %v381, 1.442695
      %v383 = vpow.pop %v382
      %v384 = vsel %vm201, %v383, 0.0
      %385 = vadd.xlane.f32.xlu0 %v384
      %v386 = vpop.xlane.xlu0 %385
      %v387 = vrcp.pop %v386
      %v388 = vmul.f32 %v383, %v387
      %v389 = vpack.c.bf16 %v388, %v388
      %390 = vrot.lane.b32.xlu0 %v270, 88
      %v391 = vpop.permute.xlu0 %390
      %v393 = vsel %vm201, %v389, 0
      %v396 = vsel %vm276, %v391, 0
      %398 = vmatprep.subr.bf16.mxu0 0
      %399 = vmatpush1.bf16.msra.mxu0 %v396
      %400 = vmatprep.subr.bf16.mxu0 0
      %401 = vmatpush1.bf16.msra.mxu0 0
      %402 = vmatprep.subr.bf16.mxu0 0
      %403 = vmatpush1.bf16.msra.mxu0 0
      %404 = vmatprep.subr.bf16.mxu0 0
      %405 = vmatpush1.bf16.msra.mxu0 0
      %406 = vmatprep.subr.bf16.mxu0 0
      %407 = vmatpush1.bf16.msra.mxu0 0
      %408 = vmatprep.subr.bf16.mxu0 0
      %409 = vmatpush1.bf16.msra.mxu0 0
      %410 = vmatprep.subr.bf16.mxu0 0
      %411 = vmatpush1.bf16.msra.mxu0 0
      %412 = vmatprep.subr.bf16.mxu0 0
      %413 = vmatpush1.bf16.msra.mxu0 0
      %414 = vmatprep.subr.bf16.mxu0 0
      %415 = vmatpush1.bf16.msra.mxu0 0
      %416 = vmatprep.subr.bf16.mxu0 0
      %417 = vmatpush1.bf16.msra.mxu0 0
      %418 = vmatprep.subr.bf16.mxu0 0
      %419 = vmatpush1.bf16.msra.mxu0 0
      %420 = vmatprep.subr.bf16.mxu0 0
      %421 = vmatpush1.bf16.msra.mxu0 0
      %422 = vmatprep.subr.bf16.mxu0 0
      %423 = vmatpush1.bf16.msra.mxu0 0
      %424 = vmatprep.subr.bf16.mxu0 0
      %425 = vmatpush1.bf16.msra.mxu0 0
      %426 = vmatprep.subr.bf16.mxu0 0
      %427 = vmatpush1.bf16.msra.mxu0 0
      %428 = vmatprep.subr.bf16.mxu0 0
      %429 = vmatpush1.bf16.msra.mxu0 0
      %430 = vmatprep.mubr.bf16.mxu0 0
      %431 = vmatmul.mubr.bf16.gmra.mrb[0].mxu0 %v393
      %v432 = vpop.f32.mrb[0].mxu0
      %v433 = vadd.f32 0.0, %v432
      %v434 = vpop.f32.mrb[0].mxu0
      %v435 = vpop.f32.mrb[0].mxu0
      %v436 = vpop.f32.mrb[0].mxu0
      %437 = vdwg.mxu0
      %v438 = vpack.c.bf16 %v433, %v433
      %v440 = vunpack.c.l.b16 %v438
      %v441 = vpack.c.b16 %v440, %v440
      %442 = vrot.lane.b32.xlu0 %v441, 8
      %v443 = vpop.permute.xlu0 %442
      %vm445 = vcmask 126016
      %446 = vst.msk [vmem:[%s196] sm:$0xf] %vm445, %v443
      %447 = vrot.lane.b32.xlu0 %v325, 112
      %v448 = vpop.permute.xlu0 %447
      %449 = vrot.lane.b32.xlu0 %v270, 112
      %v450 = vpop.permute.xlu0 %449
      %v452 = vsel %vm201, %v448, 0
      %v455 = vsel %vm201, %v450, 0
      %457 = vmatprep.subr.bf16.mxu0 0
      %458 = vmatpush1.bf16.xpose.msra.mxu0 %v455
      %459 = vmatprep.subr.bf16.mxu0 0
      %460 = vmatpush1.bf16.xpose.msra.mxu0 0
      %461 = vmatprep.subr.bf16.mxu0 0
      %462 = vmatpush1.bf16.xpose.msra.mxu0 0
      %463 = vmatprep.subr.bf16.mxu0 0
      %464 = vmatpush1.bf16.xpose.msra.mxu0 0
      %465 = vmatprep.subr.bf16.mxu0 0
      %466 = vmatpush1.bf16.xpose.msra.mxu0 0
      %467 = vmatprep.subr.bf16.mxu0 0
      %468 = vmatpush1.bf16.xpose.msra.mxu0 0
      %469 = vmatprep.subr.bf16.mxu0 0
      %470 = vmatpush1.bf16.xpose.msra.mxu0 0
      %471 = vmatprep.subr.bf16.mxu0 0
      %472 = vmatpush1.bf16.xpose.msra.mxu0 0
      %473 = vmatprep.subr.bf16.mxu0 0
      %474 = vmatpush1.bf16.xpose.msra.mxu0 0
      %475 = vmatprep.subr.bf16.mxu0 0
      %476 = vmatpush1.bf16.xpose.msra.mxu0 0
      %477 = vmatprep.subr.bf16.mxu0 0
      %478 = vmatpush1.bf16.xpose.msra.mxu0 0
      %479 = vmatprep.subr.bf16.mxu0 0
      %480 = vmatpush1.bf16.xpose.msra.mxu0 0
      %481 = vmatprep.subr.bf16.mxu0 0
      %482 = vmatpush1.bf16.xpose.msra.mxu0 0
      %483 = vmatprep.subr.bf16.mxu0 0
      %484 = vmatpush1.bf16.xpose.msra.mxu0 0
      %485 = vmatprep.subr.bf16.mxu0 0
      %486 = vmatpush1.bf16.xpose.msra.mxu0 0
      %487 = vmatprep.subr.bf16.mxu0 0
      %488 = vmatpush1.bf16.xpose.msra.mxu0 0
      %489 = vmatprep.mubr.bf16.mxu0 0
      %490 = vmatmul.mubr.bf16.gmra.mrb[0].mxu0 %v452
      %v491 = vpop.f32.mrb[0].mxu0
      %v492 = vadd.f32 0.0, %v491
      %v493 = vpop.f32.mrb[0].mxu0
      %v494 = vpop.f32.mrb[0].mxu0
      %v495 = vpop.f32.mrb[0].mxu0
      %496 = vdwg.mxu0
      %v497 = vmul.f32 %v492, 0.35355338
      %v498 = vadd.f32 %v497, %v253
      %v499 = vsel %vm201, %v498, -inf
      %500 = vmax.xlane.f32.xlu0 %v499
      %v501 = vpop.xlane.xlu0 %500
      %v502 = vsub.f32 %v498, %v501
      %v503 = vmul.f32 %v502, 1.442695
      %v504 = vpow.pop %v503
      %v505 = vsel %vm201, %v504, 0.0
      %506 = vadd.xlane.f32.xlu0 %v505
      %v507 = vpop.xlane.xlu0 %506
      %v508 = vrcp.pop %v507
      %v509 = vmul.f32 %v504, %v508
      %v510 = vpack.c.bf16 %v509, %v509
      %511 = vrot.lane.b32.xlu0 %v270, 80
      %v512 = vpop.permute.xlu0 %511
      %v514 = vsel %vm201, %v510, 0
      %v517 = vsel %vm276, %v512, 0
      %519 = vmatprep.subr.bf16.mxu0 0
      %520 = vmatpush1.bf16.msra.mxu0 %v517
      %521 = vmatprep.subr.bf16.mxu0 0
      %522 = vmatpush1.bf16.msra.mxu0 0
      %523 = vmatprep.subr.bf16.mxu0 0
      %524 = vmatpush1.bf16.msra.mxu0 0
      %525 = vmatprep.subr.bf16.mxu0 0
      %526 = vmatpush1.bf16.msra.mxu0 0
      %527 = vmatprep.subr.bf16.mxu0 0
      %528 = vmatpush1.bf16.msra.mxu0 0
      %529 = vmatprep.subr.bf16.mxu0 0
      %530 = vmatpush1.bf16.msra.mxu0 0
      %531 = vmatprep.subr.bf16.mxu0 0
      %532 = vmatpush1.bf16.msra.mxu0 0
      %533 = vmatprep.subr.bf16.mxu0 0
      %534 = vmatpush1.bf16.msra.mxu0 0
      %535 = vmatprep.subr.bf16.mxu0 0
      %536 = vmatpush1.bf16.msra.mxu0 0
      %537 = vmatprep.subr.bf16.mxu0 0
      %538 = vmatpush1.bf16.msra.mxu0 0
      %539 = vmatprep.subr.bf16.mxu0 0
      %540 = vmatpush1.bf16.msra.mxu0 0
      %541 = vmatprep.subr.bf16.mxu0 0
      %542 = vmatpush1.bf16.msra.mxu0 0
      %543 = vmatprep.subr.bf16.mxu0 0
      %544 = vmatpush1.bf16.msra.mxu0 0
      %545 = vmatprep.subr.bf16.mxu0 0
      %546 = vmatpush1.bf16.msra.mxu0 0
      %547 = vmatprep.subr.bf16.mxu0 0
      %548 = vmatpush1.bf16.msra.mxu0 0
      %549 = vmatprep.subr.bf16.mxu0 0
      %550 = vmatpush1.bf16.msra.mxu0 0
      %551 = vmatprep.mubr.bf16.mxu0 0
      %552 = vmatmul.mubr.bf16.gmra.mrb[0].mxu0 %v514
      %v553 = vpop.f32.mrb[0].mxu0
      %v554 = vadd.f32 0.0, %v553
      %v555 = vpop.f32.mrb[0].mxu0
      %v556 = vpop.f32.mrb[0].mxu0
      %v557 = vpop.f32.mrb[0].mxu0
      %558 = vdwg.mxu0
      %v559 = vpack.c.bf16 %v554, %v554
      %v561 = vunpack.c.l.b16 %v559
      %v562 = vpack.c.b16 %v561, %v561
      %563 = vrot.lane.b32.xlu0 %v562, 16
      %v564 = vpop.permute.xlu0 %563
      %vm566 = vcmask 191616
      %567 = vst.msk [vmem:[%s196] sm:$0xf] %vm566, %v564
      %568 = vrot.lane.b32.xlu0 %v325, 104
      %v569 = vpop.permute.xlu0 %568
      %570 = vrot.lane.b32.xlu0 %v270, 104
      %v571 = vpop.permute.xlu0 %570
      %v573 = vsel %vm201, %v569, 0
      %v576 = vsel %vm201, %v571, 0
      %578 = vmatprep.subr.bf16.mxu0 0
      %579 = vmatpush1.bf16.xpose.msra.mxu0 %v576
      %580 = vmatprep.subr.bf16.mxu0 0
      %581 = vmatpush1.bf16.xpose.msra.mxu0 0
      %582 = vmatprep.subr.bf16.mxu0 0
      %583 = vmatpush1.bf16.xpose.msra.mxu0 0
      %584 = vmatprep.subr.bf16.mxu0 0
      %585 = vmatpush1.bf16.xpose.msra.mxu0 0
      %586 = vmatprep.subr.bf16.mxu0 0
      %587 = vmatpush1.bf16.xpose.msra.mxu0 0
      %588 = vmatprep.subr.bf16.mxu0 0
      %589 = vmatpush1.bf16.xpose.msra.mxu0 0
      %590 = vmatprep.subr.bf16.mxu0 0
      %591 = vmatpush1.bf16.xpose.msra.mxu0 0
      %592 = vmatprep.subr.bf16.mxu0 0
      %593 = vmatpush1.bf16.xpose.msra.mxu0 0
      %594 = vmatprep.subr.bf16.mxu0 0
      %595 = vmatpush1.bf16.xpose.msra.mxu0 0
      %596 = vmatprep.subr.bf16.mxu0 0
      %597 = vmatpush1.bf16.xpose.msra.mxu0 0
      %598 = vmatprep.subr.bf16.mxu0 0
      %599 = vmatpush1.bf16.xpose.msra.mxu0 0
      %600 = vmatprep.subr.bf16.mxu0 0
      %601 = vmatpush1.bf16.xpose.msra.mxu0 0
      %602 = vmatprep.subr.bf16.mxu0 0
      %603 = vmatpush1.bf16.xpose.msra.mxu0 0
      %604 = vmatprep.subr.bf16.mxu0 0
      %605 = vmatpush1.bf16.xpose.msra.mxu0 0
      %606 = vmatprep.subr.bf16.mxu0 0
      %607 = vmatpush1.bf16.xpose.msra.mxu0 0
      %608 = vmatprep.subr.bf16.mxu0 0
      %609 = vmatpush1.bf16.xpose.msra.mxu0 0
      %610 = vmatprep.mubr.bf16.mxu0 0
      %611 = vmatmul.mubr.bf16.gmra.mrb[0].mxu0 %v573
      %v612 = vpop.f32.mrb[0].mxu0
      %v613 = vadd.f32 0.0, %v612
      %v614 = vpop.f32.mrb[0].mxu0
      %v615 = vpop.f32.mrb[0].mxu0
      %v616 = vpop.f32.mrb[0].mxu0
      %617 = vdwg.mxu0
      %v618 = vmul.f32 %v613, 0.35355338
      %v619 = vadd.f32 %v618, %v253
      %v620 = vsel %vm201, %v619, -inf
      %621 = vmax.xlane.f32.xlu0 %v620
      %v622 = vpop.xlane.xlu0 %621
      %v623 = vsub.f32 %v619, %v622
      %v624 = vmul.f32 %v623, 1.442695
      %v625 = vpow.pop %v624
      %v626 = vsel %vm201, %v625, 0.0
      %627 = vadd.xlane.f32.xlu0 %v626
      %v628 = vpop.xlane.xlu0 %627
      %v629 = vrcp.pop %v628
      %v630 = vmul.f32 %v625, %v629
      %v631 = vpack.c.bf16 %v630, %v630
      %632 = vrot.lane.b32.xlu0 %v270, 72
      %v633 = vpop.permute.xlu0 %632
      %v635 = vsel %vm201, %v631, 0
      %v638 = vsel %vm276, %v633, 0
      %640 = vmatprep.subr.bf16.mxu0 0
      %641 = vmatpush1.bf16.msra.mxu0 %v638
      %642 = vmatprep.subr.bf16.mxu0 0
      %643 = vmatpush1.bf16.msra.mxu0 0
      %644 = vmatprep.subr.bf16.mxu0 0
      %645 = vmatpush1.bf16.msra.mxu0 0
      %646 = vmatprep.subr.bf16.mxu0 0
      %647 = vmatpush1.bf16.msra.mxu0 0
      %648 = vmatprep.subr.bf16.mxu0 0
      %649 = vmatpush1.bf16.msra.mxu0 0
      %650 = vmatprep.subr.bf16.mxu0 0
      %651 = vmatpush1.bf16.msra.mxu0 0
      %652 = vmatprep.subr.bf16.mxu0 0
      %653 = vmatpush1.bf16.msra.mxu0 0
      %654 = vmatprep.subr.bf16.mxu0 0
      %655 = vmatpush1.bf16.msra.mxu0 0
      %656 = vmatprep.subr.bf16.mxu0 0
      %657 = vmatpush1.bf16.msra.mxu0 0
      %658 = vmatprep.subr.bf16.mxu0 0
      %659 = vmatpush1.bf16.msra.mxu0 0
      %660 = vmatprep.subr.bf16.mxu0 0
      %661 = vmatpush1.bf16.msra.mxu0 0
      %662 = vmatprep.subr.bf16.mxu0 0
      %663 = vmatpush1.bf16.msra.mxu0 0
      %664 = vmatprep.subr.bf16.mxu0 0
      %665 = vmatpush1.bf16.msra.mxu0 0
      %666 = vmatprep.subr.bf16.mxu0 0
      %667 = vmatpush1.bf16.msra.mxu0 0
      %668 = vmatprep.subr.bf16.mxu0 0
      %669 = vmatpush1.bf16.msra.mxu0 0
      %670 = vmatprep.subr.bf16.mxu0 0
      %671 = vmatpush1.bf16.msra.mxu0 0
      %672 = vmatprep.mubr.bf16.mxu0 0
      %673 = vmatmul.mubr.bf16.gmra.mrb[0].mxu0 %v635
      %v674 = vpop.f32.mrb[0].mxu0
      %v675 = vadd.f32 0.0, %v674
      %v676 = vpop.f32.mrb[0].mxu0
      %v677 = vpop.f32.mrb[0].mxu0
      %v678 = vpop.f32.mrb[0].mxu0
      %679 = vdwg.mxu0
      %v680 = vpack.c.bf16 %v675, %v675
      %v682 = vunpack.c.l.b16 %v680
      %v683 = vpack.c.b16 %v682, %v682
      %684 = vrot.lane.b32.xlu0 %v683, 24
      %v685 = vpop.permute.xlu0 %684
      %vm687 = vcmask 257216
      %688 = vst.msk [vmem:[%s196] sm:$0xf] %vm687, %v685
      %p689 = scmp.lt.s32.totalorder %s14, 1
      %s690 = scalar_select %p689, %s14, 1
      %s691 = smul.addr %s690, 4
      %s692 = scalar_lea.vmem %s3, %s691
      // Predicated region
      $region33: #{_lambda_.22} parent=31 // pred_check
        %p693 = pneg %p110
      $region34: #{_lambda_.22} parent=31 // pred_check_branch
        %695 = sbr.rel (%p693) target = $region36
      $region35: #{_lambda_.22} parent=31 // pred_region
        _
      $region36: #{_lambda_.22} parent=31 // pred_fallthru
        _
    $region32: #{_lambda_.22} parent=5 // pred_fallthru
      _
    %p696 = scmp.le.s32.totalorder 2, %s9
    // Predicated region
    $region37: #{_lambda_.22} parent=5 // pred_check
      %p697 = pneg %p696
    $region38: #{_lambda_.22} parent=5 // pred_check_branch
      %699 = sbr.rel (%p697) target = $region40
    $region39: #{_lambda_.22} parent=5 // pred_region
      %s700 = ssub.s32 %s9, 2
      // Predicated region
      $region41: #{_lambda_.22} parent=39 // pred_check
        %p701 = pneg %p116
      $region42: #{_lambda_.22} parent=39 // pred_check_branch
        %703 = sbr.rel (%p701) target = $region44
      $region43: #{_lambda_.22} parent=39 // pred_region
        %p704 = scmp.lt.s32.totalorder %s15, 1
        %s705 = scalar_select %p704, %s15, 1
        %s706 = smul.addr %s705, 4
        %s707 = scalar_lea.vmem %s3, %s706
      $region44: #{_lambda_.22} parent=39 // pred_fallthru
        _
    $region40: #{_lambda_.22} parent=5 // pred_fallthru
      _
  $region6: #{_lambda_.22} parent=0 // loop_footer
    %s13 = sadd.s32 1, %s9
  $region7: #{_lambda_.22} parent=0 // loop_footer_branch
    %8 = sbr.rel target = $region3
  $region8: #{_lambda_.22} parent=0 // loop_exit
    _

// kernel: _lambda_.25
$region0: #{_lambda_.25}
  #allocation0 [shape = 'u32[]', space=smem, size = 0x4, offset = 0x4, fixed_abs, tag = 'smem constant byte address 0x4 - core index']
  #allocation1 [shape = 'u32[144,128]{1,0:T(1,128)}', space=vmem, size = 0x12000, scoped, tag = 'internal scratch']
  #allocation2 [shape = 'f32[16,16]{1,0:T(8,128)}', space=vmem, size = 0x2000, scoped, tag = 'scratch operand']
  %s0 = inlined_call_operand.vmem [shape: bf16[16,32], index: 0, kind: input, shape index: {}]
  %s1 = inlined_call_operand.vmem [shape: bf16[32,16], index: 1, kind: input, shape index: {}]
  %s2 = inlined_call_operand.vmem [shape: f32[1,16], index: 2, kind: input, shape index: {}]
  %s3 = inlined_call_operand.hbm [shape: f32[16,16], index: 3, kind: output, shape index: {}]
  %s4 = sld [smem:[#allocation0]]
  $region30: #{_lambda_.25} parent=0
    _
  %s6 = ssub.s32 1, %s4
  %s7 = scalar_select 0, %s6, %s4
  $region1: #{_lambda_.25} parent=0
    #allocation3 [shape = 'u8[8192]{0}', space=vmem, size = 0x2000, scoped, tag = 'output window, operand 0, single buffered']
    #allocation4 [shape = 's32[1]{0}', space=sflag, size = 0x4, scoped, tag = 'scoped memory for _lambda_.25']
    %8 = vsyncpa [#allocation4], 0
    // Predicated region
    $region2: #{_lambda_.25} parent=1 // pred_check
      _
    $region3: #{_lambda_.25} parent=1 // pred_check_branch
      %10 = sbr.rel (0) target = $region5
    $region4: #{_lambda_.25} parent=1 // pred_region
      _
    $region5: #{_lambda_.25} parent=1 // pred_fallthru
      _
    // Predicated region
    $region6: #{_lambda_.25} parent=1 // pred_check
      _
    $region7: #{_lambda_.25} parent=1 // pred_check_branch
      %12 = sbr.rel (0) target = $region9
    $region8: #{_lambda_.25} parent=1 // pred_region
      _
    $region9: #{_lambda_.25} parent=1 // pred_fallthru
      _
    // Predicated region
    $region10: #{_lambda_.25} parent=1 // pred_check
      _
    $region11: #{_lambda_.25} parent=1 // pred_check_branch
      %14 = sbr.rel (0) target = $region13
    $region12: #{_lambda_.25} parent=1 // pred_region
      _
    $region13: #{_lambda_.25} parent=1 // pred_fallthru
      _
    %p16 = scmp.eq.s32.totalorder 0, 0
    // Predicated region
    $region14: #{_lambda_.25} parent=1 // pred_check
      %p17 = pneg %p16
    $region15: #{_lambda_.25} parent=1 // pred_check_branch
      %19 = sbr.rel (%p17) target = $region17
    $region16: #{_lambda_.25} parent=1 // pred_region
      %vm20 = vcmask 130048
      %21 = vst.msk [vmem:[#allocation2] sm:$0xff] %vm20, 0.0
      %22 = vst.msk [vmem:[#allocation2 + $0x8] sm:$0xff] %vm20, 0.0
    $region17: #{_lambda_.25} parent=1 // pred_fallthru
      _
    %v23 = vld [vmem:[#allocation2] sm:$0xff]
    %v24 = vld [vmem:[#allocation2 + $0x8] sm:$0xff]
    %v25 = vld [vmem:[%s0] sm:$0xf]
    %v26 = vld [vmem:[%s0 + $0x4] sm:$0xf]
    %v27 = vld [vmem:[%s1] sm:$0xf]
    %v28 = vld [vmem:[%s1 + $0x4] sm:$0xf]
    %v29 = vld [vmem:[%s1 + $0x8] sm:$0xf]
    %v30 = vld [vmem:[%s1 + $0xc] sm:$0xf]
    %v33 = vunpack.c.l.b16 %v25
    %v34 = vunpack.c.l.b16 %v26
    %v35 = vpack.c.b16 %v34, %v33
    %v40 = vunpack.c.l.b16 %v27
    %v41 = vunpack.c.l.b16 %v28
    %v42 = vunpack.c.l.b16 %v29
    %v43 = vunpack.c.l.b16 %v30
    %v44 = vpack.c.b16 %v41, %v40
    %v45 = vpack.c.b16 %v43, %v42
    %vm48 = vcmask 261120
    %v50 = vsel %vm48, %v35, 0
    %52 = vmatprep.subr.bf16.mxu0 0
    %53 = vmatpush1.bf16.msra.mxu0 %v44
    %54 = vmatprep.subr.bf16.mxu0 0
    %55 = vmatpush1.bf16.msra.mxu0 %v45
    %56 = vmatprep.subr.bf16.mxu0 0
    %57 = vmatpush1.bf16.msra.mxu0 0
    %58 = vmatprep.subr.bf16.mxu0 0
    %59 = vmatpush1.bf16.msra.mxu0 0
    %60 = vmatprep.subr.bf16.mxu0 0
    %61 = vmatpush1.bf16.msra.mxu0 0
    %62 = vmatprep.subr.bf16.mxu0 0
    %63 = vmatpush1.bf16.msra.mxu0 0
    %64 = vmatprep.subr.bf16.mxu0 0
    %65 = vmatpush1.bf16.msra.mxu0 0
    %66 = vmatprep.subr.bf16.mxu0 0
    %67 = vmatpush1.bf16.msra.mxu0 0
    %68 = vmatprep.subr.bf16.mxu0 0
    %69 = vmatpush1.bf16.msra.mxu0 0
    %70 = vmatprep.subr.bf16.mxu0 0
    %71 = vmatpush1.bf16.msra.mxu0 0
    %72 = vmatprep.subr.bf16.mxu0 0
    %73 = vmatpush1.bf16.msra.mxu0 0
    %74 = vmatprep.subr.bf16.mxu0 0
    %75 = vmatpush1.bf16.msra.mxu0 0
    %76 = vmatprep.subr.bf16.mxu0 0
    %77 = vmatpush1.bf16.msra.mxu0 0
    %78 = vmatprep.subr.bf16.mxu0 0
    %79 = vmatpush1.bf16.msra.mxu0 0
    %80 = vmatprep.subr.bf16.mxu0 0
    %81 = vmatpush1.bf16.msra.mxu0 0
    %82 = vmatprep.subr.bf16.mxu0 0
    %83 = vmatpush1.bf16.msra.mxu0 0
    %84 = vmatprep.mubr.bf16.mxu0 0
    %85 = vmatmul.mubr.bf16.gmra.mrb[0].mxu0 %v50
    %v86 = vpop.f32.mrb[0].mxu0
    %v87 = vadd.f32 0.0, %v86
    %v88 = vpop.f32.mrb[0].mxu0
    %v89 = vpop.f32.mrb[0].mxu0
    %v90 = vadd.f32 0.0, %v89
    %v91 = vpop.f32.mrb[0].mxu0
    %92 = vdwg.mxu0
    %v93 = vadd.f32 %v23, %v87
    %v94 = vadd.f32 %v24, %v90
    %vm95 = vcmask 130048
    %96 = vst.msk [vmem:[#allocation2] sm:$0xff] %vm95, %v93
    %97 = vst.msk [vmem:[#allocation2 + $0x8] sm:$0xff] %vm95, %v94
    // Predicated region
    $region18: #{_lambda_.25} parent=1 // pred_check
      %p98 = pneg %p16
    $region19: #{_lambda_.25} parent=1 // pred_check_branch
      %100 = sbr.rel (%p98) target = $region21
    $region20: #{_lambda_.25} parent=1 // pred_region
      %v101 = vld [vmem:[#allocation2] sm:$0xff]
      %v102 = vld [vmem:[#allocation2 + $0x8] sm:$0xff]
      %v103 = vld [vmem:[%s2] sm:$0x1]
      %v105 = vlaneseq
      %v106 = vshrl.u32 %v105, 7
      %v107 = vsub.s32 0, %v106
      %v108 = vrot.slane %v103, %v107
      %v110 = vadd.f32 %v101, %v108
      %v111 = vadd.f32 %v102, %v108
      %112 = vst.msk [vmem:[#allocation3] sm:$0xff] %vm95, %v110
      %113 = vst.msk [vmem:[#allocation3 + $0x8] sm:$0xff] %vm95, %v111
    $region21: #{_lambda_.25} parent=1 // pred_fallthru
      _
    // Predicated region
    $region22: #{_lambda_.25} parent=1 // pred_check
      _
    $region23: #{_lambda_.25} parent=1 // pred_check_branch
      %115 = sbr.rel (0) target = $region25
    $region24: #{_lambda_.25} parent=1 // pred_region
      %s117 = ssub.s32 256, 256
      %118 = vsyncadd [#allocation4], %s117
      %s119 = sshll.u32 [#allocation3], 4
      %s120 = int_to_ptr.vmem [resolvable:$true] %s119
      %125 = dma.vmem_to_hbm [thread:$0]  %s120, 256, %s3, [#allocation4], 128, 128, 8
    $region25: #{_lambda_.25} parent=1 // pred_fallthru
      _
    // Predicated region
    $region26: #{_lambda_.25} parent=1 // pred_check
      _
    $region27: #{_lambda_.25} parent=1 // pred_check_branch
      %127 = sbr.rel (0) target = $region29
    $region28: #{_lambda_.25} parent=1 // pred_region
      %128 = dma.done [#allocation4], 256
    $region29: #{_lambda_.25} parent=1 // pred_fallthru
      _
    %129 = vsyncpa [#allocation4], 1

</llo_original>
